<compile_context>
chip_gen: v6e
topology: v6e:2x2x1
jax: 0.10.0
libtpu: 0.0.40
codegen_flags: <defaults>
</compile_context>

<pallas_src>
import functools

import jax
import jax.numpy as jnp
from jax import lax
from jax.experimental import pallas as pl
from jax.experimental.pallas import tpu as pltpu


# ----------------------------------------------------------------------------
# Production path: HBM row-gather via per-token DMA straight into out_ref.
# ----------------------------------------------------------------------------
def _dma_gather_kernel(ids_ref, w_ref, wc_ref, out_ref, sem, *,
                       token_tile, n_vocab):
    """ids_ref: (T_pad,) int32 SMEM (scalar prefetch)
       w_ref:   (V, D) HBM        wc_ref: (n_new, D) HBM
       out_ref: (token_tile, D) VMEM output block (DMA destination)
       sem:     shared DMA semaphore."""
    base = pl.program_id(0) * token_tile

    def issue(j, carry):
        tok = ids_ref[base + j]
        dst = out_ref.at[pl.ds(j, 1), :]

        @pl.when(tok < n_vocab)
        def _():
            pltpu.make_async_copy(
                w_ref.at[pl.ds(tok, 1), :], dst, sem).start()

        @pl.when(tok >= n_vocab)
        def _():
            pltpu.make_async_copy(
                wc_ref.at[pl.ds(tok - n_vocab, 1), :], dst, sem).start()

        return carry

    # Unrolled descriptor-issue loop (descriptor issue, not HBM BW, is the
    # bottleneck for small/medium D -- especially on v7x).
    lax.fori_loop(0, token_tile, issue, 0, unroll=min(8, token_tile))

    # ONE aggregate wait: every row copy is (1, D) of the same dtype on the
    # same semaphore, so waiting for out_ref's full (token_tile, D) byte size
    # consumes exactly the sum of all completions.
    pltpu.make_async_copy(out_ref, out_ref, sem).wait()


# ----------------------------------------------------------------------------
# Small-table fast path: VMEM-resident tables + exact one-hot MXU gather.
# ----------------------------------------------------------------------------
def _onehot_kernel(ids_ref, w_ref, wc_ref, out_ref, *, n_vocab, n_new):
    ids = ids_ref[...]                                   # (token_tile, 1) int32
    tt = ids.shape[0]
    oh_base = (ids == lax.broadcasted_iota(jnp.int32, (tt, n_vocab), 1)
               ).astype(w_ref.dtype)
    oh_comp = ((ids - n_vocab) == lax.broadcasted_iota(jnp.int32, (tt, n_new), 1)
               ).astype(wc_ref.dtype)
    # One-hot rows are exact 0/1, so HIGHEST-precision f32 matmul reproduces
    # the gathered rows exactly (mask/blend of the torch forward collapses to
    # the sum of the two disjoint one-hot products).
    acc = jnp.dot(oh_base, w_ref[...],
                  preferred_element_type=jnp.float32,
                  precision=lax.Precision.HIGHEST)
    acc = acc + jnp.dot(oh_comp, wc_ref[...],
                        preferred_element_type=jnp.float32,
                        precision=lax.Precision.HIGHEST)
    out_ref[...] = acc.astype(out_ref.dtype)


# ----------------------------------------------------------------------------
# Wrapper
# ----------------------------------------------------------------------------
def separated_embedding(input_ids, w, w_comp, *, token_tile=256,
                        force_path=None):
    """input_ids: (B, S) int; w: (V, D); w_comp: (n_new, D) -> (B, S, D)."""
    B, S = input_ids.shape
    V, D = w.shape
    n_new, D2 = w_comp.shape
    assert D == D2 and w.dtype == w_comp.dtype

    T = B * S
    ids = input_ids.reshape(T).astype(jnp.int32)
    t_pad = pl.cdiv(T, token_tile) * token_tile
    if t_pad != T:
        ids = jnp.pad(ids, (0, t_pad - T))   # padded slots gather row 0; sliced away
    grid = (t_pad // token_tile,)
    itemsize = jnp.dtype(w.dtype).itemsize
    table_bytes = (V + n_new) * D * itemsize

    if force_path is None:
        use_fast = table_bytes <= (4 << 20)      # table comfortably VMEM-resident
    else:
        use_fast = (force_path == "fast")

    if use_fast:
        kernel = functools.partial(_onehot_kernel, n_vocab=V, n_new=n_new)
        vmem_limit = min(128 << 20,
                         max(32 << 20,
                             4 * table_bytes + 4 * token_tile * D * itemsize))
        out = pl.pallas_call(
            kernel,
            out_shape=jax.ShapeDtypeStruct((t_pad, D), w.dtype),
            grid=grid,
            in_specs=[
                pl.BlockSpec((token_tile, 1), lambda i: (i, 0)),   # ids (VMEM)
                pl.BlockSpec((V, D), lambda i: (0, 0)),            # w (whole)
                pl.BlockSpec((n_new, D), lambda i: (0, 0)),        # w_comp (whole)
            ],
            out_specs=pl.BlockSpec((token_tile, D), lambda i: (i, 0)),
            compiler_params=pltpu.CompilerParams(
                dimension_semantics=("parallel",),
                vmem_limit_bytes=int(vmem_limit),
            ),
        )(ids.reshape(t_pad, 1), w, w_comp)
    else:
        kernel = functools.partial(_dma_gather_kernel,
                                   token_tile=token_tile, n_vocab=V)
        # 2x double-buffered output block + slack; fits v7x's 64 MiB per-TC.
        vmem_limit = min(128 << 20,
                         max(32 << 20, 4 * token_tile * D * itemsize))
        out = pl.pallas_call(
            kernel,
            out_shape=jax.ShapeDtypeStruct((t_pad, D), w.dtype),
            grid_spec=pltpu.PrefetchScalarGridSpec(
                num_scalar_prefetch=1,                     # ids -> SMEM
                grid=grid,
                in_specs=[
                    pl.BlockSpec(memory_space=pl.ANY),     # w stays in HBM
                    pl.BlockSpec(memory_space=pl.ANY),     # w_comp stays in HBM
                ],
                out_specs=pl.BlockSpec((token_tile, D), lambda i, ids: (i, 0)),
                scratch_shapes=[pltpu.SemaphoreType.DMA(())],   # shared DMA sem
            ),
            compiler_params=pltpu.CompilerParams(
                dimension_semantics=("parallel",),
                vmem_limit_bytes=int(vmem_limit),
            ),
        )(ids, w, w_comp)

    return out[:T].reshape(B, S, D)


# ----------------------------------------------------------------------------
# Param init + pure-JAX reference (mirrors the torch module)
# ----------------------------------------------------------------------------
def make_params(key, n_vocab, n_new, n_dim, dtype=jnp.float32):
    w = jax.random.normal(key, (n_vocab, n_dim), dtype=dtype)
    # comp_embeddings.weight[-k-1] = embeddings.weight[k::n_new].mean(0)
    rows = [w[k::n_new].mean(axis=0) for k in range(n_new)]
    w_comp = jnp.stack(rows, axis=0)[::-1]
    return w, w_comp


def reference(input_ids, w, w_comp):
    n_vocab = w.shape[0]
    mask = input_ids >= n_vocab
    base_ids = jnp.where(mask, 0, input_ids)
    comp_ids = jnp.where(mask, input_ids - n_vocab, 0)
    base_emb = w[base_ids]
    comp_emb = w_comp[comp_ids]
    m = mask.astype(w.dtype)[..., None]
    return m * comp_emb + (1.0 - m) * base_emb


if __name__ == "__main__":
    B, S = 2, 8
    n_vocab, n_new, n_dim = 32, 8, 128

    key = jax.random.PRNGKey(0)
    k_w, k_ids = jax.random.split(key)

    w, w_comp = make_params(k_w, n_vocab, n_new, n_dim)
    input_ids = jax.random.randint(k_ids, (B, S), 0, n_vocab + n_new,
                                   dtype=jnp.int32)

    ref = reference(input_ids, w, w_comp)

    # 1) Auto-dispatched path (small table -> VMEM one-hot fast path).
    out_fast = jax.block_until_ready(separated_embedding(input_ids, w, w_comp))
    assert out_fast.shape == (B, S, n_dim)
    assert jnp.allclose(out_fast, ref, atol=1e-5, rtol=1e-5), "fast path mismatch"

    # 2) Production HBM row-DMA path, forced, small tile so the grid has
    #    multiple steps and the unrolled issue + aggregate wait are exercised.
    out_dma = jax.block_until_ready(
        separated_embedding(input_ids, w, w_comp, token_tile=8,
                            force_path="dma"))
    assert out_dma.shape == (B, S, n_dim)
    assert jnp.allclose(out_dma, ref, atol=1e-5, rtol=1e-5), "dma path mismatch"

    print("KERNEL_OK")
</pallas_src>

<mosaic_0001>
module attributes {stable_mosaic.version = 11 : i64} {
  func.func @_onehot_kernel(%arg0: i32, %arg1: memref<256x1xi32, #tpu.memory_space<vmem>>, %arg2: memref<32x128xf32, #tpu.memory_space<vmem>>, %arg3: memref<8x128xf32, #tpu.memory_space<vmem>>, %arg4: memref<256x128xf32, #tpu.memory_space<vmem>>) attributes {dimension_semantics = [#tpu.dimension_semantics<parallel>], iteration_bounds = array<i64: 1>, scalar_prefetch = 0 : i64, scratch_operands = 0 : i64, tpu.core_type = #tpu.core_type<tc>, window_params = [{transform_indices = @transform_0, window_bounds = array<i64: 256, 1>}, {pipeline_mode = #tpu.pipeline_mode<synchronous>, transform_indices = @transform_1, window_bounds = array<i64: 32, 128>}, {pipeline_mode = #tpu.pipeline_mode<synchronous>, transform_indices = @transform_2, window_bounds = array<i64: 8, 128>}, {transform_indices = @transform_3, window_bounds = array<i64: 256, 128>}]} {
    %c0 = arith.constant 0 : index
    %c0_0 = arith.constant 0 : index
    %0 = vector.load %arg1[%c0, %c0_0] : memref<256x1xi32, #tpu.memory_space<vmem>>, vector<256x1xi32>
    %1 = tpu.iota {dimensions = array<i32: 1>} : vector<256x32xi32>
    %2 = vector.broadcast %0 : vector<256x1xi32> to vector<256x32xi32>
    %3 = arith.cmpi eq, %2, %1 : vector<256x32xi32>
    %4 = arith.extui %3 : vector<256x32xi1> to vector<256x32xi32>
    %5 = arith.sitofp %4 : vector<256x32xi32> to vector<256x32xf32>
    %c32_i32 = arith.constant 32 : i32
    %6 = vector.broadcast %c32_i32 : i32 to vector<256x1xi32>
    %7 = arith.subi %0, %6 : vector<256x1xi32>
    %8 = tpu.iota {dimensions = array<i32: 1>} : vector<256x8xi32>
    %9 = vector.broadcast %7 : vector<256x1xi32> to vector<256x8xi32>
    %10 = arith.cmpi eq, %9, %8 : vector<256x8xi32>
    %11 = arith.extui %10 : vector<256x8xi1> to vector<256x8xi32>
    %12 = arith.sitofp %11 : vector<256x8xi32> to vector<256x8xf32>
    %c0_1 = arith.constant 0 : index
    %c0_2 = arith.constant 0 : index
    %13 = vector.load %arg2[%c0_1, %c0_2] : memref<32x128xf32, #tpu.memory_space<vmem>>, vector<32x128xf32>
    %cst = arith.constant dense<0.000000e+00> : vector<256x128xf32>
    %14 = tpu.matmul %5, %13, %cst {dimension_numbers = #tpu.dot_dimension_numbers<[1], [0], [0], [1], [0, 0, 1, 1], [], []>, precision = #tpu.contract_precision<fp32>} : vector<256x32xf32>, vector<32x128xf32>, vector<256x128xf32> -> vector<256x128xf32>
    %c0_3 = arith.constant 0 : index
    %c0_4 = arith.constant 0 : index
    %15 = vector.load %arg3[%c0_3, %c0_4] : memref<8x128xf32, #tpu.memory_space<vmem>>, vector<8x128xf32>
    %cst_5 = arith.constant dense<0.000000e+00> : vector<256x128xf32>
    %16 = tpu.matmul %12, %15, %cst_5 {dimension_numbers = #tpu.dot_dimension_numbers<[1], [0], [0], [1], [0, 0, 1, 1], [], []>, precision = #tpu.contract_precision<fp32>} : vector<256x8xf32>, vector<8x128xf32>, vector<256x128xf32> -> vector<256x128xf32>
    %17 = arith.addf %14, %16 : vector<256x128xf32>
    %c0_6 = arith.constant 0 : index
    %c0_7 = arith.constant 0 : index
    %18 = vector.load %arg4[%c0_6, %c0_7] : memref<256x128xf32, #tpu.memory_space<vmem>>, vector<256x128xf32>
    tpu.vector_store %arg4[%c0_6, %c0_7], %17 {strides = array<i32>} : memref<256x128xf32, #tpu.memory_space<vmem>>, vector<256x128xf32>,
    return
  }
  func.func @transform_0(%arg0: i32) -> (i32, i32) {
    %c0_i32 = arith.constant 0 : i32
    %c0_i32_0 = arith.constant 0 : i32
    return %arg0, %c0_i32 : i32, i32
  }
  func.func @transform_1(%arg0: i32) -> (i32, i32) {
    %c0_i32 = arith.constant 0 : i32
    %c0_i32_0 = arith.constant 0 : i32
    %c0_i32_1 = arith.constant 0 : i32
    return %c0_i32, %c0_i32_0 : i32, i32
  }
  func.func @transform_2(%arg0: i32) -> (i32, i32) {
    %c0_i32 = arith.constant 0 : i32
    %c0_i32_0 = arith.constant 0 : i32
    %c0_i32_1 = arith.constant 0 : i32
    return %c0_i32, %c0_i32_0 : i32, i32
  }
  func.func @transform_3(%arg0: i32) -> (i32, i32) {
    %c0_i32 = arith.constant 0 : i32
    %c0_i32_0 = arith.constant 0 : i32
    return %arg0, %c0_i32 : i32, i32
  }
}

</mosaic_0001>

<llo_original>
// kernel: tpu_custom_call.1
$region0: #{tpu_custom_call.1}
  #allocation0 [shape = 'u32[]', space=smem, size = 0x4, offset = 0x4, fixed_abs, tag = 'smem constant byte address 0x4 - core index']
  #allocation1 [shape = 'u32[144,128]{1,0:T(1,128)}', space=vmem, size = 0x12000, scoped, tag = 'internal scratch']
  %s0 = inlined_call_operand.vmem [shape: s32[256,1], index: 0, kind: input, shape index: {}]
  %s1 = inlined_call_operand.vmem [shape: f32[32,128], index: 1, kind: input, shape index: {}]
  %s2 = inlined_call_operand.vmem [shape: f32[8,128], index: 2, kind: input, shape index: {}]
  %s3 = inlined_call_operand.hbm [shape: f32[256,128], index: 3, kind: output, shape index: {}]
  %s4 = sld [smem:[#allocation0]]
  $region22: #{tpu_custom_call.1} parent=0
    _
  %s6 = ssub.s32 1, %s4
  %s7 = scalar_select 0, %s6, %s4
  $region1: #{tpu_custom_call.1} parent=0
    #allocation2 [shape = 'u8[131072]{0}', space=vmem, size = 0x20000, scoped, tag = 'output window, operand 0, single buffered']
    #allocation3 [shape = 's32[1]{0}', space=sflag, size = 0x4, scoped, tag = 'scoped memory for tpu_custom_call.1']
    %8 = vsyncpa [#allocation3], 0
    // Predicated region
    $region2: #{tpu_custom_call.1} parent=1 // pred_check
      _
    $region3: #{tpu_custom_call.1} parent=1 // pred_check_branch
      %10 = sbr.rel (0) target = $region5
    $region4: #{tpu_custom_call.1} parent=1 // pred_region
      _
    $region5: #{tpu_custom_call.1} parent=1 // pred_fallthru
      _
    // Predicated region
    $region6: #{tpu_custom_call.1} parent=1 // pred_check
      _
    $region7: #{tpu_custom_call.1} parent=1 // pred_check_branch
      %12 = sbr.rel (0) target = $region9
    $region8: #{tpu_custom_call.1} parent=1 // pred_region
      _
    $region9: #{tpu_custom_call.1} parent=1 // pred_fallthru
      _
    // Predicated region
    $region10: #{tpu_custom_call.1} parent=1 // pred_check
      _
    $region11: #{tpu_custom_call.1} parent=1 // pred_check_branch
      %14 = sbr.rel (0) target = $region13
    $region12: #{tpu_custom_call.1} parent=1 // pred_region
      _
    $region13: #{tpu_custom_call.1} parent=1 // pred_fallthru
      _
    %v15 = vld [vmem:[%s0] sm:$0xff]
    %v16 = vld [vmem:[%s0 + $0x8] sm:$0xff]
    %v17 = vld [vmem:[%s0 + $0x10] sm:$0xff]
    %v18 = vld [vmem:[%s0 + $0x18] sm:$0xff]
    %v19 = vld [vmem:[%s0 + $0x20] sm:$0xff]
    %v20 = vld [vmem:[%s0 + $0x28] sm:$0xff]
    %v21 = vld [vmem:[%s0 + $0x30] sm:$0xff]
    %v22 = vld [vmem:[%s0 + $0x38] sm:$0xff]
    %v23 = vld [vmem:[%s0 + $0x40] sm:$0xff]
    %v24 = vld [vmem:[%s0 + $0x48] sm:$0xff]
    %v25 = vld [vmem:[%s0 + $0x50] sm:$0xff]
    %v26 = vld [vmem:[%s0 + $0x58] sm:$0xff]
    %v27 = vld [vmem:[%s0 + $0x60] sm:$0xff]
    %v28 = vld [vmem:[%s0 + $0x68] sm:$0xff]
    %v29 = vld [vmem:[%s0 + $0x70] sm:$0xff]
    %v30 = vld [vmem:[%s0 + $0x78] sm:$0xff]
    %v31 = vld [vmem:[%s0 + $0x80] sm:$0xff]
    %v32 = vld [vmem:[%s0 + $0x88] sm:$0xff]
    %v33 = vld [vmem:[%s0 + $0x90] sm:$0xff]
    %v34 = vld [vmem:[%s0 + $0x98] sm:$0xff]
    %v35 = vld [vmem:[%s0 + $0xa0] sm:$0xff]
    %v36 = vld [vmem:[%s0 + $0xa8] sm:$0xff]
    %v37 = vld [vmem:[%s0 + $0xb0] sm:$0xff]
    %v38 = vld [vmem:[%s0 + $0xb8] sm:$0xff]
    %v39 = vld [vmem:[%s0 + $0xc0] sm:$0xff]
    %v40 = vld [vmem:[%s0 + $0xc8] sm:$0xff]
    %v41 = vld [vmem:[%s0 + $0xd0] sm:$0xff]
    %v42 = vld [vmem:[%s0 + $0xd8] sm:$0xff]
    %v43 = vld [vmem:[%s0 + $0xe0] sm:$0xff]
    %v44 = vld [vmem:[%s0 + $0xe8] sm:$0xff]
    %v45 = vld [vmem:[%s0 + $0xf0] sm:$0xff]
    %v46 = vld [vmem:[%s0 + $0xf8] sm:$0xff]
    %v47 = vlaneseq
    %v48 = vand.u32 %v47, 127
    %49 = vset.pattern.permute.xlu0 0
    %50 = vperm.xlu0 %49, %v15
    %v51 = vpop.permute.xlu0 %50
    %52 = vset.pattern.permute.xlu0 0
    %53 = vperm.xlu0 %52, %v16
    %v54 = vpop.permute.xlu0 %53
    %55 = vset.pattern.permute.xlu0 0
    %56 = vperm.xlu0 %55, %v17
    %v57 = vpop.permute.xlu0 %56
    %58 = vset.pattern.permute.xlu0 0
    %59 = vperm.xlu0 %58, %v18
    %v60 = vpop.permute.xlu0 %59
    %61 = vset.pattern.permute.xlu0 0
    %62 = vperm.xlu0 %61, %v19
    %v63 = vpop.permute.xlu0 %62
    %64 = vset.pattern.permute.xlu0 0
    %65 = vperm.xlu0 %64, %v20
    %v66 = vpop.permute.xlu0 %65
    %67 = vset.pattern.permute.xlu0 0
    %68 = vperm.xlu0 %67, %v21
    %v69 = vpop.permute.xlu0 %68
    %70 = vset.pattern.permute.xlu0 0
    %71 = vperm.xlu0 %70, %v22
    %v72 = vpop.permute.xlu0 %71
    %73 = vset.pattern.permute.xlu0 0
    %74 = vperm.xlu0 %73, %v23
    %v75 = vpop.permute.xlu0 %74
    %76 = vset.pattern.permute.xlu0 0
    %77 = vperm.xlu0 %76, %v24
    %v78 = vpop.permute.xlu0 %77
    %79 = vset.pattern.permute.xlu0 0
    %80 = vperm.xlu0 %79, %v25
    %v81 = vpop.permute.xlu0 %80
    %82 = vset.pattern.permute.xlu0 0
    %83 = vperm.xlu0 %82, %v26
    %v84 = vpop.permute.xlu0 %83
    %85 = vset.pattern.permute.xlu0 0
    %86 = vperm.xlu0 %85, %v27
    %v87 = vpop.permute.xlu0 %86
    %88 = vset.pattern.permute.xlu0 0
    %89 = vperm.xlu0 %88, %v28
    %v90 = vpop.permute.xlu0 %89
    %91 = vset.pattern.permute.xlu0 0
    %92 = vperm.xlu0 %91, %v29
    %v93 = vpop.permute.xlu0 %92
    %94 = vset.pattern.permute.xlu0 0
    %95 = vperm.xlu0 %94, %v30
    %v96 = vpop.permute.xlu0 %95
    %97 = vset.pattern.permute.xlu0 0
    %98 = vperm.xlu0 %97, %v31
    %v99 = vpop.permute.xlu0 %98
    %100 = vset.pattern.permute.xlu0 0
    %101 = vperm.xlu0 %100, %v32
    %v102 = vpop.permute.xlu0 %101
    %103 = vset.pattern.permute.xlu0 0
    %104 = vperm.xlu0 %103, %v33
    %v105 = vpop.permute.xlu0 %104
    %106 = vset.pattern.permute.xlu0 0
    %107 = vperm.xlu0 %106, %v34
    %v108 = vpop.permute.xlu0 %107
    %109 = vset.pattern.permute.xlu0 0
    %110 = vperm.xlu0 %109, %v35
    %v111 = vpop.permute.xlu0 %110
    %112 = vset.pattern.permute.xlu0 0
    %113 = vperm.xlu0 %112, %v36
    %v114 = vpop.permute.xlu0 %113
    %115 = vset.pattern.permute.xlu0 0
    %116 = vperm.xlu0 %115, %v37
    %v117 = vpop.permute.xlu0 %116
    %118 = vset.pattern.permute.xlu0 0
    %119 = vperm.xlu0 %118, %v38
    %v120 = vpop.permute.xlu0 %119
    %121 = vset.pattern.permute.xlu0 0
    %122 = vperm.xlu0 %121, %v39
    %v123 = vpop.permute.xlu0 %122
    %124 = vset.pattern.permute.xlu0 0
    %125 = vperm.xlu0 %124, %v40
    %v126 = vpop.permute.xlu0 %125
    %127 = vset.pattern.permute.xlu0 0
    %128 = vperm.xlu0 %127, %v41
    %v129 = vpop.permute.xlu0 %128
    %130 = vset.pattern.permute.xlu0 0
    %131 = vperm.xlu0 %130, %v42
    %v132 = vpop.permute.xlu0 %131
    %133 = vset.pattern.permute.xlu0 0
    %134 = vperm.xlu0 %133, %v43
    %v135 = vpop.permute.xlu0 %134
    %136 = vset.pattern.permute.xlu0 0
    %137 = vperm.xlu0 %136, %v44
    %v138 = vpop.permute.xlu0 %137
    %139 = vset.pattern.permute.xlu0 0
    %140 = vperm.xlu0 %139, %v45
    %v141 = vpop.permute.xlu0 %140
    %142 = vset.pattern.permute.xlu0 0
    %143 = vperm.xlu0 %142, %v46
    %v144 = vpop.permute.xlu0 %143
    %vm145 = vcmp.eq.s32.totalorder %v51, %v48
    %vm146 = vcmp.eq.s32.totalorder %v54, %v48
    %vm147 = vcmp.eq.s32.totalorder %v57, %v48
    %vm148 = vcmp.eq.s32.totalorder %v60, %v48
    %vm149 = vcmp.eq.s32.totalorder %v63, %v48
    %vm150 = vcmp.eq.s32.totalorder %v66, %v48
    %vm151 = vcmp.eq.s32.totalorder %v69, %v48
    %vm152 = vcmp.eq.s32.totalorder %v72, %v48
    %vm153 = vcmp.eq.s32.totalorder %v75, %v48
    %vm154 = vcmp.eq.s32.totalorder %v78, %v48
    %vm155 = vcmp.eq.s32.totalorder %v81, %v48
    %vm156 = vcmp.eq.s32.totalorder %v84, %v48
    %vm157 = vcmp.eq.s32.totalorder %v87, %v48
    %vm158 = vcmp.eq.s32.totalorder %v90, %v48
    %vm159 = vcmp.eq.s32.totalorder %v93, %v48
    %vm160 = vcmp.eq.s32.totalorder %v96, %v48
    %vm161 = vcmp.eq.s32.totalorder %v99, %v48
    %vm162 = vcmp.eq.s32.totalorder %v102, %v48
    %vm163 = vcmp.eq.s32.totalorder %v105, %v48
    %vm164 = vcmp.eq.s32.totalorder %v108, %v48
    %vm165 = vcmp.eq.s32.totalorder %v111, %v48
    %vm166 = vcmp.eq.s32.totalorder %v114, %v48
    %vm167 = vcmp.eq.s32.totalorder %v117, %v48
    %vm168 = vcmp.eq.s32.totalorder %v120, %v48
    %vm169 = vcmp.eq.s32.totalorder %v123, %v48
    %vm170 = vcmp.eq.s32.totalorder %v126, %v48
    %vm171 = vcmp.eq.s32.totalorder %v129, %v48
    %vm172 = vcmp.eq.s32.totalorder %v132, %v48
    %vm173 = vcmp.eq.s32.totalorder %v135, %v48
    %vm174 = vcmp.eq.s32.totalorder %v138, %v48
    %vm175 = vcmp.eq.s32.totalorder %v141, %v48
    %vm176 = vcmp.eq.s32.totalorder %v144, %v48
    %v177 = vsel %vm145, 1, 0
    %v178 = vsel %vm146, 1, 0
    %v179 = vsel %vm147, 1, 0
    %v180 = vsel %vm148, 1, 0
    %v181 = vsel %vm149, 1, 0
    %v182 = vsel %vm150, 1, 0
    %v183 = vsel %vm151, 1, 0
    %v184 = vsel %vm152, 1, 0
    %v185 = vsel %vm153, 1, 0
    %v186 = vsel %vm154, 1, 0
    %v187 = vsel %vm155, 1, 0
    %v188 = vsel %vm156, 1, 0
    %v189 = vsel %vm157, 1, 0
    %v190 = vsel %vm158, 1, 0
    %v191 = vsel %vm159, 1, 0
    %v192 = vsel %vm160, 1, 0
    %v193 = vsel %vm161, 1, 0
    %v194 = vsel %vm162, 1, 0
    %v195 = vsel %vm163, 1, 0
    %v196 = vsel %vm164, 1, 0
    %v197 = vsel %vm165, 1, 0
    %v198 = vsel %vm166, 1, 0
    %v199 = vsel %vm167, 1, 0
    %v200 = vsel %vm168, 1, 0
    %v201 = vsel %vm169, 1, 0
    %v202 = vsel %vm170, 1, 0
    %v203 = vsel %vm171, 1, 0
    %v204 = vsel %vm172, 1, 0
    %v205 = vsel %vm173, 1, 0
    %v206 = vsel %vm174, 1, 0
    %v207 = vsel %vm175, 1, 0
    %v208 = vsel %vm176, 1, 0
    %v209 = vcvt.s32.f32 %v177
    %v210 = vcvt.s32.f32 %v178
    %v211 = vcvt.s32.f32 %v179
    %v212 = vcvt.s32.f32 %v180
    %v213 = vcvt.s32.f32 %v181
    %v214 = vcvt.s32.f32 %v182
    %v215 = vcvt.s32.f32 %v183
    %v216 = vcvt.s32.f32 %v184
    %v217 = vcvt.s32.f32 %v185
    %v218 = vcvt.s32.f32 %v186
    %v219 = vcvt.s32.f32 %v187
    %v220 = vcvt.s32.f32 %v188
    %v221 = vcvt.s32.f32 %v189
    %v222 = vcvt.s32.f32 %v190
    %v223 = vcvt.s32.f32 %v191
    %v224 = vcvt.s32.f32 %v192
    %v225 = vcvt.s32.f32 %v193
    %v226 = vcvt.s32.f32 %v194
    %v227 = vcvt.s32.f32 %v195
    %v228 = vcvt.s32.f32 %v196
    %v229 = vcvt.s32.f32 %v197
    %v230 = vcvt.s32.f32 %v198
    %v231 = vcvt.s32.f32 %v199
    %v232 = vcvt.s32.f32 %v200
    %v233 = vcvt.s32.f32 %v201
    %v234 = vcvt.s32.f32 %v202
    %v235 = vcvt.s32.f32 %v203
    %v236 = vcvt.s32.f32 %v204
    %v237 = vcvt.s32.f32 %v205
    %v238 = vcvt.s32.f32 %v206
    %v239 = vcvt.s32.f32 %v207
    %v240 = vcvt.s32.f32 %v208
    %v241 = vsub.s32 %v15, 32
    %v242 = vsub.s32 %v16, 32
    %v243 = vsub.s32 %v17, 32
    %v244 = vsub.s32 %v18, 32
    %v245 = vsub.s32 %v19, 32
    %v246 = vsub.s32 %v20, 32
    %v247 = vsub.s32 %v21, 32
    %v248 = vsub.s32 %v22, 32
    %v249 = vsub.s32 %v23, 32
    %v250 = vsub.s32 %v24, 32
    %v251 = vsub.s32 %v25, 32
    %v252 = vsub.s32 %v26, 32
    %v253 = vsub.s32 %v27, 32
    %v254 = vsub.s32 %v28, 32
    %v255 = vsub.s32 %v29, 32
    %v256 = vsub.s32 %v30, 32
    %v257 = vsub.s32 %v31, 32
    %v258 = vsub.s32 %v32, 32
    %v259 = vsub.s32 %v33, 32
    %v260 = vsub.s32 %v34, 32
    %v261 = vsub.s32 %v35, 32
    %v262 = vsub.s32 %v36, 32
    %v263 = vsub.s32 %v37, 32
    %v264 = vsub.s32 %v38, 32
    %v265 = vsub.s32 %v39, 32
    %v266 = vsub.s32 %v40, 32
    %v267 = vsub.s32 %v41, 32
    %v268 = vsub.s32 %v42, 32
    %v269 = vsub.s32 %v43, 32
    %v270 = vsub.s32 %v44, 32
    %v271 = vsub.s32 %v45, 32
    %v272 = vsub.s32 %v46, 32
    %273 = vset.pattern.permute.xlu0 0
    %274 = vperm.xlu0 %273, %v241
    %v275 = vpop.permute.xlu0 %274
    %276 = vset.pattern.permute.xlu0 0
    %277 = vperm.xlu0 %276, %v242
    %v278 = vpop.permute.xlu0 %277
    %279 = vset.pattern.permute.xlu0 0
    %280 = vperm.xlu0 %279, %v243
    %v281 = vpop.permute.xlu0 %280
    %282 = vset.pattern.permute.xlu0 0
    %283 = vperm.xlu0 %282, %v244
    %v284 = vpop.permute.xlu0 %283
    %285 = vset.pattern.permute.xlu0 0
    %286 = vperm.xlu0 %285, %v245
    %v287 = vpop.permute.xlu0 %286
    %288 = vset.pattern.permute.xlu0 0
    %289 = vperm.xlu0 %288, %v246
    %v290 = vpop.permute.xlu0 %289
    %291 = vset.pattern.permute.xlu0 0
    %292 = vperm.xlu0 %291, %v247
    %v293 = vpop.permute.xlu0 %292
    %294 = vset.pattern.permute.xlu0 0
    %295 = vperm.xlu0 %294, %v248
    %v296 = vpop.permute.xlu0 %295
    %297 = vset.pattern.permute.xlu0 0
    %298 = vperm.xlu0 %297, %v249
    %v299 = vpop.permute.xlu0 %298
    %300 = vset.pattern.permute.xlu0 0
    %301 = vperm.xlu0 %300, %v250
    %v302 = vpop.permute.xlu0 %301
    %303 = vset.pattern.permute.xlu0 0
    %304 = vperm.xlu0 %303, %v251
    %v305 = vpop.permute.xlu0 %304
    %306 = vset.pattern.permute.xlu0 0
    %307 = vperm.xlu0 %306, %v252
    %v308 = vpop.permute.xlu0 %307
    %309 = vset.pattern.permute.xlu0 0
    %310 = vperm.xlu0 %309, %v253
    %v311 = vpop.permute.xlu0 %310
    %312 = vset.pattern.permute.xlu0 0
    %313 = vperm.xlu0 %312, %v254
    %v314 = vpop.permute.xlu0 %313
    %315 = vset.pattern.permute.xlu0 0
    %316 = vperm.xlu0 %315, %v255
    %v317 = vpop.permute.xlu0 %316
    %318 = vset.pattern.permute.xlu0 0
    %319 = vperm.xlu0 %318, %v256
    %v320 = vpop.permute.xlu0 %319
    %321 = vset.pattern.permute.xlu0 0
    %322 = vperm.xlu0 %321, %v257
    %v323 = vpop.permute.xlu0 %322
    %324 = vset.pattern.permute.xlu0 0
    %325 = vperm.xlu0 %324, %v258
    %v326 = vpop.permute.xlu0 %325
    %327 = vset.pattern.permute.xlu0 0
    %328 = vperm.xlu0 %327, %v259
    %v329 = vpop.permute.xlu0 %328
    %330 = vset.pattern.permute.xlu0 0
    %331 = vperm.xlu0 %330, %v260
    %v332 = vpop.permute.xlu0 %331
    %333 = vset.pattern.permute.xlu0 0
    %334 = vperm.xlu0 %333, %v261
    %v335 = vpop.permute.xlu0 %334
    %336 = vset.pattern.permute.xlu0 0
    %337 = vperm.xlu0 %336, %v262
    %v338 = vpop.permute.xlu0 %337
    %339 = vset.pattern.permute.xlu0 0
    %340 = vperm.xlu0 %339, %v263
    %v341 = vpop.permute.xlu0 %340
    %342 = vset.pattern.permute.xlu0 0
    %343 = vperm.xlu0 %342, %v264
    %v344 = vpop.permute.xlu0 %343
    %345 = vset.pattern.permute.xlu0 0
    %346 = vperm.xlu0 %345, %v265
    %v347 = vpop.permute.xlu0 %346
    %348 = vset.pattern.permute.xlu0 0
    %349 = vperm.xlu0 %348, %v266
    %v350 = vpop.permute.xlu0 %349
    %351 = vset.pattern.permute.xlu0 0
    %352 = vperm.xlu0 %351, %v267
    %v353 = vpop.permute.xlu0 %352
    %354 = vset.pattern.permute.xlu0 0
    %355 = vperm.xlu0 %354, %v268
    %v356 = vpop.permute.xlu0 %355
    %357 = vset.pattern.permute.xlu0 0
    %358 = vperm.xlu0 %357, %v269
    %v359 = vpop.permute.xlu0 %358
    %360 = vset.pattern.permute.xlu0 0
    %361 = vperm.xlu0 %360, %v270
    %v362 = vpop.permute.xlu0 %361
    %363 = vset.pattern.permute.xlu0 0
    %364 = vperm.xlu0 %363, %v271
    %v365 = vpop.permute.xlu0 %364
    %366 = vset.pattern.permute.xlu0 0
    %367 = vperm.xlu0 %366, %v272
    %v368 = vpop.permute.xlu0 %367
    %vm369 = vcmp.eq.s32.totalorder %v275, %v48
    %vm370 = vcmp.eq.s32.totalorder %v278, %v48
    %vm371 = vcmp.eq.s32.totalorder %v281, %v48
    %vm372 = vcmp.eq.s32.totalorder %v284, %v48
    %vm373 = vcmp.eq.s32.totalorder %v287, %v48
    %vm374 = vcmp.eq.s32.totalorder %v290, %v48
    %vm375 = vcmp.eq.s32.totalorder %v293, %v48
    %vm376 = vcmp.eq.s32.totalorder %v296, %v48
    %vm377 = vcmp.eq.s32.totalorder %v299, %v48
    %vm378 = vcmp.eq.s32.totalorder %v302, %v48
    %vm379 = vcmp.eq.s32.totalorder %v305, %v48
    %vm380 = vcmp.eq.s32.totalorder %v308, %v48
    %vm381 = vcmp.eq.s32.totalorder %v311, %v48
    %vm382 = vcmp.eq.s32.totalorder %v314, %v48
    %vm383 = vcmp.eq.s32.totalorder %v317, %v48
    %vm384 = vcmp.eq.s32.totalorder %v320, %v48
    %vm385 = vcmp.eq.s32.totalorder %v323, %v48
    %vm386 = vcmp.eq.s32.totalorder %v326, %v48
    %vm387 = vcmp.eq.s32.totalorder %v329, %v48
    %vm388 = vcmp.eq.s32.totalorder %v332, %v48
    %vm389 = vcmp.eq.s32.totalorder %v335, %v48
    %vm390 = vcmp.eq.s32.totalorder %v338, %v48
    %vm391 = vcmp.eq.s32.totalorder %v341, %v48
    %vm392 = vcmp.eq.s32.totalorder %v344, %v48
    %vm393 = vcmp.eq.s32.totalorder %v347, %v48
    %vm394 = vcmp.eq.s32.totalorder %v350, %v48
    %vm395 = vcmp.eq.s32.totalorder %v353, %v48
    %vm396 = vcmp.eq.s32.totalorder %v356, %v48
    %vm397 = vcmp.eq.s32.totalorder %v359, %v48
    %vm398 = vcmp.eq.s32.totalorder %v362, %v48
    %vm399 = vcmp.eq.s32.totalorder %v365, %v48
    %vm400 = vcmp.eq.s32.totalorder %v368, %v48
    %v401 = vsel %vm369, 1, 0
    %v402 = vsel %vm370, 1, 0
    %v403 = vsel %vm371, 1, 0
    %v404 = vsel %vm372, 1, 0
    %v405 = vsel %vm373, 1, 0
    %v406 = vsel %vm374, 1, 0
    %v407 = vsel %vm375, 1, 0
    %v408 = vsel %vm376, 1, 0
    %v409 = vsel %vm377, 1, 0
    %v410 = vsel %vm378, 1, 0
    %v411 = vsel %vm379, 1, 0
    %v412 = vsel %vm380, 1, 0
    %v413 = vsel %vm381, 1, 0
    %v414 = vsel %vm382, 1, 0
    %v415 = vsel %vm383, 1, 0
    %v416 = vsel %vm384, 1, 0
    %v417 = vsel %vm385, 1, 0
    %v418 = vsel %vm386, 1, 0
    %v419 = vsel %vm387, 1, 0
    %v420 = vsel %vm388, 1, 0
    %v421 = vsel %vm389, 1, 0
    %v422 = vsel %vm390, 1, 0
    %v423 = vsel %vm391, 1, 0
    %v424 = vsel %vm392, 1, 0
    %v425 = vsel %vm393, 1, 0
    %v426 = vsel %vm394, 1, 0
    %v427 = vsel %vm395, 1, 0
    %v428 = vsel %vm396, 1, 0
    %v429 = vsel %vm397, 1, 0
    %v430 = vsel %vm398, 1, 0
    %v431 = vsel %vm399, 1, 0
    %v432 = vsel %vm400, 1, 0
    %v433 = vcvt.s32.f32 %v401
    %v434 = vcvt.s32.f32 %v402
    %v435 = vcvt.s32.f32 %v403
    %v436 = vcvt.s32.f32 %v404
    %v437 = vcvt.s32.f32 %v405
    %v438 = vcvt.s32.f32 %v406
    %v439 = vcvt.s32.f32 %v407
    %v440 = vcvt.s32.f32 %v408
    %v441 = vcvt.s32.f32 %v409
    %v442 = vcvt.s32.f32 %v410
    %v443 = vcvt.s32.f32 %v411
    %v444 = vcvt.s32.f32 %v412
    %v445 = vcvt.s32.f32 %v413
    %v446 = vcvt.s32.f32 %v414
    %v447 = vcvt.s32.f32 %v415
    %v448 = vcvt.s32.f32 %v416
    %v449 = vcvt.s32.f32 %v417
    %v450 = vcvt.s32.f32 %v418
    %v451 = vcvt.s32.f32 %v419
    %v452 = vcvt.s32.f32 %v420
    %v453 = vcvt.s32.f32 %v421
    %v454 = vcvt.s32.f32 %v422
    %v455 = vcvt.s32.f32 %v423
    %v456 = vcvt.s32.f32 %v424
    %v457 = vcvt.s32.f32 %v425
    %v458 = vcvt.s32.f32 %v426
    %v459 = vcvt.s32.f32 %v427
    %v460 = vcvt.s32.f32 %v428
    %v461 = vcvt.s32.f32 %v429
    %v462 = vcvt.s32.f32 %v430
    %v463 = vcvt.s32.f32 %v431
    %v464 = vcvt.s32.f32 %v432
    %v465 = vld [vmem:[%s1] sm:$0xff]
    %v466 = vld [vmem:[%s1 + $0x8] sm:$0xff]
    %v467 = vld [vmem:[%s1 + $0x10] sm:$0xff]
    %v468 = vld [vmem:[%s1 + $0x18] sm:$0xff]
    %v469 = vld [vmem:[%s2] sm:$0xff]
    %vm470 = vcmask 64512
    %v472 = vsel %vm470, %v433, 0
    %v475 = vsel %vm470, %v434, 0
    %v478 = vsel %vm470, %v435, 0
    %v481 = vsel %vm470, %v436, 0
    %v484 = vsel %vm470, %v437, 0
    %v487 = vsel %vm470, %v438, 0
    %v490 = vsel %vm470, %v439, 0
    %v493 = vsel %vm470, %v440, 0
    %v496 = vsel %vm470, %v441, 0
    %v499 = vsel %vm470, %v442, 0
    %v502 = vsel %vm470, %v443, 0
    %v505 = vsel %vm470, %v444, 0
    %v508 = vsel %vm470, %v445, 0
    %v511 = vsel %vm470, %v446, 0
    %v514 = vsel %vm470, %v447, 0
    %v517 = vsel %vm470, %v448, 0
    %v520 = vsel %vm470, %v449, 0
    %v523 = vsel %vm470, %v450, 0
    %v526 = vsel %vm470, %v451, 0
    %v529 = vsel %vm470, %v452, 0
    %v532 = vsel %vm470, %v453, 0
    %v535 = vsel %vm470, %v454, 0
    %v538 = vsel %vm470, %v455, 0
    %v541 = vsel %vm470, %v456, 0
    %v544 = vsel %vm470, %v457, 0
    %v547 = vsel %vm470, %v458, 0
    %v550 = vsel %vm470, %v459, 0
    %v553 = vsel %vm470, %v460, 0
    %v556 = vsel %vm470, %v461, 0
    %v559 = vsel %vm470, %v462, 0
    %v562 = vsel %vm470, %v463, 0
    %v565 = vsel %vm470, %v464, 0
    %567 = vmatprep.subr.mxu0 0.0
    %568 = vmatpush1.msra.mxu0 0.0
    %569 = vmatprep.subr.mxu0 0.0
    %570 = vmatpush1.msra.mxu0 0.0
    %571 = vmatprep.subr.mxu0 0.0
    %572 = vmatpush1.msra.mxu0 0.0
    %573 = vmatprep.subr.mxu0 0.0
    %574 = vmatpush1.msra.mxu0 0.0
    %575 = vmatprep.subr.mxu0 0.0
    %576 = vmatpush1.msra.mxu0 0.0
    %577 = vmatprep.subr.mxu0 0.0
    %578 = vmatpush1.msra.mxu0 0.0
    %579 = vmatprep.subr.mxu0 0.0
    %580 = vmatpush1.msra.mxu0 0.0
    %581 = vmatprep.subr.mxu0 0.0
    %582 = vmatpush1.msra.mxu0 0.0
    %583 = vmatprep.subr.mxu0 0.0
    %584 = vmatpush1.msra.mxu0 0.0
    %585 = vmatprep.subr.mxu0 0.0
    %586 = vmatpush1.msra.mxu0 0.0
    %587 = vmatprep.subr.mxu0 0.0
    %588 = vmatpush1.msra.mxu0 0.0
    %589 = vmatprep.subr.mxu0 0.0
    %590 = vmatpush1.msra.mxu0 0.0
    %591 = vmatprep.subr.mxu0 0.0
    %592 = vmatpush1.msra.mxu0 0.0
    %593 = vmatprep.subr.mxu0 0.0
    %594 = vmatpush1.msra.mxu0 0.0
    %595 = vmatprep.subr.mxu0 0.0
    %596 = vmatpush1.msra.mxu0 0.0
    %597 = vmatprep.subr.mxu0 0.0
    %v598 = vand.u32 %v469, 4294901760
    %599 = vmatpush1.msra.mxu0 %v598
    %600 = vmatprep.subr.mxu0 0.0
    %601 = vmatpush2.msra.mxu0 0.0
    %602 = vmatprep.subr.mxu0 0.0
    %603 = vmatpush2.msra.mxu0 0.0
    %604 = vmatprep.subr.mxu0 0.0
    %605 = vmatpush2.msra.mxu0 0.0
    %606 = vmatprep.subr.mxu0 0.0
    %607 = vmatpush2.msra.mxu0 0.0
    %608 = vmatprep.subr.mxu0 0.0
    %609 = vmatpush2.msra.mxu0 0.0
    %610 = vmatprep.subr.mxu0 0.0
    %611 = vmatpush2.msra.mxu0 0.0
    %612 = vmatprep.subr.mxu0 0.0
    %613 = vmatpush2.msra.mxu0 0.0
    %614 = vmatprep.subr.mxu0 0.0
    %615 = vmatpush2.msra.mxu0 0.0
    %616 = vmatprep.subr.mxu0 0.0
    %617 = vmatpush2.msra.mxu0 0.0
    %618 = vmatprep.subr.mxu0 0.0
    %619 = vmatpush2.msra.mxu0 0.0
    %620 = vmatprep.subr.mxu0 0.0
    %621 = vmatpush2.msra.mxu0 0.0
    %622 = vmatprep.subr.mxu0 0.0
    %623 = vmatpush2.msra.mxu0 0.0
    %624 = vmatprep.subr.mxu0 0.0
    %625 = vmatpush2.msra.mxu0 0.0
    %626 = vmatprep.subr.mxu0 0.0
    %627 = vmatpush2.msra.mxu0 0.0
    %628 = vmatprep.subr.mxu0 0.0
    %629 = vmatpush2.msra.mxu0 0.0
    %630 = vmatprep.subr.mxu0 0.0
    %631 = vmatpush2.msra.mxu0 0.0
    %632 = vmatprep.mubr.f32.mxu0 0.0
    %v633 = vand.u32 %v472, 4294901760
    %v634 = vsub.f32 %v472, %v633
    %v635 = vand.u32 %v634, 4294901760
    %v636 = vsub.f32 %v634, %v635
    %v637 = vand.u32 %v636, 4294901760
    %638 = vmatmul.mubr.f32.gmra.mxu0 %v637
    %v639 = vpop.f32.mrf.mxu0
    %v640 = vadd.f32 0.0, %v639
    %v641 = vpop.f32.mrf.mxu0
    %642 = vmatprep.mubr.f32.mxu0 0.0
    %v643 = vand.u32 %v475, 4294901760
    %v644 = vsub.f32 %v475, %v643
    %v645 = vand.u32 %v644, 4294901760
    %v646 = vsub.f32 %v644, %v645
    %v647 = vand.u32 %v646, 4294901760
    %648 = vmatmul.mubr.f32.gmra.mxu0 %v647
    %v649 = vpop.f32.mrf.mxu0
    %v650 = vadd.f32 0.0, %v649
    %v651 = vpop.f32.mrf.mxu0
    %652 = vmatprep.mubr.f32.mxu0 0.0
    %v653 = vand.u32 %v478, 4294901760
    %v654 = vsub.f32 %v478, %v653
    %v655 = vand.u32 %v654, 4294901760
    %v656 = vsub.f32 %v654, %v655
    %v657 = vand.u32 %v656, 4294901760
    %658 = vmatmul.mubr.f32.gmra.mxu0 %v657
    %v659 = vpop.f32.mrf.mxu0
    %v660 = vadd.f32 0.0, %v659
    %v661 = vpop.f32.mrf.mxu0
    %662 = vmatprep.mubr.f32.mxu0 0.0
    %v663 = vand.u32 %v481, 4294901760
    %v664 = vsub.f32 %v481, %v663
    %v665 = vand.u32 %v664, 4294901760
    %v666 = vsub.f32 %v664, %v665
    %v667 = vand.u32 %v666, 4294901760
    %668 = vmatmul.mubr.f32.gmra.mxu0 %v667
    %v669 = vpop.f32.mrf.mxu0
    %v670 = vadd.f32 0.0, %v669
    %v671 = vpop.f32.mrf.mxu0
    %672 = vmatprep.mubr.f32.mxu0 0.0
    %v673 = vand.u32 %v484, 4294901760
    %v674 = vsub.f32 %v484, %v673
    %v675 = vand.u32 %v674, 4294901760
    %v676 = vsub.f32 %v674, %v675
    %v677 = vand.u32 %v676, 4294901760
    %678 = vmatmul.mubr.f32.gmra.mxu0 %v677
    %v679 = vpop.f32.mrf.mxu0
    %v680 = vadd.f32 0.0, %v679
    %v681 = vpop.f32.mrf.mxu0
    %682 = vmatprep.mubr.f32.mxu0 0.0
    %v683 = vand.u32 %v487, 4294901760
    %v684 = vsub.f32 %v487, %v683
    %v685 = vand.u32 %v684, 4294901760
    %v686 = vsub.f32 %v684, %v685
    %v687 = vand.u32 %v686, 4294901760
    %688 = vmatmul.mubr.f32.gmra.mxu0 %v687
    %v689 = vpop.f32.mrf.mxu0
    %v690 = vadd.f32 0.0, %v689
    %v691 = vpop.f32.mrf.mxu0
    %692 = vmatprep.mubr.f32.mxu0 0.0
    %v693 = vand.u32 %v490, 4294901760
    %v694 = vsub.f32 %v490, %v693
    %v695 = vand.u32 %v694, 4294901760
    %v696 = vsub.f32 %v694, %v695
    %v697 = vand.u32 %v696, 4294901760
    %698 = vmatmul.mubr.f32.gmra.mxu0 %v697
    %v699 = vpop.f32.mrf.mxu0
    %v700 = vadd.f32 0.0, %v699
    %v701 = vpop.f32.mrf.mxu0
    %702 = vmatprep.mubr.f32.mxu0 0.0
    %v703 = vand.u32 %v493, 4294901760
    %v704 = vsub.f32 %v493, %v703
    %v705 = vand.u32 %v704, 4294901760
    %v706 = vsub.f32 %v704, %v705
    %v707 = vand.u32 %v706, 4294901760
    %708 = vmatmul.mubr.f32.gmra.mxu0 %v707
    %v709 = vpop.f32.mrf.mxu0
    %v710 = vadd.f32 0.0, %v709
    %v711 = vpop.f32.mrf.mxu0
    %712 = vmatprep.mubr.f32.mxu0 0.0
    %v713 = vand.u32 %v496, 4294901760
    %v714 = vsub.f32 %v496, %v713
    %v715 = vand.u32 %v714, 4294901760
    %v716 = vsub.f32 %v714, %v715
    %v717 = vand.u32 %v716, 4294901760
    %718 = vmatmul.mubr.f32.gmra.mxu0 %v717
    %v719 = vpop.f32.mrf.mxu0
    %v720 = vadd.f32 0.0, %v719
    %v721 = vpop.f32.mrf.mxu0
    %722 = vmatprep.mubr.f32.mxu0 0.0
    %v723 = vand.u32 %v499, 4294901760
    %v724 = vsub.f32 %v499, %v723
    %v725 = vand.u32 %v724, 4294901760
    %v726 = vsub.f32 %v724, %v725
    %v727 = vand.u32 %v726, 4294901760
    %728 = vmatmul.mubr.f32.gmra.mxu0 %v727
    %v729 = vpop.f32.mrf.mxu0
    %v730 = vadd.f32 0.0, %v729
    %v731 = vpop.f32.mrf.mxu0
    %732 = vmatprep.mubr.f32.mxu0 0.0
    %v733 = vand.u32 %v502, 4294901760
    %v734 = vsub.f32 %v502, %v733
    %v735 = vand.u32 %v734, 4294901760
    %v736 = vsub.f32 %v734, %v735
    %v737 = vand.u32 %v736, 4294901760
    %738 = vmatmul.mubr.f32.gmra.mxu0 %v737
    %v739 = vpop.f32.mrf.mxu0
    %v740 = vadd.f32 0.0, %v739
    %v741 = vpop.f32.mrf.mxu0
    %742 = vmatprep.mubr.f32.mxu0 0.0
    %v743 = vand.u32 %v505, 4294901760
    %v744 = vsub.f32 %v505, %v743
    %v745 = vand.u32 %v744, 4294901760
    %v746 = vsub.f32 %v744, %v745
    %v747 = vand.u32 %v746, 4294901760
    %748 = vmatmul.mubr.f32.gmra.mxu0 %v747
    %v749 = vpop.f32.mrf.mxu0
    %v750 = vadd.f32 0.0, %v749
    %v751 = vpop.f32.mrf.mxu0
    %752 = vmatprep.mubr.f32.mxu0 0.0
    %v753 = vand.u32 %v508, 4294901760
    %v754 = vsub.f32 %v508, %v753
    %v755 = vand.u32 %v754, 4294901760
    %v756 = vsub.f32 %v754, %v755
    %v757 = vand.u32 %v756, 4294901760
    %758 = vmatmul.mubr.f32.gmra.mxu0 %v757
    %v759 = vpop.f32.mrf.mxu0
    %v760 = vadd.f32 0.0, %v759
    %v761 = vpop.f32.mrf.mxu0
    %762 = vmatprep.mubr.f32.mxu0 0.0
    %v763 = vand.u32 %v511, 4294901760
    %v764 = vsub.f32 %v511, %v763
    %v765 = vand.u32 %v764, 4294901760
    %v766 = vsub.f32 %v764, %v765
    %v767 = vand.u32 %v766, 4294901760
    %768 = vmatmul.mubr.f32.gmra.mxu0 %v767
    %v769 = vpop.f32.mrf.mxu0
    %v770 = vadd.f32 0.0, %v769
    %v771 = vpop.f32.mrf.mxu0
    %772 = vmatprep.mubr.f32.mxu0 0.0
    %v773 = vand.u32 %v514, 4294901760
    %v774 = vsub.f32 %v514, %v773
    %v775 = vand.u32 %v774, 4294901760
    %v776 = vsub.f32 %v774, %v775
    %v777 = vand.u32 %v776, 4294901760
    %778 = vmatmul.mubr.f32.gmra.mxu0 %v777
    %v779 = vpop.f32.mrf.mxu0
    %v780 = vadd.f32 0.0, %v779
    %v781 = vpop.f32.mrf.mxu0
    %782 = vmatprep.mubr.f32.mxu0 0.0
    %v783 = vand.u32 %v517, 4294901760
    %v784 = vsub.f32 %v517, %v783
    %v785 = vand.u32 %v784, 4294901760
    %v786 = vsub.f32 %v784, %v785
    %v787 = vand.u32 %v786, 4294901760
    %788 = vmatmul.mubr.f32.gmra.mxu0 %v787
    %v789 = vpop.f32.mrf.mxu0
    %v790 = vadd.f32 0.0, %v789
    %v791 = vpop.f32.mrf.mxu0
    %792 = vmatprep.mubr.f32.mxu0 0.0
    %v793 = vand.u32 %v520, 4294901760
    %v794 = vsub.f32 %v520, %v793
    %v795 = vand.u32 %v794, 4294901760
    %v796 = vsub.f32 %v794, %v795
    %v797 = vand.u32 %v796, 4294901760
    %798 = vmatmul.mubr.f32.gmra.mxu0 %v797
    %v799 = vpop.f32.mrf.mxu0
    %v800 = vadd.f32 0.0, %v799
    %v801 = vpop.f32.mrf.mxu0
    %802 = vmatprep.mubr.f32.mxu0 0.0
    %v803 = vand.u32 %v523, 4294901760
    %v804 = vsub.f32 %v523, %v803
    %v805 = vand.u32 %v804, 4294901760
    %v806 = vsub.f32 %v804, %v805
    %v807 = vand.u32 %v806, 4294901760
    %808 = vmatmul.mubr.f32.gmra.mxu0 %v807
    %v809 = vpop.f32.mrf.mxu0
    %v810 = vadd.f32 0.0, %v809
    %v811 = vpop.f32.mrf.mxu0
    %812 = vmatprep.mubr.f32.mxu0 0.0
    %v813 = vand.u32 %v526, 4294901760
    %v814 = vsub.f32 %v526, %v813
    %v815 = vand.u32 %v814, 4294901760
    %v816 = vsub.f32 %v814, %v815
    %v817 = vand.u32 %v816, 4294901760
    %818 = vmatmul.mubr.f32.gmra.mxu0 %v817
    %v819 = vpop.f32.mrf.mxu0
    %v820 = vadd.f32 0.0, %v819
    %v821 = vpop.f32.mrf.mxu0
    %822 = vmatprep.mubr.f32.mxu0 0.0
    %v823 = vand.u32 %v529, 4294901760
    %v824 = vsub.f32 %v529, %v823
    %v825 = vand.u32 %v824, 4294901760
    %v826 = vsub.f32 %v824, %v825
    %v827 = vand.u32 %v826, 4294901760
    %828 = vmatmul.mubr.f32.gmra.mxu0 %v827
    %v829 = vpop.f32.mrf.mxu0
    %v830 = vadd.f32 0.0, %v829
    %v831 = vpop.f32.mrf.mxu0
    %832 = vmatprep.mubr.f32.mxu0 0.0
    %v833 = vand.u32 %v532, 4294901760
    %v834 = vsub.f32 %v532, %v833
    %v835 = vand.u32 %v834, 4294901760
    %v836 = vsub.f32 %v834, %v835
    %v837 = vand.u32 %v836, 4294901760
    %838 = vmatmul.mubr.f32.gmra.mxu0 %v837
    %v839 = vpop.f32.mrf.mxu0
    %v840 = vadd.f32 0.0, %v839
    %v841 = vpop.f32.mrf.mxu0
    %842 = vmatprep.mubr.f32.mxu0 0.0
    %v843 = vand.u32 %v535, 4294901760
    %v844 = vsub.f32 %v535, %v843
    %v845 = vand.u32 %v844, 4294901760
    %v846 = vsub.f32 %v844, %v845
    %v847 = vand.u32 %v846, 4294901760
    %848 = vmatmul.mubr.f32.gmra.mxu0 %v847
    %v849 = vpop.f32.mrf.mxu0
    %v850 = vadd.f32 0.0, %v849
    %v851 = vpop.f32.mrf.mxu0
    %852 = vmatprep.mubr.f32.mxu0 0.0
    %v853 = vand.u32 %v538, 4294901760
    %v854 = vsub.f32 %v538, %v853
    %v855 = vand.u32 %v854, 4294901760
    %v856 = vsub.f32 %v854, %v855
    %v857 = vand.u32 %v856, 4294901760
    %858 = vmatmul.mubr.f32.gmra.mxu0 %v857
    %v859 = vpop.f32.mrf.mxu0
    %v860 = vadd.f32 0.0, %v859
    %v861 = vpop.f32.mrf.mxu0
    %862 = vmatprep.mubr.f32.mxu0 0.0
    %v863 = vand.u32 %v541, 4294901760
    %v864 = vsub.f32 %v541, %v863
    %v865 = vand.u32 %v864, 4294901760
    %v866 = vsub.f32 %v864, %v865
    %v867 = vand.u32 %v866, 4294901760
    %868 = vmatmul.mubr.f32.gmra.mxu0 %v867
    %v869 = vpop.f32.mrf.mxu0
    %v870 = vadd.f32 0.0, %v869
    %v871 = vpop.f32.mrf.mxu0
    %872 = vmatprep.mubr.f32.mxu0 0.0
    %v873 = vand.u32 %v544, 4294901760
    %v874 = vsub.f32 %v544, %v873
    %v875 = vand.u32 %v874, 4294901760
    %v876 = vsub.f32 %v874, %v875
    %v877 = vand.u32 %v876, 4294901760
    %878 = vmatmul.mubr.f32.gmra.mxu0 %v877
    %v879 = vpop.f32.mrf.mxu0
    %v880 = vadd.f32 0.0, %v879
    %v881 = vpop.f32.mrf.mxu0
    %882 = vmatprep.mubr.f32.mxu0 0.0
    %v883 = vand.u32 %v547, 4294901760
    %v884 = vsub.f32 %v547, %v883
    %v885 = vand.u32 %v884, 4294901760
    %v886 = vsub.f32 %v884, %v885
    %v887 = vand.u32 %v886, 4294901760
    %888 = vmatmul.mubr.f32.gmra.mxu0 %v887
    %v889 = vpop.f32.mrf.mxu0
    %v890 = vadd.f32 0.0, %v889
    %v891 = vpop.f32.mrf.mxu0
    %892 = vmatprep.mubr.f32.mxu0 0.0
    %v893 = vand.u32 %v550, 4294901760
    %v894 = vsub.f32 %v550, %v893
    %v895 = vand.u32 %v894, 4294901760
    %v896 = vsub.f32 %v894, %v895
    %v897 = vand.u32 %v896, 4294901760
    %898 = vmatmul.mubr.f32.gmra.mxu0 %v897
    %v899 = vpop.f32.mrf.mxu0
    %v900 = vadd.f32 0.0, %v899
    %v901 = vpop.f32.mrf.mxu0
    %902 = vmatprep.mubr.f32.mxu0 0.0
    %v903 = vand.u32 %v553, 4294901760
    %v904 = vsub.f32 %v553, %v903
    %v905 = vand.u32 %v904, 4294901760
    %v906 = vsub.f32 %v904, %v905
    %v907 = vand.u32 %v906, 4294901760
    %908 = vmatmul.mubr.f32.gmra.mxu0 %v907
    %v909 = vpop.f32.mrf.mxu0
    %v910 = vadd.f32 0.0, %v909
    %v911 = vpop.f32.mrf.mxu0
    %912 = vmatprep.mubr.f32.mxu0 0.0
    %v913 = vand.u32 %v556, 4294901760
    %v914 = vsub.f32 %v556, %v913
    %v915 = vand.u32 %v914, 4294901760
    %v916 = vsub.f32 %v914, %v915
    %v917 = vand.u32 %v916, 4294901760
    %918 = vmatmul.mubr.f32.gmra.mxu0 %v917
    %v919 = vpop.f32.mrf.mxu0
    %v920 = vadd.f32 0.0, %v919
    %v921 = vpop.f32.mrf.mxu0
    %922 = vmatprep.mubr.f32.mxu0 0.0
    %v923 = vand.u32 %v559, 4294901760
    %v924 = vsub.f32 %v559, %v923
    %v925 = vand.u32 %v924, 4294901760
    %v926 = vsub.f32 %v924, %v925
    %v927 = vand.u32 %v926, 4294901760
    %928 = vmatmul.mubr.f32.gmra.mxu0 %v927
    %v929 = vpop.f32.mrf.mxu0
    %v930 = vadd.f32 0.0, %v929
    %v931 = vpop.f32.mrf.mxu0
    %932 = vmatprep.mubr.f32.mxu0 0.0
    %v933 = vand.u32 %v562, 4294901760
    %v934 = vsub.f32 %v562, %v933
    %v935 = vand.u32 %v934, 4294901760
    %v936 = vsub.f32 %v934, %v935
    %v937 = vand.u32 %v936, 4294901760
    %938 = vmatmul.mubr.f32.gmra.mxu0 %v937
    %v939 = vpop.f32.mrf.mxu0
    %v940 = vadd.f32 0.0, %v939
    %v941 = vpop.f32.mrf.mxu0
    %942 = vmatprep.mubr.f32.mxu0 0.0
    %v943 = vand.u32 %v565, 4294901760
    %v944 = vsub.f32 %v565, %v943
    %v945 = vand.u32 %v944, 4294901760
    %v946 = vsub.f32 %v944, %v945
    %v947 = vand.u32 %v946, 4294901760
    %948 = vmatmul.mubr.f32.gmra.mxu0 %v947
    %v949 = vpop.f32.mrf.mxu0
    %v950 = vadd.f32 0.0, %v949
    %v951 = vpop.f32.mrf.mxu0
    %952 = vdwg.mxu0
    %953 = vmatprep.subr.mxu0 0.0
    %954 = vmatpush1.msra.mxu0 0.0
    %955 = vmatprep.subr.mxu0 0.0
    %956 = vmatpush1.msra.mxu0 0.0
    %957 = vmatprep.subr.mxu0 0.0
    %958 = vmatpush1.msra.mxu0 0.0
    %959 = vmatprep.subr.mxu0 0.0
    %960 = vmatpush1.msra.mxu0 0.0
    %961 = vmatprep.subr.mxu0 0.0
    %962 = vmatpush1.msra.mxu0 0.0
    %963 = vmatprep.subr.mxu0 0.0
    %964 = vmatpush1.msra.mxu0 0.0
    %965 = vmatprep.subr.mxu0 0.0
    %966 = vmatpush1.msra.mxu0 0.0
    %967 = vmatprep.subr.mxu0 0.0
    %968 = vmatpush1.msra.mxu0 0.0
    %969 = vmatprep.subr.mxu0 0.0
    %970 = vmatpush1.msra.mxu0 0.0
    %971 = vmatprep.subr.mxu0 0.0
    %972 = vmatpush1.msra.mxu0 0.0
    %973 = vmatprep.subr.mxu0 0.0
    %974 = vmatpush1.msra.mxu0 0.0
    %975 = vmatprep.subr.mxu0 0.0
    %976 = vmatpush1.msra.mxu0 0.0
    %977 = vmatprep.subr.mxu0 0.0
    %978 = vmatpush1.msra.mxu0 0.0
    %979 = vmatprep.subr.mxu0 0.0
    %980 = vmatpush1.msra.mxu0 0.0
    %981 = vmatprep.subr.mxu0 0.0
    %982 = vmatpush1.msra.mxu0 0.0
    %983 = vmatprep.subr.mxu0 0.0
    %v984 = vand.u32 %v469, 4294901760
    %v985 = vsub.f32 %v469, %v984
    %v986 = vand.u32 %v985, 4294901760
    %v987 = vsub.f32 %v985, %v986
    %v988 = vand.u32 %v987, 4294901760
    %989 = vmatpush1.msra.mxu0 %v988
    %990 = vmatprep.subr.mxu0 0.0
    %991 = vmatpush2.msra.mxu0 0.0
    %992 = vmatprep.subr.mxu0 0.0
    %993 = vmatpush2.msra.mxu0 0.0
    %994 = vmatprep.subr.mxu0 0.0
    %995 = vmatpush2.msra.mxu0 0.0
    %996 = vmatprep.subr.mxu0 0.0
    %997 = vmatpush2.msra.mxu0 0.0
    %998 = vmatprep.subr.mxu0 0.0
    %999 = vmatpush2.msra.mxu0 0.0
    %1000 = vmatprep.subr.mxu0 0.0
    %1001 = vmatpush2.msra.mxu0 0.0
    %1002 = vmatprep.subr.mxu0 0.0
    %1003 = vmatpush2.msra.mxu0 0.0
    %1004 = vmatprep.subr.mxu0 0.0
    %1005 = vmatpush2.msra.mxu0 0.0
    %1006 = vmatprep.subr.mxu0 0.0
    %1007 = vmatpush2.msra.mxu0 0.0
    %1008 = vmatprep.subr.mxu0 0.0
    %1009 = vmatpush2.msra.mxu0 0.0
    %1010 = vmatprep.subr.mxu0 0.0
    %1011 = vmatpush2.msra.mxu0 0.0
    %1012 = vmatprep.subr.mxu0 0.0
    %1013 = vmatpush2.msra.mxu0 0.0
    %1014 = vmatprep.subr.mxu0 0.0
    %1015 = vmatpush2.msra.mxu0 0.0
    %1016 = vmatprep.subr.mxu0 0.0
    %1017 = vmatpush2.msra.mxu0 0.0
    %1018 = vmatprep.subr.mxu0 0.0
    %1019 = vmatpush2.msra.mxu0 0.0
    %1020 = vmatprep.subr.mxu0 0.0
    %1021 = vmatpush2.msra.mxu0 0.0
    %1022 = vmatprep.mubr.f32.mxu0 0.0
    %v1023 = vand.u32 %v472, 4294901760
    %1024 = vmatmul.mubr.f32.gmra.mxu0 %v1023
    %v1025 = vpop.f32.mrf.mxu0
    %v1026 = vadd.f32 %v640, %v1025
    %v1027 = vpop.f32.mrf.mxu0
    %1028 = vmatprep.mubr.f32.mxu0 0.0
    %v1029 = vand.u32 %v475, 4294901760
    %1030 = vmatmul.mubr.f32.gmra.mxu0 %v1029
    %v1031 = vpop.f32.mrf.mxu0
    %v1032 = vadd.f32 %v650, %v1031
    %v1033 = vpop.f32.mrf.mxu0
    %1034 = vmatprep.mubr.f32.mxu0 0.0
    %v1035 = vand.u32 %v478, 4294901760
    %1036 = vmatmul.mubr.f32.gmra.mxu0 %v1035
    %v1037 = vpop.f32.mrf.mxu0
    %v1038 = vadd.f32 %v660, %v1037
    %v1039 = vpop.f32.mrf.mxu0
    %1040 = vmatprep.mubr.f32.mxu0 0.0
    %v1041 = vand.u32 %v481, 4294901760
    %1042 = vmatmul.mubr.f32.gmra.mxu0 %v1041
    %v1043 = vpop.f32.mrf.mxu0
    %v1044 = vadd.f32 %v670, %v1043
    %v1045 = vpop.f32.mrf.mxu0
    %1046 = vmatprep.mubr.f32.mxu0 0.0
    %v1047 = vand.u32 %v484, 4294901760
    %1048 = vmatmul.mubr.f32.gmra.mxu0 %v1047
    %v1049 = vpop.f32.mrf.mxu0
    %v1050 = vadd.f32 %v680, %v1049
    %v1051 = vpop.f32.mrf.mxu0
    %1052 = vmatprep.mubr.f32.mxu0 0.0
    %v1053 = vand.u32 %v487, 4294901760
    %1054 = vmatmul.mubr.f32.gmra.mxu0 %v1053
    %v1055 = vpop.f32.mrf.mxu0
    %v1056 = vadd.f32 %v690, %v1055
    %v1057 = vpop.f32.mrf.mxu0
    %1058 = vmatprep.mubr.f32.mxu0 0.0
    %v1059 = vand.u32 %v490, 4294901760
    %1060 = vmatmul.mubr.f32.gmra.mxu0 %v1059
    %v1061 = vpop.f32.mrf.mxu0
    %v1062 = vadd.f32 %v700, %v1061
    %v1063 = vpop.f32.mrf.mxu0
    %1064 = vmatprep.mubr.f32.mxu0 0.0
    %v1065 = vand.u32 %v493, 4294901760
    %1066 = vmatmul.mubr.f32.gmra.mxu0 %v1065
    %v1067 = vpop.f32.mrf.mxu0
    %v1068 = vadd.f32 %v710, %v1067
    %v1069 = vpop.f32.mrf.mxu0
    %1070 = vmatprep.mubr.f32.mxu0 0.0
    %v1071 = vand.u32 %v496, 4294901760
    %1072 = vmatmul.mubr.f32.gmra.mxu0 %v1071
    %v1073 = vpop.f32.mrf.mxu0
    %v1074 = vadd.f32 %v720, %v1073
    %v1075 = vpop.f32.mrf.mxu0
    %1076 = vmatprep.mubr.f32.mxu0 0.0
    %v1077 = vand.u32 %v499, 4294901760
    %1078 = vmatmul.mubr.f32.gmra.mxu0 %v1077
    %v1079 = vpop.f32.mrf.mxu0
    %v1080 = vadd.f32 %v730, %v1079
    %v1081 = vpop.f32.mrf.mxu0
    %1082 = vmatprep.mubr.f32.mxu0 0.0
    %v1083 = vand.u32 %v502, 4294901760
    %1084 = vmatmul.mubr.f32.gmra.mxu0 %v1083
    %v1085 = vpop.f32.mrf.mxu0
    %v1086 = vadd.f32 %v740, %v1085
    %v1087 = vpop.f32.mrf.mxu0
    %1088 = vmatprep.mubr.f32.mxu0 0.0
    %v1089 = vand.u32 %v505, 4294901760
    %1090 = vmatmul.mubr.f32.gmra.mxu0 %v1089
    %v1091 = vpop.f32.mrf.mxu0
    %v1092 = vadd.f32 %v750, %v1091
    %v1093 = vpop.f32.mrf.mxu0
    %1094 = vmatprep.mubr.f32.mxu0 0.0
    %v1095 = vand.u32 %v508, 4294901760
    %1096 = vmatmul.mubr.f32.gmra.mxu0 %v1095
    %v1097 = vpop.f32.mrf.mxu0
    %v1098 = vadd.f32 %v760, %v1097
    %v1099 = vpop.f32.mrf.mxu0
    %1100 = vmatprep.mubr.f32.mxu0 0.0
    %v1101 = vand.u32 %v511, 4294901760
    %1102 = vmatmul.mubr.f32.gmra.mxu0 %v1101
    %v1103 = vpop.f32.mrf.mxu0
    %v1104 = vadd.f32 %v770, %v1103
    %v1105 = vpop.f32.mrf.mxu0
    %1106 = vmatprep.mubr.f32.mxu0 0.0
    %v1107 = vand.u32 %v514, 4294901760
    %1108 = vmatmul.mubr.f32.gmra.mxu0 %v1107
    %v1109 = vpop.f32.mrf.mxu0
    %v1110 = vadd.f32 %v780, %v1109
    %v1111 = vpop.f32.mrf.mxu0
    %1112 = vmatprep.mubr.f32.mxu0 0.0
    %v1113 = vand.u32 %v517, 4294901760
    %1114 = vmatmul.mubr.f32.gmra.mxu0 %v1113
    %v1115 = vpop.f32.mrf.mxu0
    %v1116 = vadd.f32 %v790, %v1115
    %v1117 = vpop.f32.mrf.mxu0
    %1118 = vmatprep.mubr.f32.mxu0 0.0
    %v1119 = vand.u32 %v520, 4294901760
    %1120 = vmatmul.mubr.f32.gmra.mxu0 %v1119
    %v1121 = vpop.f32.mrf.mxu0
    %v1122 = vadd.f32 %v800, %v1121
    %v1123 = vpop.f32.mrf.mxu0
    %1124 = vmatprep.mubr.f32.mxu0 0.0
    %v1125 = vand.u32 %v523, 4294901760
    %1126 = vmatmul.mubr.f32.gmra.mxu0 %v1125
    %v1127 = vpop.f32.mrf.mxu0
    %v1128 = vadd.f32 %v810, %v1127
    %v1129 = vpop.f32.mrf.mxu0
    %1130 = vmatprep.mubr.f32.mxu0 0.0
    %v1131 = vand.u32 %v526, 4294901760
    %1132 = vmatmul.mubr.f32.gmra.mxu0 %v1131
    %v1133 = vpop.f32.mrf.mxu0
    %v1134 = vadd.f32 %v820, %v1133
    %v1135 = vpop.f32.mrf.mxu0
    %1136 = vmatprep.mubr.f32.mxu0 0.0
    %v1137 = vand.u32 %v529, 4294901760
    %1138 = vmatmul.mubr.f32.gmra.mxu0 %v1137
    %v1139 = vpop.f32.mrf.mxu0
    %v1140 = vadd.f32 %v830, %v1139
    %v1141 = vpop.f32.mrf.mxu0
    %1142 = vmatprep.mubr.f32.mxu0 0.0
    %v1143 = vand.u32 %v532, 4294901760
    %1144 = vmatmul.mubr.f32.gmra.mxu0 %v1143
    %v1145 = vpop.f32.mrf.mxu0
    %v1146 = vadd.f32 %v840, %v1145
    %v1147 = vpop.f32.mrf.mxu0
    %1148 = vmatprep.mubr.f32.mxu0 0.0
    %v1149 = vand.u32 %v535, 4294901760
    %1150 = vmatmul.mubr.f32.gmra.mxu0 %v1149
    %v1151 = vpop.f32.mrf.mxu0
    %v1152 = vadd.f32 %v850, %v1151
    %v1153 = vpop.f32.mrf.mxu0
    %1154 = vmatprep.mubr.f32.mxu0 0.0
    %v1155 = vand.u32 %v538, 4294901760
    %1156 = vmatmul.mubr.f32.gmra.mxu0 %v1155
    %v1157 = vpop.f32.mrf.mxu0
    %v1158 = vadd.f32 %v860, %v1157
    %v1159 = vpop.f32.mrf.mxu0
    %1160 = vmatprep.mubr.f32.mxu0 0.0
    %v1161 = vand.u32 %v541, 4294901760
    %1162 = vmatmul.mubr.f32.gmra.mxu0 %v1161
    %v1163 = vpop.f32.mrf.mxu0
    %v1164 = vadd.f32 %v870, %v1163
    %v1165 = vpop.f32.mrf.mxu0
    %1166 = vmatprep.mubr.f32.mxu0 0.0
    %v1167 = vand.u32 %v544, 4294901760
    %1168 = vmatmul.mubr.f32.gmra.mxu0 %v1167
    %v1169 = vpop.f32.mrf.mxu0
    %v1170 = vadd.f32 %v880, %v1169
    %v1171 = vpop.f32.mrf.mxu0
    %1172 = vmatprep.mubr.f32.mxu0 0.0
    %v1173 = vand.u32 %v547, 4294901760
    %1174 = vmatmul.mubr.f32.gmra.mxu0 %v1173
    %v1175 = vpop.f32.mrf.mxu0
    %v1176 = vadd.f32 %v890, %v1175
    %v1177 = vpop.f32.mrf.mxu0
    %1178 = vmatprep.mubr.f32.mxu0 0.0
    %v1179 = vand.u32 %v550, 4294901760
    %1180 = vmatmul.mubr.f32.gmra.mxu0 %v1179
    %v1181 = vpop.f32.mrf.mxu0
    %v1182 = vadd.f32 %v900, %v1181
    %v1183 = vpop.f32.mrf.mxu0
    %1184 = vmatprep.mubr.f32.mxu0 0.0
    %v1185 = vand.u32 %v553, 4294901760
    %1186 = vmatmul.mubr.f32.gmra.mxu0 %v1185
    %v1187 = vpop.f32.mrf.mxu0
    %v1188 = vadd.f32 %v910, %v1187
    %v1189 = vpop.f32.mrf.mxu0
    %1190 = vmatprep.mubr.f32.mxu0 0.0
    %v1191 = vand.u32 %v556, 4294901760
    %1192 = vmatmul.mubr.f32.gmra.mxu0 %v1191
    %v1193 = vpop.f32.mrf.mxu0
    %v1194 = vadd.f32 %v920, %v1193
    %v1195 = vpop.f32.mrf.mxu0
    %1196 = vmatprep.mubr.f32.mxu0 0.0
    %v1197 = vand.u32 %v559, 4294901760
    %1198 = vmatmul.mubr.f32.gmra.mxu0 %v1197
    %v1199 = vpop.f32.mrf.mxu0
    %v1200 = vadd.f32 %v930, %v1199
    %v1201 = vpop.f32.mrf.mxu0
    %1202 = vmatprep.mubr.f32.mxu0 0.0
    %v1203 = vand.u32 %v562, 4294901760
    %1204 = vmatmul.mubr.f32.gmra.mxu0 %v1203
    %v1205 = vpop.f32.mrf.mxu0
    %v1206 = vadd.f32 %v940, %v1205
    %v1207 = vpop.f32.mrf.mxu0
    %1208 = vmatprep.mubr.f32.mxu0 0.0
    %v1209 = vand.u32 %v565, 4294901760
    %1210 = vmatmul.mubr.f32.gmra.mxu0 %v1209
    %v1211 = vpop.f32.mrf.mxu0
    %v1212 = vadd.f32 %v950, %v1211
    %v1213 = vpop.f32.mrf.mxu0
    %1214 = vdwg.mxu0
    %1215 = vmatprep.subr.mxu0 0.0
    %1216 = vmatpush1.msra.mxu0 0.0
    %1217 = vmatprep.subr.mxu0 0.0
    %1218 = vmatpush1.msra.mxu0 0.0
    %1219 = vmatprep.subr.mxu0 0.0
    %1220 = vmatpush1.msra.mxu0 0.0
    %1221 = vmatprep.subr.mxu0 0.0
    %1222 = vmatpush1.msra.mxu0 0.0
    %1223 = vmatprep.subr.mxu0 0.0
    %1224 = vmatpush1.msra.mxu0 0.0
    %1225 = vmatprep.subr.mxu0 0.0
    %1226 = vmatpush1.msra.mxu0 0.0
    %1227 = vmatprep.subr.mxu0 0.0
    %1228 = vmatpush1.msra.mxu0 0.0
    %1229 = vmatprep.subr.mxu0 0.0
    %1230 = vmatpush1.msra.mxu0 0.0
    %1231 = vmatprep.subr.mxu0 0.0
    %1232 = vmatpush1.msra.mxu0 0.0
    %1233 = vmatprep.subr.mxu0 0.0
    %1234 = vmatpush1.msra.mxu0 0.0
    %1235 = vmatprep.subr.mxu0 0.0
    %1236 = vmatpush1.msra.mxu0 0.0
    %1237 = vmatprep.subr.mxu0 0.0
    %1238 = vmatpush1.msra.mxu0 0.0
    %1239 = vmatprep.subr.mxu0 0.0
    %1240 = vmatpush1.msra.mxu0 0.0
    %1241 = vmatprep.subr.mxu0 0.0
    %1242 = vmatpush1.msra.mxu0 0.0
    %1243 = vmatprep.subr.mxu0 0.0
    %1244 = vmatpush1.msra.mxu0 0.0
    %1245 = vmatprep.subr.mxu0 0.0
    %v1246 = vand.u32 %v469, 4294901760
    %v1247 = vsub.f32 %v469, %v1246
    %1248 = vmatpush1.msra.mxu0 %v1247
    %1249 = vmatprep.subr.mxu0 0.0
    %1250 = vmatpush2.msra.mxu0 0.0
    %1251 = vmatprep.subr.mxu0 0.0
    %1252 = vmatpush2.msra.mxu0 0.0
    %1253 = vmatprep.subr.mxu0 0.0
    %1254 = vmatpush2.msra.mxu0 0.0
    %1255 = vmatprep.subr.mxu0 0.0
    %1256 = vmatpush2.msra.mxu0 0.0
    %1257 = vmatprep.subr.mxu0 0.0
    %1258 = vmatpush2.msra.mxu0 0.0
    %1259 = vmatprep.subr.mxu0 0.0
    %1260 = vmatpush2.msra.mxu0 0.0
    %1261 = vmatprep.subr.mxu0 0.0
    %1262 = vmatpush2.msra.mxu0 0.0
    %1263 = vmatprep.subr.mxu0 0.0
    %1264 = vmatpush2.msra.mxu0 0.0
    %1265 = vmatprep.subr.mxu0 0.0
    %1266 = vmatpush2.msra.mxu0 0.0
    %1267 = vmatprep.subr.mxu0 0.0
    %1268 = vmatpush2.msra.mxu0 0.0
    %1269 = vmatprep.subr.mxu0 0.0
    %1270 = vmatpush2.msra.mxu0 0.0
    %1271 = vmatprep.subr.mxu0 0.0
    %1272 = vmatpush2.msra.mxu0 0.0
    %1273 = vmatprep.subr.mxu0 0.0
    %1274 = vmatpush2.msra.mxu0 0.0
    %1275 = vmatprep.subr.mxu0 0.0
    %1276 = vmatpush2.msra.mxu0 0.0
    %1277 = vmatprep.subr.mxu0 0.0
    %1278 = vmatpush2.msra.mxu0 0.0
    %1279 = vmatprep.subr.mxu0 0.0
    %1280 = vmatpush2.msra.mxu0 0.0
    %1281 = vmatprep.mubr.f32.mxu0 0.0
    %v1282 = vand.u32 %v472, 4294901760
    %v1283 = vsub.f32 %v472, %v1282
    %1284 = vmatmul.mubr.f32.gmra.mxu0 %v1283
    %v1285 = vpop.f32.mrf.mxu0
    %v1286 = vadd.f32 %v1026, %v1285
    %v1287 = vpop.f32.mrf.mxu0
    %1288 = vmatprep.mubr.f32.mxu0 0.0
    %v1289 = vand.u32 %v475, 4294901760
    %v1290 = vsub.f32 %v475, %v1289
    %1291 = vmatmul.mubr.f32.gmra.mxu0 %v1290
    %v1292 = vpop.f32.mrf.mxu0
    %v1293 = vadd.f32 %v1032, %v1292
    %v1294 = vpop.f32.mrf.mxu0
    %1295 = vmatprep.mubr.f32.mxu0 0.0
    %v1296 = vand.u32 %v478, 4294901760
    %v1297 = vsub.f32 %v478, %v1296
    %1298 = vmatmul.mubr.f32.gmra.mxu0 %v1297
    %v1299 = vpop.f32.mrf.mxu0
    %v1300 = vadd.f32 %v1038, %v1299
    %v1301 = vpop.f32.mrf.mxu0
    %1302 = vmatprep.mubr.f32.mxu0 0.0
    %v1303 = vand.u32 %v481, 4294901760
    %v1304 = vsub.f32 %v481, %v1303
    %1305 = vmatmul.mubr.f32.gmra.mxu0 %v1304
    %v1306 = vpop.f32.mrf.mxu0
    %v1307 = vadd.f32 %v1044, %v1306
    %v1308 = vpop.f32.mrf.mxu0
    %1309 = vmatprep.mubr.f32.mxu0 0.0
    %v1310 = vand.u32 %v484, 4294901760
    %v1311 = vsub.f32 %v484, %v1310
    %1312 = vmatmul.mubr.f32.gmra.mxu0 %v1311
    %v1313 = vpop.f32.mrf.mxu0
    %v1314 = vadd.f32 %v1050, %v1313
    %v1315 = vpop.f32.mrf.mxu0
    %1316 = vmatprep.mubr.f32.mxu0 0.0
    %v1317 = vand.u32 %v487, 4294901760
    %v1318 = vsub.f32 %v487, %v1317
    %1319 = vmatmul.mubr.f32.gmra.mxu0 %v1318
    %v1320 = vpop.f32.mrf.mxu0
    %v1321 = vadd.f32 %v1056, %v1320
    %v1322 = vpop.f32.mrf.mxu0
    %1323 = vmatprep.mubr.f32.mxu0 0.0
    %v1324 = vand.u32 %v490, 4294901760
    %v1325 = vsub.f32 %v490, %v1324
    %1326 = vmatmul.mubr.f32.gmra.mxu0 %v1325
    %v1327 = vpop.f32.mrf.mxu0
    %v1328 = vadd.f32 %v1062, %v1327
    %v1329 = vpop.f32.mrf.mxu0
    %1330 = vmatprep.mubr.f32.mxu0 0.0
    %v1331 = vand.u32 %v493, 4294901760
    %v1332 = vsub.f32 %v493, %v1331
    %1333 = vmatmul.mubr.f32.gmra.mxu0 %v1332
    %v1334 = vpop.f32.mrf.mxu0
    %v1335 = vadd.f32 %v1068, %v1334
    %v1336 = vpop.f32.mrf.mxu0
    %1337 = vmatprep.mubr.f32.mxu0 0.0
    %v1338 = vand.u32 %v496, 4294901760
    %v1339 = vsub.f32 %v496, %v1338
    %1340 = vmatmul.mubr.f32.gmra.mxu0 %v1339
    %v1341 = vpop.f32.mrf.mxu0
    %v1342 = vadd.f32 %v1074, %v1341
    %v1343 = vpop.f32.mrf.mxu0
    %1344 = vmatprep.mubr.f32.mxu0 0.0
    %v1345 = vand.u32 %v499, 4294901760
    %v1346 = vsub.f32 %v499, %v1345
    %1347 = vmatmul.mubr.f32.gmra.mxu0 %v1346
    %v1348 = vpop.f32.mrf.mxu0
    %v1349 = vadd.f32 %v1080, %v1348
    %v1350 = vpop.f32.mrf.mxu0
    %1351 = vmatprep.mubr.f32.mxu0 0.0
    %v1352 = vand.u32 %v502, 4294901760
    %v1353 = vsub.f32 %v502, %v1352
    %1354 = vmatmul.mubr.f32.gmra.mxu0 %v1353
    %v1355 = vpop.f32.mrf.mxu0
    %v1356 = vadd.f32 %v1086, %v1355
    %v1357 = vpop.f32.mrf.mxu0
    %1358 = vmatprep.mubr.f32.mxu0 0.0
    %v1359 = vand.u32 %v505, 4294901760
    %v1360 = vsub.f32 %v505, %v1359
    %1361 = vmatmul.mubr.f32.gmra.mxu0 %v1360
    %v1362 = vpop.f32.mrf.mxu0
    %v1363 = vadd.f32 %v1092, %v1362
    %v1364 = vpop.f32.mrf.mxu0
    %1365 = vmatprep.mubr.f32.mxu0 0.0
    %v1366 = vand.u32 %v508, 4294901760
    %v1367 = vsub.f32 %v508, %v1366
    %1368 = vmatmul.mubr.f32.gmra.mxu0 %v1367
    %v1369 = vpop.f32.mrf.mxu0
    %v1370 = vadd.f32 %v1098, %v1369
    %v1371 = vpop.f32.mrf.mxu0
    %1372 = vmatprep.mubr.f32.mxu0 0.0
    %v1373 = vand.u32 %v511, 4294901760
    %v1374 = vsub.f32 %v511, %v1373
    %1375 = vmatmul.mubr.f32.gmra.mxu0 %v1374
    %v1376 = vpop.f32.mrf.mxu0
    %v1377 = vadd.f32 %v1104, %v1376
    %v1378 = vpop.f32.mrf.mxu0
    %1379 = vmatprep.mubr.f32.mxu0 0.0
    %v1380 = vand.u32 %v514, 4294901760
    %v1381 = vsub.f32 %v514, %v1380
    %1382 = vmatmul.mubr.f32.gmra.mxu0 %v1381
    %v1383 = vpop.f32.mrf.mxu0
    %v1384 = vadd.f32 %v1110, %v1383
    %v1385 = vpop.f32.mrf.mxu0
    %1386 = vmatprep.mubr.f32.mxu0 0.0
    %v1387 = vand.u32 %v517, 4294901760
    %v1388 = vsub.f32 %v517, %v1387
    %1389 = vmatmul.mubr.f32.gmra.mxu0 %v1388
    %v1390 = vpop.f32.mrf.mxu0
    %v1391 = vadd.f32 %v1116, %v1390
    %v1392 = vpop.f32.mrf.mxu0
    %1393 = vmatprep.mubr.f32.mxu0 0.0
    %v1394 = vand.u32 %v520, 4294901760
    %v1395 = vsub.f32 %v520, %v1394
    %1396 = vmatmul.mubr.f32.gmra.mxu0 %v1395
    %v1397 = vpop.f32.mrf.mxu0
    %v1398 = vadd.f32 %v1122, %v1397
    %v1399 = vpop.f32.mrf.mxu0
    %1400 = vmatprep.mubr.f32.mxu0 0.0
    %v1401 = vand.u32 %v523, 4294901760
    %v1402 = vsub.f32 %v523, %v1401
    %1403 = vmatmul.mubr.f32.gmra.mxu0 %v1402
    %v1404 = vpop.f32.mrf.mxu0
    %v1405 = vadd.f32 %v1128, %v1404
    %v1406 = vpop.f32.mrf.mxu0
    %1407 = vmatprep.mubr.f32.mxu0 0.0
    %v1408 = vand.u32 %v526, 4294901760
    %v1409 = vsub.f32 %v526, %v1408
    %1410 = vmatmul.mubr.f32.gmra.mxu0 %v1409
    %v1411 = vpop.f32.mrf.mxu0
    %v1412 = vadd.f32 %v1134, %v1411
    %v1413 = vpop.f32.mrf.mxu0
    %1414 = vmatprep.mubr.f32.mxu0 0.0
    %v1415 = vand.u32 %v529, 4294901760
    %v1416 = vsub.f32 %v529, %v1415
    %1417 = vmatmul.mubr.f32.gmra.mxu0 %v1416
    %v1418 = vpop.f32.mrf.mxu0
    %v1419 = vadd.f32 %v1140, %v1418
    %v1420 = vpop.f32.mrf.mxu0
    %1421 = vmatprep.mubr.f32.mxu0 0.0
    %v1422 = vand.u32 %v532, 4294901760
    %v1423 = vsub.f32 %v532, %v1422
    %1424 = vmatmul.mubr.f32.gmra.mxu0 %v1423
    %v1425 = vpop.f32.mrf.mxu0
    %v1426 = vadd.f32 %v1146, %v1425
    %v1427 = vpop.f32.mrf.mxu0
    %1428 = vmatprep.mubr.f32.mxu0 0.0
    %v1429 = vand.u32 %v535, 4294901760
    %v1430 = vsub.f32 %v535, %v1429
    %1431 = vmatmul.mubr.f32.gmra.mxu0 %v1430
    %v1432 = vpop.f32.mrf.mxu0
    %v1433 = vadd.f32 %v1152, %v1432
    %v1434 = vpop.f32.mrf.mxu0
    %1435 = vmatprep.mubr.f32.mxu0 0.0
    %v1436 = vand.u32 %v538, 4294901760
    %v1437 = vsub.f32 %v538, %v1436
    %1438 = vmatmul.mubr.f32.gmra.mxu0 %v1437
    %v1439 = vpop.f32.mrf.mxu0
    %v1440 = vadd.f32 %v1158, %v1439
    %v1441 = vpop.f32.mrf.mxu0
    %1442 = vmatprep.mubr.f32.mxu0 0.0
    %v1443 = vand.u32 %v541, 4294901760
    %v1444 = vsub.f32 %v541, %v1443
    %1445 = vmatmul.mubr.f32.gmra.mxu0 %v1444
    %v1446 = vpop.f32.mrf.mxu0
    %v1447 = vadd.f32 %v1164, %v1446
    %v1448 = vpop.f32.mrf.mxu0
    %1449 = vmatprep.mubr.f32.mxu0 0.0
    %v1450 = vand.u32 %v544, 4294901760
    %v1451 = vsub.f32 %v544, %v1450
    %1452 = vmatmul.mubr.f32.gmra.mxu0 %v1451
    %v1453 = vpop.f32.mrf.mxu0
    %v1454 = vadd.f32 %v1170, %v1453
    %v1455 = vpop.f32.mrf.mxu0
    %1456 = vmatprep.mubr.f32.mxu0 0.0
    %v1457 = vand.u32 %v547, 4294901760
    %v1458 = vsub.f32 %v547, %v1457
    %1459 = vmatmul.mubr.f32.gmra.mxu0 %v1458
    %v1460 = vpop.f32.mrf.mxu0
    %v1461 = vadd.f32 %v1176, %v1460
    %v1462 = vpop.f32.mrf.mxu0
    %1463 = vmatprep.mubr.f32.mxu0 0.0
    %v1464 = vand.u32 %v550, 4294901760
    %v1465 = vsub.f32 %v550, %v1464
    %1466 = vmatmul.mubr.f32.gmra.mxu0 %v1465
    %v1467 = vpop.f32.mrf.mxu0
    %v1468 = vadd.f32 %v1182, %v1467
    %v1469 = vpop.f32.mrf.mxu0
    %1470 = vmatprep.mubr.f32.mxu0 0.0
    %v1471 = vand.u32 %v553, 4294901760
    %v1472 = vsub.f32 %v553, %v1471
    %1473 = vmatmul.mubr.f32.gmra.mxu0 %v1472
    %v1474 = vpop.f32.mrf.mxu0
    %v1475 = vadd.f32 %v1188, %v1474
    %v1476 = vpop.f32.mrf.mxu0
    %1477 = vmatprep.mubr.f32.mxu0 0.0
    %v1478 = vand.u32 %v556, 4294901760
    %v1479 = vsub.f32 %v556, %v1478
    %1480 = vmatmul.mubr.f32.gmra.mxu0 %v1479
    %v1481 = vpop.f32.mrf.mxu0
    %v1482 = vadd.f32 %v1194, %v1481
    %v1483 = vpop.f32.mrf.mxu0
    %1484 = vmatprep.mubr.f32.mxu0 0.0
    %v1485 = vand.u32 %v559, 4294901760
    %v1486 = vsub.f32 %v559, %v1485
    %1487 = vmatmul.mubr.f32.gmra.mxu0 %v1486
    %v1488 = vpop.f32.mrf.mxu0
    %v1489 = vadd.f32 %v1200, %v1488
    %v1490 = vpop.f32.mrf.mxu0
    %1491 = vmatprep.mubr.f32.mxu0 0.0
    %v1492 = vand.u32 %v562, 4294901760
    %v1493 = vsub.f32 %v562, %v1492
    %1494 = vmatmul.mubr.f32.gmra.mxu0 %v1493
    %v1495 = vpop.f32.mrf.mxu0
    %v1496 = vadd.f32 %v1206, %v1495
    %v1497 = vpop.f32.mrf.mxu0
    %1498 = vmatprep.mubr.f32.mxu0 0.0
    %v1499 = vand.u32 %v565, 4294901760
    %v1500 = vsub.f32 %v565, %v1499
    %1501 = vmatmul.mubr.f32.gmra.mxu0 %v1500
    %v1502 = vpop.f32.mrf.mxu0
    %v1503 = vadd.f32 %v1212, %v1502
    %v1504 = vpop.f32.mrf.mxu0
    %1505 = vdwg.mxu0
    %1506 = vmatprep.subr.mxu0 0.0
    %1507 = vmatpush1.msra.mxu0 0.0
    %1508 = vmatprep.subr.mxu0 0.0
    %1509 = vmatpush1.msra.mxu0 0.0
    %1510 = vmatprep.subr.mxu0 0.0
    %1511 = vmatpush1.msra.mxu0 0.0
    %1512 = vmatprep.subr.mxu0 0.0
    %1513 = vmatpush1.msra.mxu0 0.0
    %1514 = vmatprep.subr.mxu0 0.0
    %1515 = vmatpush1.msra.mxu0 0.0
    %1516 = vmatprep.subr.mxu0 0.0
    %1517 = vmatpush1.msra.mxu0 0.0
    %1518 = vmatprep.subr.mxu0 0.0
    %1519 = vmatpush1.msra.mxu0 0.0
    %1520 = vmatprep.subr.mxu0 0.0
    %1521 = vmatpush1.msra.mxu0 0.0
    %1522 = vmatprep.subr.mxu0 0.0
    %1523 = vmatpush1.msra.mxu0 0.0
    %1524 = vmatprep.subr.mxu0 0.0
    %1525 = vmatpush1.msra.mxu0 0.0
    %1526 = vmatprep.subr.mxu0 0.0
    %1527 = vmatpush1.msra.mxu0 0.0
    %1528 = vmatprep.subr.mxu0 0.0
    %1529 = vmatpush1.msra.mxu0 0.0
    %1530 = vmatprep.subr.mxu0 0.0
    %1531 = vmatpush1.msra.mxu0 0.0
    %1532 = vmatprep.subr.mxu0 0.0
    %1533 = vmatpush1.msra.mxu0 0.0
    %1534 = vmatprep.subr.mxu0 0.0
    %1535 = vmatpush1.msra.mxu0 0.0
    %1536 = vmatprep.subr.mxu0 0.0
    %v1537 = vand.u32 %v469, 4294901760
    %1538 = vmatpush1.msra.mxu0 %v1537
    %1539 = vmatprep.subr.mxu0 0.0
    %1540 = vmatpush2.msra.mxu0 0.0
    %1541 = vmatprep.subr.mxu0 0.0
    %1542 = vmatpush2.msra.mxu0 0.0
    %1543 = vmatprep.subr.mxu0 0.0
    %1544 = vmatpush2.msra.mxu0 0.0
    %1545 = vmatprep.subr.mxu0 0.0
    %1546 = vmatpush2.msra.mxu0 0.0
    %1547 = vmatprep.subr.mxu0 0.0
    %1548 = vmatpush2.msra.mxu0 0.0
    %1549 = vmatprep.subr.mxu0 0.0
    %1550 = vmatpush2.msra.mxu0 0.0
    %1551 = vmatprep.subr.mxu0 0.0
    %1552 = vmatpush2.msra.mxu0 0.0
    %1553 = vmatprep.subr.mxu0 0.0
    %1554 = vmatpush2.msra.mxu0 0.0
    %1555 = vmatprep.subr.mxu0 0.0
    %1556 = vmatpush2.msra.mxu0 0.0
    %1557 = vmatprep.subr.mxu0 0.0
    %1558 = vmatpush2.msra.mxu0 0.0
    %1559 = vmatprep.subr.mxu0 0.0
    %1560 = vmatpush2.msra.mxu0 0.0
    %1561 = vmatprep.subr.mxu0 0.0
    %1562 = vmatpush2.msra.mxu0 0.0
    %1563 = vmatprep.subr.mxu0 0.0
    %1564 = vmatpush2.msra.mxu0 0.0
    %1565 = vmatprep.subr.mxu0 0.0
    %1566 = vmatpush2.msra.mxu0 0.0
    %1567 = vmatprep.subr.mxu0 0.0
    %1568 = vmatpush2.msra.mxu0 0.0
    %1569 = vmatprep.subr.mxu0 0.0
    %1570 = vmatpush2.msra.mxu0 0.0
    %1571 = vmatprep.mubr.f32.mxu0 0.0
    %v1572 = vand.u32 %v472, 4294901760
    %v1573 = vsub.f32 %v472, %v1572
    %v1574 = vand.u32 %v1573, 4294901760
    %1575 = vmatmul.mubr.f32.gmra.mxu0 %v1574
    %v1576 = vpop.f32.mrf.mxu0
    %v1577 = vadd.f32 %v1286, %v1576
    %v1578 = vpop.f32.mrf.mxu0
    %1579 = vmatprep.mubr.f32.mxu0 0.0
    %v1580 = vand.u32 %v475, 4294901760
    %v1581 = vsub.f32 %v475, %v1580
    %v1582 = vand.u32 %v1581, 4294901760
    %1583 = vmatmul.mubr.f32.gmra.mxu0 %v1582
    %v1584 = vpop.f32.mrf.mxu0
    %v1585 = vadd.f32 %v1293, %v1584
    %v1586 = vpop.f32.mrf.mxu0
    %1587 = vmatprep.mubr.f32.mxu0 0.0
    %v1588 = vand.u32 %v478, 4294901760
    %v1589 = vsub.f32 %v478, %v1588
    %v1590 = vand.u32 %v1589, 4294901760
    %1591 = vmatmul.mubr.f32.gmra.mxu0 %v1590
    %v1592 = vpop.f32.mrf.mxu0
    %v1593 = vadd.f32 %v1300, %v1592
    %v1594 = vpop.f32.mrf.mxu0
    %1595 = vmatprep.mubr.f32.mxu0 0.0
    %v1596 = vand.u32 %v481, 4294901760
    %v1597 = vsub.f32 %v481, %v1596
    %v1598 = vand.u32 %v1597, 4294901760
    %1599 = vmatmul.mubr.f32.gmra.mxu0 %v1598
    %v1600 = vpop.f32.mrf.mxu0
    %v1601 = vadd.f32 %v1307, %v1600
    %v1602 = vpop.f32.mrf.mxu0
    %1603 = vmatprep.mubr.f32.mxu0 0.0
    %v1604 = vand.u32 %v484, 4294901760
    %v1605 = vsub.f32 %v484, %v1604
    %v1606 = vand.u32 %v1605, 4294901760
    %1607 = vmatmul.mubr.f32.gmra.mxu0 %v1606
    %v1608 = vpop.f32.mrf.mxu0
    %v1609 = vadd.f32 %v1314, %v1608
    %v1610 = vpop.f32.mrf.mxu0
    %1611 = vmatprep.mubr.f32.mxu0 0.0
    %v1612 = vand.u32 %v487, 4294901760
    %v1613 = vsub.f32 %v487, %v1612
    %v1614 = vand.u32 %v1613, 4294901760
    %1615 = vmatmul.mubr.f32.gmra.mxu0 %v1614
    %v1616 = vpop.f32.mrf.mxu0
    %v1617 = vadd.f32 %v1321, %v1616
    %v1618 = vpop.f32.mrf.mxu0
    %1619 = vmatprep.mubr.f32.mxu0 0.0
    %v1620 = vand.u32 %v490, 4294901760
    %v1621 = vsub.f32 %v490, %v1620
    %v1622 = vand.u32 %v1621, 4294901760
    %1623 = vmatmul.mubr.f32.gmra.mxu0 %v1622
    %v1624 = vpop.f32.mrf.mxu0
    %v1625 = vadd.f32 %v1328, %v1624
    %v1626 = vpop.f32.mrf.mxu0
    %1627 = vmatprep.mubr.f32.mxu0 0.0
    %v1628 = vand.u32 %v493, 4294901760
    %v1629 = vsub.f32 %v493, %v1628
    %v1630 = vand.u32 %v1629, 4294901760
    %1631 = vmatmul.mubr.f32.gmra.mxu0 %v1630
    %v1632 = vpop.f32.mrf.mxu0
    %v1633 = vadd.f32 %v1335, %v1632
    %v1634 = vpop.f32.mrf.mxu0
    %1635 = vmatprep.mubr.f32.mxu0 0.0
    %v1636 = vand.u32 %v496, 4294901760
    %v1637 = vsub.f32 %v496, %v1636
    %v1638 = vand.u32 %v1637, 4294901760
    %1639 = vmatmul.mubr.f32.gmra.mxu0 %v1638
    %v1640 = vpop.f32.mrf.mxu0
    %v1641 = vadd.f32 %v1342, %v1640
    %v1642 = vpop.f32.mrf.mxu0
    %1643 = vmatprep.mubr.f32.mxu0 0.0
    %v1644 = vand.u32 %v499, 4294901760
    %v1645 = vsub.f32 %v499, %v1644
    %v1646 = vand.u32 %v1645, 4294901760
    %1647 = vmatmul.mubr.f32.gmra.mxu0 %v1646
    %v1648 = vpop.f32.mrf.mxu0
    %v1649 = vadd.f32 %v1349, %v1648
    %v1650 = vpop.f32.mrf.mxu0
    %1651 = vmatprep.mubr.f32.mxu0 0.0
    %v1652 = vand.u32 %v502, 4294901760
    %v1653 = vsub.f32 %v502, %v1652
    %v1654 = vand.u32 %v1653, 4294901760
    %1655 = vmatmul.mubr.f32.gmra.mxu0 %v1654
    %v1656 = vpop.f32.mrf.mxu0
    %v1657 = vadd.f32 %v1356, %v1656
    %v1658 = vpop.f32.mrf.mxu0
    %1659 = vmatprep.mubr.f32.mxu0 0.0
    %v1660 = vand.u32 %v505, 4294901760
    %v1661 = vsub.f32 %v505, %v1660
    %v1662 = vand.u32 %v1661, 4294901760
    %1663 = vmatmul.mubr.f32.gmra.mxu0 %v1662
    %v1664 = vpop.f32.mrf.mxu0
    %v1665 = vadd.f32 %v1363, %v1664
    %v1666 = vpop.f32.mrf.mxu0
    %1667 = vmatprep.mubr.f32.mxu0 0.0
    %v1668 = vand.u32 %v508, 4294901760
    %v1669 = vsub.f32 %v508, %v1668
    %v1670 = vand.u32 %v1669, 4294901760
    %1671 = vmatmul.mubr.f32.gmra.mxu0 %v1670
    %v1672 = vpop.f32.mrf.mxu0
    %v1673 = vadd.f32 %v1370, %v1672
    %v1674 = vpop.f32.mrf.mxu0
    %1675 = vmatprep.mubr.f32.mxu0 0.0
    %v1676 = vand.u32 %v511, 4294901760
    %v1677 = vsub.f32 %v511, %v1676
    %v1678 = vand.u32 %v1677, 4294901760
    %1679 = vmatmul.mubr.f32.gmra.mxu0 %v1678
    %v1680 = vpop.f32.mrf.mxu0
    %v1681 = vadd.f32 %v1377, %v1680
    %v1682 = vpop.f32.mrf.mxu0
    %1683 = vmatprep.mubr.f32.mxu0 0.0
    %v1684 = vand.u32 %v514, 4294901760
    %v1685 = vsub.f32 %v514, %v1684
    %v1686 = vand.u32 %v1685, 4294901760
    %1687 = vmatmul.mubr.f32.gmra.mxu0 %v1686
    %v1688 = vpop.f32.mrf.mxu0
    %v1689 = vadd.f32 %v1384, %v1688
    %v1690 = vpop.f32.mrf.mxu0
    %1691 = vmatprep.mubr.f32.mxu0 0.0
    %v1692 = vand.u32 %v517, 4294901760
    %v1693 = vsub.f32 %v517, %v1692
    %v1694 = vand.u32 %v1693, 4294901760
    %1695 = vmatmul.mubr.f32.gmra.mxu0 %v1694
    %v1696 = vpop.f32.mrf.mxu0
    %v1697 = vadd.f32 %v1391, %v1696
    %v1698 = vpop.f32.mrf.mxu0
    %1699 = vmatprep.mubr.f32.mxu0 0.0
    %v1700 = vand.u32 %v520, 4294901760
    %v1701 = vsub.f32 %v520, %v1700
    %v1702 = vand.u32 %v1701, 4294901760
    %1703 = vmatmul.mubr.f32.gmra.mxu0 %v1702
    %v1704 = vpop.f32.mrf.mxu0
    %v1705 = vadd.f32 %v1398, %v1704
    %v1706 = vpop.f32.mrf.mxu0
    %1707 = vmatprep.mubr.f32.mxu0 0.0
    %v1708 = vand.u32 %v523, 4294901760
    %v1709 = vsub.f32 %v523, %v1708
    %v1710 = vand.u32 %v1709, 4294901760
    %1711 = vmatmul.mubr.f32.gmra.mxu0 %v1710
    %v1712 = vpop.f32.mrf.mxu0
    %v1713 = vadd.f32 %v1405, %v1712
    %v1714 = vpop.f32.mrf.mxu0
    %1715 = vmatprep.mubr.f32.mxu0 0.0
    %v1716 = vand.u32 %v526, 4294901760
    %v1717 = vsub.f32 %v526, %v1716
    %v1718 = vand.u32 %v1717, 4294901760
    %1719 = vmatmul.mubr.f32.gmra.mxu0 %v1718
    %v1720 = vpop.f32.mrf.mxu0
    %v1721 = vadd.f32 %v1412, %v1720
    %v1722 = vpop.f32.mrf.mxu0
    %1723 = vmatprep.mubr.f32.mxu0 0.0
    %v1724 = vand.u32 %v529, 4294901760
    %v1725 = vsub.f32 %v529, %v1724
    %v1726 = vand.u32 %v1725, 4294901760
    %1727 = vmatmul.mubr.f32.gmra.mxu0 %v1726
    %v1728 = vpop.f32.mrf.mxu0
    %v1729 = vadd.f32 %v1419, %v1728
    %v1730 = vpop.f32.mrf.mxu0
    %1731 = vmatprep.mubr.f32.mxu0 0.0
    %v1732 = vand.u32 %v532, 4294901760
    %v1733 = vsub.f32 %v532, %v1732
    %v1734 = vand.u32 %v1733, 4294901760
    %1735 = vmatmul.mubr.f32.gmra.mxu0 %v1734
    %v1736 = vpop.f32.mrf.mxu0
    %v1737 = vadd.f32 %v1426, %v1736
    %v1738 = vpop.f32.mrf.mxu0
    %1739 = vmatprep.mubr.f32.mxu0 0.0
    %v1740 = vand.u32 %v535, 4294901760
    %v1741 = vsub.f32 %v535, %v1740
    %v1742 = vand.u32 %v1741, 4294901760
    %1743 = vmatmul.mubr.f32.gmra.mxu0 %v1742
    %v1744 = vpop.f32.mrf.mxu0
    %v1745 = vadd.f32 %v1433, %v1744
    %v1746 = vpop.f32.mrf.mxu0
    %1747 = vmatprep.mubr.f32.mxu0 0.0
    %v1748 = vand.u32 %v538, 4294901760
    %v1749 = vsub.f32 %v538, %v1748
    %v1750 = vand.u32 %v1749, 4294901760
    %1751 = vmatmul.mubr.f32.gmra.mxu0 %v1750
    %v1752 = vpop.f32.mrf.mxu0
    %v1753 = vadd.f32 %v1440, %v1752
    %v1754 = vpop.f32.mrf.mxu0
    %1755 = vmatprep.mubr.f32.mxu0 0.0
    %v1756 = vand.u32 %v541, 4294901760
    %v1757 = vsub.f32 %v541, %v1756
    %v1758 = vand.u32 %v1757, 4294901760
    %1759 = vmatmul.mubr.f32.gmra.mxu0 %v1758
    %v1760 = vpop.f32.mrf.mxu0
    %v1761 = vadd.f32 %v1447, %v1760
    %v1762 = vpop.f32.mrf.mxu0
    %1763 = vmatprep.mubr.f32.mxu0 0.0
    %v1764 = vand.u32 %v544, 4294901760
    %v1765 = vsub.f32 %v544, %v1764
    %v1766 = vand.u32 %v1765, 4294901760
    %1767 = vmatmul.mubr.f32.gmra.mxu0 %v1766
    %v1768 = vpop.f32.mrf.mxu0
    %v1769 = vadd.f32 %v1454, %v1768
    %v1770 = vpop.f32.mrf.mxu0
    %1771 = vmatprep.mubr.f32.mxu0 0.0
    %v1772 = vand.u32 %v547, 4294901760
    %v1773 = vsub.f32 %v547, %v1772
    %v1774 = vand.u32 %v1773, 4294901760
    %1775 = vmatmul.mubr.f32.gmra.mxu0 %v1774
    %v1776 = vpop.f32.mrf.mxu0
    %v1777 = vadd.f32 %v1461, %v1776
    %v1778 = vpop.f32.mrf.mxu0
    %1779 = vmatprep.mubr.f32.mxu0 0.0
    %v1780 = vand.u32 %v550, 4294901760
    %v1781 = vsub.f32 %v550, %v1780
    %v1782 = vand.u32 %v1781, 4294901760
    %1783 = vmatmul.mubr.f32.gmra.mxu0 %v1782
    %v1784 = vpop.f32.mrf.mxu0
    %v1785 = vadd.f32 %v1468, %v1784
    %v1786 = vpop.f32.mrf.mxu0
    %1787 = vmatprep.mubr.f32.mxu0 0.0
    %v1788 = vand.u32 %v553, 4294901760
    %v1789 = vsub.f32 %v553, %v1788
    %v1790 = vand.u32 %v1789, 4294901760
    %1791 = vmatmul.mubr.f32.gmra.mxu0 %v1790
    %v1792 = vpop.f32.mrf.mxu0
    %v1793 = vadd.f32 %v1475, %v1792
    %v1794 = vpop.f32.mrf.mxu0
    %1795 = vmatprep.mubr.f32.mxu0 0.0
    %v1796 = vand.u32 %v556, 4294901760
    %v1797 = vsub.f32 %v556, %v1796
    %v1798 = vand.u32 %v1797, 4294901760
    %1799 = vmatmul.mubr.f32.gmra.mxu0 %v1798
    %v1800 = vpop.f32.mrf.mxu0
    %v1801 = vadd.f32 %v1482, %v1800
    %v1802 = vpop.f32.mrf.mxu0
    %1803 = vmatprep.mubr.f32.mxu0 0.0
    %v1804 = vand.u32 %v559, 4294901760
    %v1805 = vsub.f32 %v559, %v1804
    %v1806 = vand.u32 %v1805, 4294901760
    %1807 = vmatmul.mubr.f32.gmra.mxu0 %v1806
    %v1808 = vpop.f32.mrf.mxu0
    %v1809 = vadd.f32 %v1489, %v1808
    %v1810 = vpop.f32.mrf.mxu0
    %1811 = vmatprep.mubr.f32.mxu0 0.0
    %v1812 = vand.u32 %v562, 4294901760
    %v1813 = vsub.f32 %v562, %v1812
    %v1814 = vand.u32 %v1813, 4294901760
    %1815 = vmatmul.mubr.f32.gmra.mxu0 %v1814
    %v1816 = vpop.f32.mrf.mxu0
    %v1817 = vadd.f32 %v1496, %v1816
    %v1818 = vpop.f32.mrf.mxu0
    %1819 = vmatprep.mubr.f32.mxu0 0.0
    %v1820 = vand.u32 %v565, 4294901760
    %v1821 = vsub.f32 %v565, %v1820
    %v1822 = vand.u32 %v1821, 4294901760
    %1823 = vmatmul.mubr.f32.gmra.mxu0 %v1822
    %v1824 = vpop.f32.mrf.mxu0
    %v1825 = vadd.f32 %v1503, %v1824
    %v1826 = vpop.f32.mrf.mxu0
    %1827 = vdwg.mxu0
    %1828 = vmatprep.subr.mxu0 0.0
    %1829 = vmatpush1.msra.mxu0 0.0
    %1830 = vmatprep.subr.mxu0 0.0
    %1831 = vmatpush1.msra.mxu0 0.0
    %1832 = vmatprep.subr.mxu0 0.0
    %1833 = vmatpush1.msra.mxu0 0.0
    %1834 = vmatprep.subr.mxu0 0.0
    %1835 = vmatpush1.msra.mxu0 0.0
    %1836 = vmatprep.subr.mxu0 0.0
    %1837 = vmatpush1.msra.mxu0 0.0
    %1838 = vmatprep.subr.mxu0 0.0
    %1839 = vmatpush1.msra.mxu0 0.0
    %1840 = vmatprep.subr.mxu0 0.0
    %1841 = vmatpush1.msra.mxu0 0.0
    %1842 = vmatprep.subr.mxu0 0.0
    %1843 = vmatpush1.msra.mxu0 0.0
    %1844 = vmatprep.subr.mxu0 0.0
    %1845 = vmatpush1.msra.mxu0 0.0
    %1846 = vmatprep.subr.mxu0 0.0
    %1847 = vmatpush1.msra.mxu0 0.0
    %1848 = vmatprep.subr.mxu0 0.0
    %1849 = vmatpush1.msra.mxu0 0.0
    %1850 = vmatprep.subr.mxu0 0.0
    %1851 = vmatpush1.msra.mxu0 0.0
    %1852 = vmatprep.subr.mxu0 0.0
    %1853 = vmatpush1.msra.mxu0 0.0
    %1854 = vmatprep.subr.mxu0 0.0
    %1855 = vmatpush1.msra.mxu0 0.0
    %1856 = vmatprep.subr.mxu0 0.0
    %1857 = vmatpush1.msra.mxu0 0.0
    %1858 = vmatprep.subr.mxu0 0.0
    %v1859 = vand.u32 %v469, 4294901760
    %v1860 = vsub.f32 %v469, %v1859
    %v1861 = vand.u32 %v1860, 4294901760
    %1862 = vmatpush1.msra.mxu0 %v1861
    %1863 = vmatprep.subr.mxu0 0.0
    %1864 = vmatpush2.msra.mxu0 0.0
    %1865 = vmatprep.subr.mxu0 0.0
    %1866 = vmatpush2.msra.mxu0 0.0
    %1867 = vmatprep.subr.mxu0 0.0
    %1868 = vmatpush2.msra.mxu0 0.0
    %1869 = vmatprep.subr.mxu0 0.0
    %1870 = vmatpush2.msra.mxu0 0.0
    %1871 = vmatprep.subr.mxu0 0.0
    %1872 = vmatpush2.msra.mxu0 0.0
    %1873 = vmatprep.subr.mxu0 0.0
    %1874 = vmatpush2.msra.mxu0 0.0
    %1875 = vmatprep.subr.mxu0 0.0
    %1876 = vmatpush2.msra.mxu0 0.0
    %1877 = vmatprep.subr.mxu0 0.0
    %1878 = vmatpush2.msra.mxu0 0.0
    %1879 = vmatprep.subr.mxu0 0.0
    %1880 = vmatpush2.msra.mxu0 0.0
    %1881 = vmatprep.subr.mxu0 0.0
    %1882 = vmatpush2.msra.mxu0 0.0
    %1883 = vmatprep.subr.mxu0 0.0
    %1884 = vmatpush2.msra.mxu0 0.0
    %1885 = vmatprep.subr.mxu0 0.0
    %1886 = vmatpush2.msra.mxu0 0.0
    %1887 = vmatprep.subr.mxu0 0.0
    %1888 = vmatpush2.msra.mxu0 0.0
    %1889 = vmatprep.subr.mxu0 0.0
    %1890 = vmatpush2.msra.mxu0 0.0
    %1891 = vmatprep.subr.mxu0 0.0
    %1892 = vmatpush2.msra.mxu0 0.0
    %1893 = vmatprep.subr.mxu0 0.0
    %1894 = vmatpush2.msra.mxu0 0.0
    %1895 = vmatprep.mubr.f32.mxu0 0.0
    %v1896 = vand.u32 %v472, 4294901760
    %1897 = vmatmul.mubr.f32.gmra.mxu0 %v1896
    %v1898 = vpop.f32.mrf.mxu0
    %v1899 = vadd.f32 %v1577, %v1898
    %v1900 = vpop.f32.mrf.mxu0
    %1901 = vmatprep.mubr.f32.mxu0 0.0
    %v1902 = vand.u32 %v475, 4294901760
    %1903 = vmatmul.mubr.f32.gmra.mxu0 %v1902
    %v1904 = vpop.f32.mrf.mxu0
    %v1905 = vadd.f32 %v1585, %v1904
    %v1906 = vpop.f32.mrf.mxu0
    %1907 = vmatprep.mubr.f32.mxu0 0.0
    %v1908 = vand.u32 %v478, 4294901760
    %1909 = vmatmul.mubr.f32.gmra.mxu0 %v1908
    %v1910 = vpop.f32.mrf.mxu0
    %v1911 = vadd.f32 %v1593, %v1910
    %v1912 = vpop.f32.mrf.mxu0
    %1913 = vmatprep.mubr.f32.mxu0 0.0
    %v1914 = vand.u32 %v481, 4294901760
    %1915 = vmatmul.mubr.f32.gmra.mxu0 %v1914
    %v1916 = vpop.f32.mrf.mxu0
    %v1917 = vadd.f32 %v1601, %v1916
    %v1918 = vpop.f32.mrf.mxu0
    %1919 = vmatprep.mubr.f32.mxu0 0.0
    %v1920 = vand.u32 %v484, 4294901760
    %1921 = vmatmul.mubr.f32.gmra.mxu0 %v1920
    %v1922 = vpop.f32.mrf.mxu0
    %v1923 = vadd.f32 %v1609, %v1922
    %v1924 = vpop.f32.mrf.mxu0
    %1925 = vmatprep.mubr.f32.mxu0 0.0
    %v1926 = vand.u32 %v487, 4294901760
    %1927 = vmatmul.mubr.f32.gmra.mxu0 %v1926
    %v1928 = vpop.f32.mrf.mxu0
    %v1929 = vadd.f32 %v1617, %v1928
    %v1930 = vpop.f32.mrf.mxu0
    %1931 = vmatprep.mubr.f32.mxu0 0.0
    %v1932 = vand.u32 %v490, 4294901760
    %1933 = vmatmul.mubr.f32.gmra.mxu0 %v1932
    %v1934 = vpop.f32.mrf.mxu0
    %v1935 = vadd.f32 %v1625, %v1934
    %v1936 = vpop.f32.mrf.mxu0
    %1937 = vmatprep.mubr.f32.mxu0 0.0
    %v1938 = vand.u32 %v493, 4294901760
    %1939 = vmatmul.mubr.f32.gmra.mxu0 %v1938
    %v1940 = vpop.f32.mrf.mxu0
    %v1941 = vadd.f32 %v1633, %v1940
    %v1942 = vpop.f32.mrf.mxu0
    %1943 = vmatprep.mubr.f32.mxu0 0.0
    %v1944 = vand.u32 %v496, 4294901760
    %1945 = vmatmul.mubr.f32.gmra.mxu0 %v1944
    %v1946 = vpop.f32.mrf.mxu0
    %v1947 = vadd.f32 %v1641, %v1946
    %v1948 = vpop.f32.mrf.mxu0
    %1949 = vmatprep.mubr.f32.mxu0 0.0
    %v1950 = vand.u32 %v499, 4294901760
    %1951 = vmatmul.mubr.f32.gmra.mxu0 %v1950
    %v1952 = vpop.f32.mrf.mxu0
    %v1953 = vadd.f32 %v1649, %v1952
    %v1954 = vpop.f32.mrf.mxu0
    %1955 = vmatprep.mubr.f32.mxu0 0.0
    %v1956 = vand.u32 %v502, 4294901760
    %1957 = vmatmul.mubr.f32.gmra.mxu0 %v1956
    %v1958 = vpop.f32.mrf.mxu0
    %v1959 = vadd.f32 %v1657, %v1958
    %v1960 = vpop.f32.mrf.mxu0
    %1961 = vmatprep.mubr.f32.mxu0 0.0
    %v1962 = vand.u32 %v505, 4294901760
    %1963 = vmatmul.mubr.f32.gmra.mxu0 %v1962
    %v1964 = vpop.f32.mrf.mxu0
    %v1965 = vadd.f32 %v1665, %v1964
    %v1966 = vpop.f32.mrf.mxu0
    %1967 = vmatprep.mubr.f32.mxu0 0.0
    %v1968 = vand.u32 %v508, 4294901760
    %1969 = vmatmul.mubr.f32.gmra.mxu0 %v1968
    %v1970 = vpop.f32.mrf.mxu0
    %v1971 = vadd.f32 %v1673, %v1970
    %v1972 = vpop.f32.mrf.mxu0
    %1973 = vmatprep.mubr.f32.mxu0 0.0
    %v1974 = vand.u32 %v511, 4294901760
    %1975 = vmatmul.mubr.f32.gmra.mxu0 %v1974
    %v1976 = vpop.f32.mrf.mxu0
    %v1977 = vadd.f32 %v1681, %v1976
    %v1978 = vpop.f32.mrf.mxu0
    %1979 = vmatprep.mubr.f32.mxu0 0.0
    %v1980 = vand.u32 %v514, 4294901760
    %1981 = vmatmul.mubr.f32.gmra.mxu0 %v1980
    %v1982 = vpop.f32.mrf.mxu0
    %v1983 = vadd.f32 %v1689, %v1982
    %v1984 = vpop.f32.mrf.mxu0
    %1985 = vmatprep.mubr.f32.mxu0 0.0
    %v1986 = vand.u32 %v517, 4294901760
    %1987 = vmatmul.mubr.f32.gmra.mxu0 %v1986
    %v1988 = vpop.f32.mrf.mxu0
    %v1989 = vadd.f32 %v1697, %v1988
    %v1990 = vpop.f32.mrf.mxu0
    %1991 = vmatprep.mubr.f32.mxu0 0.0
    %v1992 = vand.u32 %v520, 4294901760
    %1993 = vmatmul.mubr.f32.gmra.mxu0 %v1992
    %v1994 = vpop.f32.mrf.mxu0
    %v1995 = vadd.f32 %v1705, %v1994
    %v1996 = vpop.f32.mrf.mxu0
    %1997 = vmatprep.mubr.f32.mxu0 0.0
    %v1998 = vand.u32 %v523, 4294901760
    %1999 = vmatmul.mubr.f32.gmra.mxu0 %v1998
    %v2000 = vpop.f32.mrf.mxu0
    %v2001 = vadd.f32 %v1713, %v2000
    %v2002 = vpop.f32.mrf.mxu0
    %2003 = vmatprep.mubr.f32.mxu0 0.0
    %v2004 = vand.u32 %v526, 4294901760
    %2005 = vmatmul.mubr.f32.gmra.mxu0 %v2004
    %v2006 = vpop.f32.mrf.mxu0
    %v2007 = vadd.f32 %v1721, %v2006
    %v2008 = vpop.f32.mrf.mxu0
    %2009 = vmatprep.mubr.f32.mxu0 0.0
    %v2010 = vand.u32 %v529, 4294901760
    %2011 = vmatmul.mubr.f32.gmra.mxu0 %v2010
    %v2012 = vpop.f32.mrf.mxu0
    %v2013 = vadd.f32 %v1729, %v2012
    %v2014 = vpop.f32.mrf.mxu0
    %2015 = vmatprep.mubr.f32.mxu0 0.0
    %v2016 = vand.u32 %v532, 4294901760
    %2017 = vmatmul.mubr.f32.gmra.mxu0 %v2016
    %v2018 = vpop.f32.mrf.mxu0
    %v2019 = vadd.f32 %v1737, %v2018
    %v2020 = vpop.f32.mrf.mxu0
    %2021 = vmatprep.mubr.f32.mxu0 0.0
    %v2022 = vand.u32 %v535, 4294901760
    %2023 = vmatmul.mubr.f32.gmra.mxu0 %v2022
    %v2024 = vpop.f32.mrf.mxu0
    %v2025 = vadd.f32 %v1745, %v2024
    %v2026 = vpop.f32.mrf.mxu0
    %2027 = vmatprep.mubr.f32.mxu0 0.0
    %v2028 = vand.u32 %v538, 4294901760
    %2029 = vmatmul.mubr.f32.gmra.mxu0 %v2028
    %v2030 = vpop.f32.mrf.mxu0
    %v2031 = vadd.f32 %v1753, %v2030
    %v2032 = vpop.f32.mrf.mxu0
    %2033 = vmatprep.mubr.f32.mxu0 0.0
    %v2034 = vand.u32 %v541, 4294901760
    %2035 = vmatmul.mubr.f32.gmra.mxu0 %v2034
    %v2036 = vpop.f32.mrf.mxu0
    %v2037 = vadd.f32 %v1761, %v2036
    %v2038 = vpop.f32.mrf.mxu0
    %2039 = vmatprep.mubr.f32.mxu0 0.0
    %v2040 = vand.u32 %v544, 4294901760
    %2041 = vmatmul.mubr.f32.gmra.mxu0 %v2040
    %v2042 = vpop.f32.mrf.mxu0
    %v2043 = vadd.f32 %v1769, %v2042
    %v2044 = vpop.f32.mrf.mxu0
    %2045 = vmatprep.mubr.f32.mxu0 0.0
    %v2046 = vand.u32 %v547, 4294901760
    %2047 = vmatmul.mubr.f32.gmra.mxu0 %v2046
    %v2048 = vpop.f32.mrf.mxu0
    %v2049 = vadd.f32 %v1777, %v2048
    %v2050 = vpop.f32.mrf.mxu0
    %2051 = vmatprep.mubr.f32.mxu0 0.0
    %v2052 = vand.u32 %v550, 4294901760
    %2053 = vmatmul.mubr.f32.gmra.mxu0 %v2052
    %v2054 = vpop.f32.mrf.mxu0
    %v2055 = vadd.f32 %v1785, %v2054
    %v2056 = vpop.f32.mrf.mxu0
    %2057 = vmatprep.mubr.f32.mxu0 0.0
    %v2058 = vand.u32 %v553, 4294901760
    %2059 = vmatmul.mubr.f32.gmra.mxu0 %v2058
    %v2060 = vpop.f32.mrf.mxu0
    %v2061 = vadd.f32 %v1793, %v2060
    %v2062 = vpop.f32.mrf.mxu0
    %2063 = vmatprep.mubr.f32.mxu0 0.0
    %v2064 = vand.u32 %v556, 4294901760
    %2065 = vmatmul.mubr.f32.gmra.mxu0 %v2064
    %v2066 = vpop.f32.mrf.mxu0
    %v2067 = vadd.f32 %v1801, %v2066
    %v2068 = vpop.f32.mrf.mxu0
    %2069 = vmatprep.mubr.f32.mxu0 0.0
    %v2070 = vand.u32 %v559, 4294901760
    %2071 = vmatmul.mubr.f32.gmra.mxu0 %v2070
    %v2072 = vpop.f32.mrf.mxu0
    %v2073 = vadd.f32 %v1809, %v2072
    %v2074 = vpop.f32.mrf.mxu0
    %2075 = vmatprep.mubr.f32.mxu0 0.0
    %v2076 = vand.u32 %v562, 4294901760
    %2077 = vmatmul.mubr.f32.gmra.mxu0 %v2076
    %v2078 = vpop.f32.mrf.mxu0
    %v2079 = vadd.f32 %v1817, %v2078
    %v2080 = vpop.f32.mrf.mxu0
    %2081 = vmatprep.mubr.f32.mxu0 0.0
    %v2082 = vand.u32 %v565, 4294901760
    %2083 = vmatmul.mubr.f32.gmra.mxu0 %v2082
    %v2084 = vpop.f32.mrf.mxu0
    %v2085 = vadd.f32 %v1825, %v2084
    %v2086 = vpop.f32.mrf.mxu0
    %2087 = vdwg.mxu0
    %2088 = vmatprep.subr.mxu0 0.0
    %2089 = vmatpush1.msra.mxu0 0.0
    %2090 = vmatprep.subr.mxu0 0.0
    %2091 = vmatpush1.msra.mxu0 0.0
    %2092 = vmatprep.subr.mxu0 0.0
    %2093 = vmatpush1.msra.mxu0 0.0
    %2094 = vmatprep.subr.mxu0 0.0
    %2095 = vmatpush1.msra.mxu0 0.0
    %2096 = vmatprep.subr.mxu0 0.0
    %2097 = vmatpush1.msra.mxu0 0.0
    %2098 = vmatprep.subr.mxu0 0.0
    %2099 = vmatpush1.msra.mxu0 0.0
    %2100 = vmatprep.subr.mxu0 0.0
    %2101 = vmatpush1.msra.mxu0 0.0
    %2102 = vmatprep.subr.mxu0 0.0
    %2103 = vmatpush1.msra.mxu0 0.0
    %2104 = vmatprep.subr.mxu0 0.0
    %2105 = vmatpush1.msra.mxu0 0.0
    %2106 = vmatprep.subr.mxu0 0.0
    %2107 = vmatpush1.msra.mxu0 0.0
    %2108 = vmatprep.subr.mxu0 0.0
    %2109 = vmatpush1.msra.mxu0 0.0
    %2110 = vmatprep.subr.mxu0 0.0
    %2111 = vmatpush1.msra.mxu0 0.0
    %2112 = vmatprep.subr.mxu0 0.0
    %2113 = vmatpush1.msra.mxu0 0.0
    %2114 = vmatprep.subr.mxu0 0.0
    %2115 = vmatpush1.msra.mxu0 0.0
    %2116 = vmatprep.subr.mxu0 0.0
    %2117 = vmatpush1.msra.mxu0 0.0
    %2118 = vmatprep.subr.mxu0 0.0
    %v2119 = vand.u32 %v469, 4294901760
    %2120 = vmatpush1.msra.mxu0 %v2119
    %2121 = vmatprep.subr.mxu0 0.0
    %2122 = vmatpush2.msra.mxu0 0.0
    %2123 = vmatprep.subr.mxu0 0.0
    %2124 = vmatpush2.msra.mxu0 0.0
    %2125 = vmatprep.subr.mxu0 0.0
    %2126 = vmatpush2.msra.mxu0 0.0
    %2127 = vmatprep.subr.mxu0 0.0
    %2128 = vmatpush2.msra.mxu0 0.0
    %2129 = vmatprep.subr.mxu0 0.0
    %2130 = vmatpush2.msra.mxu0 0.0
    %2131 = vmatprep.subr.mxu0 0.0
    %2132 = vmatpush2.msra.mxu0 0.0
    %2133 = vmatprep.subr.mxu0 0.0
    %2134 = vmatpush2.msra.mxu0 0.0
    %2135 = vmatprep.subr.mxu0 0.0
    %2136 = vmatpush2.msra.mxu0 0.0
    %2137 = vmatprep.subr.mxu0 0.0
    %2138 = vmatpush2.msra.mxu0 0.0
    %2139 = vmatprep.subr.mxu0 0.0
    %2140 = vmatpush2.msra.mxu0 0.0
    %2141 = vmatprep.subr.mxu0 0.0
    %2142 = vmatpush2.msra.mxu0 0.0
    %2143 = vmatprep.subr.mxu0 0.0
    %2144 = vmatpush2.msra.mxu0 0.0
    %2145 = vmatprep.subr.mxu0 0.0
    %2146 = vmatpush2.msra.mxu0 0.0
    %2147 = vmatprep.subr.mxu0 0.0
    %2148 = vmatpush2.msra.mxu0 0.0
    %2149 = vmatprep.subr.mxu0 0.0
    %2150 = vmatpush2.msra.mxu0 0.0
    %2151 = vmatprep.subr.mxu0 0.0
    %2152 = vmatpush2.msra.mxu0 0.0
    %2153 = vmatprep.mubr.f32.mxu0 0.0
    %v2154 = vand.u32 %v472, 4294901760
    %2155 = vmatmul.mubr.f32.gmra.mxu0 %v2154
    %v2156 = vpop.f32.mrf.mxu0
    %v2157 = vadd.f32 %v1899, %v2156
    %v2158 = vpop.f32.mrf.mxu0
    %2159 = vmatprep.mubr.f32.mxu0 0.0
    %v2160 = vand.u32 %v475, 4294901760
    %2161 = vmatmul.mubr.f32.gmra.mxu0 %v2160
    %v2162 = vpop.f32.mrf.mxu0
    %v2163 = vadd.f32 %v1905, %v2162
    %v2164 = vpop.f32.mrf.mxu0
    %2165 = vmatprep.mubr.f32.mxu0 0.0
    %v2166 = vand.u32 %v478, 4294901760
    %2167 = vmatmul.mubr.f32.gmra.mxu0 %v2166
    %v2168 = vpop.f32.mrf.mxu0
    %v2169 = vadd.f32 %v1911, %v2168
    %v2170 = vpop.f32.mrf.mxu0
    %2171 = vmatprep.mubr.f32.mxu0 0.0
    %v2172 = vand.u32 %v481, 4294901760
    %2173 = vmatmul.mubr.f32.gmra.mxu0 %v2172
    %v2174 = vpop.f32.mrf.mxu0
    %v2175 = vadd.f32 %v1917, %v2174
    %v2176 = vpop.f32.mrf.mxu0
    %2177 = vmatprep.mubr.f32.mxu0 0.0
    %v2178 = vand.u32 %v484, 4294901760
    %2179 = vmatmul.mubr.f32.gmra.mxu0 %v2178
    %v2180 = vpop.f32.mrf.mxu0
    %v2181 = vadd.f32 %v1923, %v2180
    %v2182 = vpop.f32.mrf.mxu0
    %2183 = vmatprep.mubr.f32.mxu0 0.0
    %v2184 = vand.u32 %v487, 4294901760
    %2185 = vmatmul.mubr.f32.gmra.mxu0 %v2184
    %v2186 = vpop.f32.mrf.mxu0
    %v2187 = vadd.f32 %v1929, %v2186
    %v2188 = vpop.f32.mrf.mxu0
    %2189 = vmatprep.mubr.f32.mxu0 0.0
    %v2190 = vand.u32 %v490, 4294901760
    %2191 = vmatmul.mubr.f32.gmra.mxu0 %v2190
    %v2192 = vpop.f32.mrf.mxu0
    %v2193 = vadd.f32 %v1935, %v2192
    %v2194 = vpop.f32.mrf.mxu0
    %2195 = vmatprep.mubr.f32.mxu0 0.0
    %v2196 = vand.u32 %v493, 4294901760
    %2197 = vmatmul.mubr.f32.gmra.mxu0 %v2196
    %v2198 = vpop.f32.mrf.mxu0
    %v2199 = vadd.f32 %v1941, %v2198
    %v2200 = vpop.f32.mrf.mxu0
    %2201 = vmatprep.mubr.f32.mxu0 0.0
    %v2202 = vand.u32 %v496, 4294901760
    %2203 = vmatmul.mubr.f32.gmra.mxu0 %v2202
    %v2204 = vpop.f32.mrf.mxu0
    %v2205 = vadd.f32 %v1947, %v2204
    %v2206 = vpop.f32.mrf.mxu0
    %2207 = vmatprep.mubr.f32.mxu0 0.0
    %v2208 = vand.u32 %v499, 4294901760
    %2209 = vmatmul.mubr.f32.gmra.mxu0 %v2208
    %v2210 = vpop.f32.mrf.mxu0
    %v2211 = vadd.f32 %v1953, %v2210
    %v2212 = vpop.f32.mrf.mxu0
    %2213 = vmatprep.mubr.f32.mxu0 0.0
    %v2214 = vand.u32 %v502, 4294901760
    %2215 = vmatmul.mubr.f32.gmra.mxu0 %v2214
    %v2216 = vpop.f32.mrf.mxu0
    %v2217 = vadd.f32 %v1959, %v2216
    %v2218 = vpop.f32.mrf.mxu0
    %2219 = vmatprep.mubr.f32.mxu0 0.0
    %v2220 = vand.u32 %v505, 4294901760
    %2221 = vmatmul.mubr.f32.gmra.mxu0 %v2220
    %v2222 = vpop.f32.mrf.mxu0
    %v2223 = vadd.f32 %v1965, %v2222
    %v2224 = vpop.f32.mrf.mxu0
    %2225 = vmatprep.mubr.f32.mxu0 0.0
    %v2226 = vand.u32 %v508, 4294901760
    %2227 = vmatmul.mubr.f32.gmra.mxu0 %v2226
    %v2228 = vpop.f32.mrf.mxu0
    %v2229 = vadd.f32 %v1971, %v2228
    %v2230 = vpop.f32.mrf.mxu0
    %2231 = vmatprep.mubr.f32.mxu0 0.0
    %v2232 = vand.u32 %v511, 4294901760
    %2233 = vmatmul.mubr.f32.gmra.mxu0 %v2232
    %v2234 = vpop.f32.mrf.mxu0
    %v2235 = vadd.f32 %v1977, %v2234
    %v2236 = vpop.f32.mrf.mxu0
    %2237 = vmatprep.mubr.f32.mxu0 0.0
    %v2238 = vand.u32 %v514, 4294901760
    %2239 = vmatmul.mubr.f32.gmra.mxu0 %v2238
    %v2240 = vpop.f32.mrf.mxu0
    %v2241 = vadd.f32 %v1983, %v2240
    %v2242 = vpop.f32.mrf.mxu0
    %2243 = vmatprep.mubr.f32.mxu0 0.0
    %v2244 = vand.u32 %v517, 4294901760
    %2245 = vmatmul.mubr.f32.gmra.mxu0 %v2244
    %v2246 = vpop.f32.mrf.mxu0
    %v2247 = vadd.f32 %v1989, %v2246
    %v2248 = vpop.f32.mrf.mxu0
    %2249 = vmatprep.mubr.f32.mxu0 0.0
    %v2250 = vand.u32 %v520, 4294901760
    %2251 = vmatmul.mubr.f32.gmra.mxu0 %v2250
    %v2252 = vpop.f32.mrf.mxu0
    %v2253 = vadd.f32 %v1995, %v2252
    %v2254 = vpop.f32.mrf.mxu0
    %2255 = vmatprep.mubr.f32.mxu0 0.0
    %v2256 = vand.u32 %v523, 4294901760
    %2257 = vmatmul.mubr.f32.gmra.mxu0 %v2256
    %v2258 = vpop.f32.mrf.mxu0
    %v2259 = vadd.f32 %v2001, %v2258
    %v2260 = vpop.f32.mrf.mxu0
    %2261 = vmatprep.mubr.f32.mxu0 0.0
    %v2262 = vand.u32 %v526, 4294901760
    %2263 = vmatmul.mubr.f32.gmra.mxu0 %v2262
    %v2264 = vpop.f32.mrf.mxu0
    %v2265 = vadd.f32 %v2007, %v2264
    %v2266 = vpop.f32.mrf.mxu0
    %2267 = vmatprep.mubr.f32.mxu0 0.0
    %v2268 = vand.u32 %v529, 4294901760
    %2269 = vmatmul.mubr.f32.gmra.mxu0 %v2268
    %v2270 = vpop.f32.mrf.mxu0
    %v2271 = vadd.f32 %v2013, %v2270
    %v2272 = vpop.f32.mrf.mxu0
    %2273 = vmatprep.mubr.f32.mxu0 0.0
    %v2274 = vand.u32 %v532, 4294901760
    %2275 = vmatmul.mubr.f32.gmra.mxu0 %v2274
    %v2276 = vpop.f32.mrf.mxu0
    %v2277 = vadd.f32 %v2019, %v2276
    %v2278 = vpop.f32.mrf.mxu0
    %2279 = vmatprep.mubr.f32.mxu0 0.0
    %v2280 = vand.u32 %v535, 4294901760
    %2281 = vmatmul.mubr.f32.gmra.mxu0 %v2280
    %v2282 = vpop.f32.mrf.mxu0
    %v2283 = vadd.f32 %v2025, %v2282
    %v2284 = vpop.f32.mrf.mxu0
    %2285 = vmatprep.mubr.f32.mxu0 0.0
    %v2286 = vand.u32 %v538, 4294901760
    %2287 = vmatmul.mubr.f32.gmra.mxu0 %v2286
    %v2288 = vpop.f32.mrf.mxu0
    %v2289 = vadd.f32 %v2031, %v2288
    %v2290 = vpop.f32.mrf.mxu0
    %2291 = vmatprep.mubr.f32.mxu0 0.0
    %v2292 = vand.u32 %v541, 4294901760
    %2293 = vmatmul.mubr.f32.gmra.mxu0 %v2292
    %v2294 = vpop.f32.mrf.mxu0
    %v2295 = vadd.f32 %v2037, %v2294
    %v2296 = vpop.f32.mrf.mxu0
    %2297 = vmatprep.mubr.f32.mxu0 0.0
    %v2298 = vand.u32 %v544, 4294901760
    %2299 = vmatmul.mubr.f32.gmra.mxu0 %v2298
    %v2300 = vpop.f32.mrf.mxu0
    %v2301 = vadd.f32 %v2043, %v2300
    %v2302 = vpop.f32.mrf.mxu0
    %2303 = vmatprep.mubr.f32.mxu0 0.0
    %v2304 = vand.u32 %v547, 4294901760
    %2305 = vmatmul.mubr.f32.gmra.mxu0 %v2304
    %v2306 = vpop.f32.mrf.mxu0
    %v2307 = vadd.f32 %v2049, %v2306
    %v2308 = vpop.f32.mrf.mxu0
    %2309 = vmatprep.mubr.f32.mxu0 0.0
    %v2310 = vand.u32 %v550, 4294901760
    %2311 = vmatmul.mubr.f32.gmra.mxu0 %v2310
    %v2312 = vpop.f32.mrf.mxu0
    %v2313 = vadd.f32 %v2055, %v2312
    %v2314 = vpop.f32.mrf.mxu0
    %2315 = vmatprep.mubr.f32.mxu0 0.0
    %v2316 = vand.u32 %v553, 4294901760
    %2317 = vmatmul.mubr.f32.gmra.mxu0 %v2316
    %v2318 = vpop.f32.mrf.mxu0
    %v2319 = vadd.f32 %v2061, %v2318
    %v2320 = vpop.f32.mrf.mxu0
    %2321 = vmatprep.mubr.f32.mxu0 0.0
    %v2322 = vand.u32 %v556, 4294901760
    %2323 = vmatmul.mubr.f32.gmra.mxu0 %v2322
    %v2324 = vpop.f32.mrf.mxu0
    %v2325 = vadd.f32 %v2067, %v2324
    %v2326 = vpop.f32.mrf.mxu0
    %2327 = vmatprep.mubr.f32.mxu0 0.0
    %v2328 = vand.u32 %v559, 4294901760
    %2329 = vmatmul.mubr.f32.gmra.mxu0 %v2328
    %v2330 = vpop.f32.mrf.mxu0
    %v2331 = vadd.f32 %v2073, %v2330
    %v2332 = vpop.f32.mrf.mxu0
    %2333 = vmatprep.mubr.f32.mxu0 0.0
    %v2334 = vand.u32 %v562, 4294901760
    %2335 = vmatmul.mubr.f32.gmra.mxu0 %v2334
    %v2336 = vpop.f32.mrf.mxu0
    %v2337 = vadd.f32 %v2079, %v2336
    %v2338 = vpop.f32.mrf.mxu0
    %2339 = vmatprep.mubr.f32.mxu0 0.0
    %v2340 = vand.u32 %v565, 4294901760
    %2341 = vmatmul.mubr.f32.gmra.mxu0 %v2340
    %v2342 = vpop.f32.mrf.mxu0
    %v2343 = vadd.f32 %v2085, %v2342
    %v2344 = vpop.f32.mrf.mxu0
    %2345 = vdwg.mxu0
    %vm2346 = vcmask 261120
    %v2348 = vsel %vm2346, %v209, 0
    %v2351 = vsel %vm2346, %v210, 0
    %v2354 = vsel %vm2346, %v211, 0
    %v2357 = vsel %vm2346, %v212, 0
    %v2360 = vsel %vm2346, %v213, 0
    %v2363 = vsel %vm2346, %v214, 0
    %v2366 = vsel %vm2346, %v215, 0
    %v2369 = vsel %vm2346, %v216, 0
    %v2372 = vsel %vm2346, %v217, 0
    %v2375 = vsel %vm2346, %v218, 0
    %v2378 = vsel %vm2346, %v219, 0
    %v2381 = vsel %vm2346, %v220, 0
    %v2384 = vsel %vm2346, %v221, 0
    %v2387 = vsel %vm2346, %v222, 0
    %v2390 = vsel %vm2346, %v223, 0
    %v2393 = vsel %vm2346, %v224, 0
    %v2396 = vsel %vm2346, %v225, 0
    %v2399 = vsel %vm2346, %v226, 0
    %v2402 = vsel %vm2346, %v227, 0
    %v2405 = vsel %vm2346, %v228, 0
    %v2408 = vsel %vm2346, %v229, 0
    %v2411 = vsel %vm2346, %v230, 0
    %v2414 = vsel %vm2346, %v231, 0
    %v2417 = vsel %vm2346, %v232, 0
    %v2420 = vsel %vm2346, %v233, 0
    %v2423 = vsel %vm2346, %v234, 0
    %v2426 = vsel %vm2346, %v235, 0
    %v2429 = vsel %vm2346, %v236, 0
    %v2432 = vsel %vm2346, %v237, 0
    %v2435 = vsel %vm2346, %v238, 0
    %v2438 = vsel %vm2346, %v239, 0
    %v2441 = vsel %vm2346, %v240, 0
    %2443 = vmatprep.subr.mxu0 0.0
    %2444 = vmatpush1.msra.mxu0 0.0
    %2445 = vmatprep.subr.mxu0 0.0
    %2446 = vmatpush1.msra.mxu0 0.0
    %2447 = vmatprep.subr.mxu0 0.0
    %2448 = vmatpush1.msra.mxu0 0.0
    %2449 = vmatprep.subr.mxu0 0.0
    %2450 = vmatpush1.msra.mxu0 0.0
    %2451 = vmatprep.subr.mxu0 0.0
    %2452 = vmatpush1.msra.mxu0 0.0
    %2453 = vmatprep.subr.mxu0 0.0
    %2454 = vmatpush1.msra.mxu0 0.0
    %2455 = vmatprep.subr.mxu0 0.0
    %2456 = vmatpush1.msra.mxu0 0.0
    %2457 = vmatprep.subr.mxu0 0.0
    %2458 = vmatpush1.msra.mxu0 0.0
    %2459 = vmatprep.subr.mxu0 0.0
    %2460 = vmatpush1.msra.mxu0 0.0
    %2461 = vmatprep.subr.mxu0 0.0
    %2462 = vmatpush1.msra.mxu0 0.0
    %2463 = vmatprep.subr.mxu0 0.0
    %2464 = vmatpush1.msra.mxu0 0.0
    %2465 = vmatprep.subr.mxu0 0.0
    %2466 = vmatpush1.msra.mxu0 0.0
    %2467 = vmatprep.subr.mxu0 0.0
    %v2468 = vand.u32 %v468, 4294901760
    %2469 = vmatpush1.msra.mxu0 %v2468
    %2470 = vmatprep.subr.mxu0 0.0
    %v2471 = vand.u32 %v467, 4294901760
    %2472 = vmatpush1.msra.mxu0 %v2471
    %2473 = vmatprep.subr.mxu0 0.0
    %v2474 = vand.u32 %v466, 4294901760
    %2475 = vmatpush1.msra.mxu0 %v2474
    %2476 = vmatprep.subr.mxu0 0.0
    %v2477 = vand.u32 %v465, 4294901760
    %2478 = vmatpush1.msra.mxu0 %v2477
    %2479 = vmatprep.subr.mxu0 0.0
    %2480 = vmatpush2.msra.mxu0 0.0
    %2481 = vmatprep.subr.mxu0 0.0
    %2482 = vmatpush2.msra.mxu0 0.0
    %2483 = vmatprep.subr.mxu0 0.0
    %2484 = vmatpush2.msra.mxu0 0.0
    %2485 = vmatprep.subr.mxu0 0.0
    %2486 = vmatpush2.msra.mxu0 0.0
    %2487 = vmatprep.subr.mxu0 0.0
    %2488 = vmatpush2.msra.mxu0 0.0
    %2489 = vmatprep.subr.mxu0 0.0
    %2490 = vmatpush2.msra.mxu0 0.0
    %2491 = vmatprep.subr.mxu0 0.0
    %2492 = vmatpush2.msra.mxu0 0.0
    %2493 = vmatprep.subr.mxu0 0.0
    %2494 = vmatpush2.msra.mxu0 0.0
    %2495 = vmatprep.subr.mxu0 0.0
    %2496 = vmatpush2.msra.mxu0 0.0
    %2497 = vmatprep.subr.mxu0 0.0
    %2498 = vmatpush2.msra.mxu0 0.0
    %2499 = vmatprep.subr.mxu0 0.0
    %2500 = vmatpush2.msra.mxu0 0.0
    %2501 = vmatprep.subr.mxu0 0.0
    %2502 = vmatpush2.msra.mxu0 0.0
    %2503 = vmatprep.subr.mxu0 0.0
    %2504 = vmatpush2.msra.mxu0 0.0
    %2505 = vmatprep.subr.mxu0 0.0
    %2506 = vmatpush2.msra.mxu0 0.0
    %2507 = vmatprep.subr.mxu0 0.0
    %2508 = vmatpush2.msra.mxu0 0.0
    %2509 = vmatprep.subr.mxu0 0.0
    %2510 = vmatpush2.msra.mxu0 0.0
    %2511 = vmatprep.mubr.f32.mxu0 0.0
    %v2512 = vand.u32 %v2348, 4294901760
    %v2513 = vsub.f32 %v2348, %v2512
    %v2514 = vand.u32 %v2513, 4294901760
    %v2515 = vsub.f32 %v2513, %v2514
    %v2516 = vand.u32 %v2515, 4294901760
    %2517 = vmatmul.mubr.f32.gmra.mxu0 %v2516
    %v2518 = vpop.f32.mrf.mxu0
    %v2519 = vadd.f32 %v2157, %v2518
    %v2520 = vpop.f32.mrf.mxu0
    %2521 = vmatprep.mubr.f32.mxu0 0.0
    %v2522 = vand.u32 %v2351, 4294901760
    %v2523 = vsub.f32 %v2351, %v2522
    %v2524 = vand.u32 %v2523, 4294901760
    %v2525 = vsub.f32 %v2523, %v2524
    %v2526 = vand.u32 %v2525, 4294901760
    %2527 = vmatmul.mubr.f32.gmra.mxu0 %v2526
    %v2528 = vpop.f32.mrf.mxu0
    %v2529 = vadd.f32 %v2163, %v2528
    %v2530 = vpop.f32.mrf.mxu0
    %2531 = vmatprep.mubr.f32.mxu0 0.0
    %v2532 = vand.u32 %v2354, 4294901760
    %v2533 = vsub.f32 %v2354, %v2532
    %v2534 = vand.u32 %v2533, 4294901760
    %v2535 = vsub.f32 %v2533, %v2534
    %v2536 = vand.u32 %v2535, 4294901760
    %2537 = vmatmul.mubr.f32.gmra.mxu0 %v2536
    %v2538 = vpop.f32.mrf.mxu0
    %v2539 = vadd.f32 %v2169, %v2538
    %v2540 = vpop.f32.mrf.mxu0
    %2541 = vmatprep.mubr.f32.mxu0 0.0
    %v2542 = vand.u32 %v2357, 4294901760
    %v2543 = vsub.f32 %v2357, %v2542
    %v2544 = vand.u32 %v2543, 4294901760
    %v2545 = vsub.f32 %v2543, %v2544
    %v2546 = vand.u32 %v2545, 4294901760
    %2547 = vmatmul.mubr.f32.gmra.mxu0 %v2546
    %v2548 = vpop.f32.mrf.mxu0
    %v2549 = vadd.f32 %v2175, %v2548
    %v2550 = vpop.f32.mrf.mxu0
    %2551 = vmatprep.mubr.f32.mxu0 0.0
    %v2552 = vand.u32 %v2360, 4294901760
    %v2553 = vsub.f32 %v2360, %v2552
    %v2554 = vand.u32 %v2553, 4294901760
    %v2555 = vsub.f32 %v2553, %v2554
    %v2556 = vand.u32 %v2555, 4294901760
    %2557 = vmatmul.mubr.f32.gmra.mxu0 %v2556
    %v2558 = vpop.f32.mrf.mxu0
    %v2559 = vadd.f32 %v2181, %v2558
    %v2560 = vpop.f32.mrf.mxu0
    %2561 = vmatprep.mubr.f32.mxu0 0.0
    %v2562 = vand.u32 %v2363, 4294901760
    %v2563 = vsub.f32 %v2363, %v2562
    %v2564 = vand.u32 %v2563, 4294901760
    %v2565 = vsub.f32 %v2563, %v2564
    %v2566 = vand.u32 %v2565, 4294901760
    %2567 = vmatmul.mubr.f32.gmra.mxu0 %v2566
    %v2568 = vpop.f32.mrf.mxu0
    %v2569 = vadd.f32 %v2187, %v2568
    %v2570 = vpop.f32.mrf.mxu0
    %2571 = vmatprep.mubr.f32.mxu0 0.0
    %v2572 = vand.u32 %v2366, 4294901760
    %v2573 = vsub.f32 %v2366, %v2572
    %v2574 = vand.u32 %v2573, 4294901760
    %v2575 = vsub.f32 %v2573, %v2574
    %v2576 = vand.u32 %v2575, 4294901760
    %2577 = vmatmul.mubr.f32.gmra.mxu0 %v2576
    %v2578 = vpop.f32.mrf.mxu0
    %v2579 = vadd.f32 %v2193, %v2578
    %v2580 = vpop.f32.mrf.mxu0
    %2581 = vmatprep.mubr.f32.mxu0 0.0
    %v2582 = vand.u32 %v2369, 4294901760
    %v2583 = vsub.f32 %v2369, %v2582
    %v2584 = vand.u32 %v2583, 4294901760
    %v2585 = vsub.f32 %v2583, %v2584
    %v2586 = vand.u32 %v2585, 4294901760
    %2587 = vmatmul.mubr.f32.gmra.mxu0 %v2586
    %v2588 = vpop.f32.mrf.mxu0
    %v2589 = vadd.f32 %v2199, %v2588
    %v2590 = vpop.f32.mrf.mxu0
    %2591 = vmatprep.mubr.f32.mxu0 0.0
    %v2592 = vand.u32 %v2372, 4294901760
    %v2593 = vsub.f32 %v2372, %v2592
    %v2594 = vand.u32 %v2593, 4294901760
    %v2595 = vsub.f32 %v2593, %v2594
    %v2596 = vand.u32 %v2595, 4294901760
    %2597 = vmatmul.mubr.f32.gmra.mxu0 %v2596
    %v2598 = vpop.f32.mrf.mxu0
    %v2599 = vadd.f32 %v2205, %v2598
    %v2600 = vpop.f32.mrf.mxu0
    %2601 = vmatprep.mubr.f32.mxu0 0.0
    %v2602 = vand.u32 %v2375, 4294901760
    %v2603 = vsub.f32 %v2375, %v2602
    %v2604 = vand.u32 %v2603, 4294901760
    %v2605 = vsub.f32 %v2603, %v2604
    %v2606 = vand.u32 %v2605, 4294901760
    %2607 = vmatmul.mubr.f32.gmra.mxu0 %v2606
    %v2608 = vpop.f32.mrf.mxu0
    %v2609 = vadd.f32 %v2211, %v2608
    %v2610 = vpop.f32.mrf.mxu0
    %2611 = vmatprep.mubr.f32.mxu0 0.0
    %v2612 = vand.u32 %v2378, 4294901760
    %v2613 = vsub.f32 %v2378, %v2612
    %v2614 = vand.u32 %v2613, 4294901760
    %v2615 = vsub.f32 %v2613, %v2614
    %v2616 = vand.u32 %v2615, 4294901760
    %2617 = vmatmul.mubr.f32.gmra.mxu0 %v2616
    %v2618 = vpop.f32.mrf.mxu0
    %v2619 = vadd.f32 %v2217, %v2618
    %v2620 = vpop.f32.mrf.mxu0
    %2621 = vmatprep.mubr.f32.mxu0 0.0
    %v2622 = vand.u32 %v2381, 4294901760
    %v2623 = vsub.f32 %v2381, %v2622
    %v2624 = vand.u32 %v2623, 4294901760
    %v2625 = vsub.f32 %v2623, %v2624
    %v2626 = vand.u32 %v2625, 4294901760
    %2627 = vmatmul.mubr.f32.gmra.mxu0 %v2626
    %v2628 = vpop.f32.mrf.mxu0
    %v2629 = vadd.f32 %v2223, %v2628
    %v2630 = vpop.f32.mrf.mxu0
    %2631 = vmatprep.mubr.f32.mxu0 0.0
    %v2632 = vand.u32 %v2384, 4294901760
    %v2633 = vsub.f32 %v2384, %v2632
    %v2634 = vand.u32 %v2633, 4294901760
    %v2635 = vsub.f32 %v2633, %v2634
    %v2636 = vand.u32 %v2635, 4294901760
    %2637 = vmatmul.mubr.f32.gmra.mxu0 %v2636
    %v2638 = vpop.f32.mrf.mxu0
    %v2639 = vadd.f32 %v2229, %v2638
    %v2640 = vpop.f32.mrf.mxu0
    %2641 = vmatprep.mubr.f32.mxu0 0.0
    %v2642 = vand.u32 %v2387, 4294901760
    %v2643 = vsub.f32 %v2387, %v2642
    %v2644 = vand.u32 %v2643, 4294901760
    %v2645 = vsub.f32 %v2643, %v2644
    %v2646 = vand.u32 %v2645, 4294901760
    %2647 = vmatmul.mubr.f32.gmra.mxu0 %v2646
    %v2648 = vpop.f32.mrf.mxu0
    %v2649 = vadd.f32 %v2235, %v2648
    %v2650 = vpop.f32.mrf.mxu0
    %2651 = vmatprep.mubr.f32.mxu0 0.0
    %v2652 = vand.u32 %v2390, 4294901760
    %v2653 = vsub.f32 %v2390, %v2652
    %v2654 = vand.u32 %v2653, 4294901760
    %v2655 = vsub.f32 %v2653, %v2654
    %v2656 = vand.u32 %v2655, 4294901760
    %2657 = vmatmul.mubr.f32.gmra.mxu0 %v2656
    %v2658 = vpop.f32.mrf.mxu0
    %v2659 = vadd.f32 %v2241, %v2658
    %v2660 = vpop.f32.mrf.mxu0
    %2661 = vmatprep.mubr.f32.mxu0 0.0
    %v2662 = vand.u32 %v2393, 4294901760
    %v2663 = vsub.f32 %v2393, %v2662
    %v2664 = vand.u32 %v2663, 4294901760
    %v2665 = vsub.f32 %v2663, %v2664
    %v2666 = vand.u32 %v2665, 4294901760
    %2667 = vmatmul.mubr.f32.gmra.mxu0 %v2666
    %v2668 = vpop.f32.mrf.mxu0
    %v2669 = vadd.f32 %v2247, %v2668
    %v2670 = vpop.f32.mrf.mxu0
    %2671 = vmatprep.mubr.f32.mxu0 0.0
    %v2672 = vand.u32 %v2396, 4294901760
    %v2673 = vsub.f32 %v2396, %v2672
    %v2674 = vand.u32 %v2673, 4294901760
    %v2675 = vsub.f32 %v2673, %v2674
    %v2676 = vand.u32 %v2675, 4294901760
    %2677 = vmatmul.mubr.f32.gmra.mxu0 %v2676
    %v2678 = vpop.f32.mrf.mxu0
    %v2679 = vadd.f32 %v2253, %v2678
    %v2680 = vpop.f32.mrf.mxu0
    %2681 = vmatprep.mubr.f32.mxu0 0.0
    %v2682 = vand.u32 %v2399, 4294901760
    %v2683 = vsub.f32 %v2399, %v2682
    %v2684 = vand.u32 %v2683, 4294901760
    %v2685 = vsub.f32 %v2683, %v2684
    %v2686 = vand.u32 %v2685, 4294901760
    %2687 = vmatmul.mubr.f32.gmra.mxu0 %v2686
    %v2688 = vpop.f32.mrf.mxu0
    %v2689 = vadd.f32 %v2259, %v2688
    %v2690 = vpop.f32.mrf.mxu0
    %2691 = vmatprep.mubr.f32.mxu0 0.0
    %v2692 = vand.u32 %v2402, 4294901760
    %v2693 = vsub.f32 %v2402, %v2692
    %v2694 = vand.u32 %v2693, 4294901760
    %v2695 = vsub.f32 %v2693, %v2694
    %v2696 = vand.u32 %v2695, 4294901760
    %2697 = vmatmul.mubr.f32.gmra.mxu0 %v2696
    %v2698 = vpop.f32.mrf.mxu0
    %v2699 = vadd.f32 %v2265, %v2698
    %v2700 = vpop.f32.mrf.mxu0
    %2701 = vmatprep.mubr.f32.mxu0 0.0
    %v2702 = vand.u32 %v2405, 4294901760
    %v2703 = vsub.f32 %v2405, %v2702
    %v2704 = vand.u32 %v2703, 4294901760
    %v2705 = vsub.f32 %v2703, %v2704
    %v2706 = vand.u32 %v2705, 4294901760
    %2707 = vmatmul.mubr.f32.gmra.mxu0 %v2706
    %v2708 = vpop.f32.mrf.mxu0
    %v2709 = vadd.f32 %v2271, %v2708
    %v2710 = vpop.f32.mrf.mxu0
    %2711 = vmatprep.mubr.f32.mxu0 0.0
    %v2712 = vand.u32 %v2408, 4294901760
    %v2713 = vsub.f32 %v2408, %v2712
    %v2714 = vand.u32 %v2713, 4294901760
    %v2715 = vsub.f32 %v2713, %v2714
    %v2716 = vand.u32 %v2715, 4294901760
    %2717 = vmatmul.mubr.f32.gmra.mxu0 %v2716
    %v2718 = vpop.f32.mrf.mxu0
    %v2719 = vadd.f32 %v2277, %v2718
    %v2720 = vpop.f32.mrf.mxu0
    %2721 = vmatprep.mubr.f32.mxu0 0.0
    %v2722 = vand.u32 %v2411, 4294901760
    %v2723 = vsub.f32 %v2411, %v2722
    %v2724 = vand.u32 %v2723, 4294901760
    %v2725 = vsub.f32 %v2723, %v2724
    %v2726 = vand.u32 %v2725, 4294901760
    %2727 = vmatmul.mubr.f32.gmra.mxu0 %v2726
    %v2728 = vpop.f32.mrf.mxu0
    %v2729 = vadd.f32 %v2283, %v2728
    %v2730 = vpop.f32.mrf.mxu0
    %2731 = vmatprep.mubr.f32.mxu0 0.0
    %v2732 = vand.u32 %v2414, 4294901760
    %v2733 = vsub.f32 %v2414, %v2732
    %v2734 = vand.u32 %v2733, 4294901760
    %v2735 = vsub.f32 %v2733, %v2734
    %v2736 = vand.u32 %v2735, 4294901760
    %2737 = vmatmul.mubr.f32.gmra.mxu0 %v2736
    %v2738 = vpop.f32.mrf.mxu0
    %v2739 = vadd.f32 %v2289, %v2738
    %v2740 = vpop.f32.mrf.mxu0
    %2741 = vmatprep.mubr.f32.mxu0 0.0
    %v2742 = vand.u32 %v2417, 4294901760
    %v2743 = vsub.f32 %v2417, %v2742
    %v2744 = vand.u32 %v2743, 4294901760
    %v2745 = vsub.f32 %v2743, %v2744
    %v2746 = vand.u32 %v2745, 4294901760
    %2747 = vmatmul.mubr.f32.gmra.mxu0 %v2746
    %v2748 = vpop.f32.mrf.mxu0
    %v2749 = vadd.f32 %v2295, %v2748
    %v2750 = vpop.f32.mrf.mxu0
    %2751 = vmatprep.mubr.f32.mxu0 0.0
    %v2752 = vand.u32 %v2420, 4294901760
    %v2753 = vsub.f32 %v2420, %v2752
    %v2754 = vand.u32 %v2753, 4294901760
    %v2755 = vsub.f32 %v2753, %v2754
    %v2756 = vand.u32 %v2755, 4294901760
    %2757 = vmatmul.mubr.f32.gmra.mxu0 %v2756
    %v2758 = vpop.f32.mrf.mxu0
    %v2759 = vadd.f32 %v2301, %v2758
    %v2760 = vpop.f32.mrf.mxu0
    %2761 = vmatprep.mubr.f32.mxu0 0.0
    %v2762 = vand.u32 %v2423, 4294901760
    %v2763 = vsub.f32 %v2423, %v2762
    %v2764 = vand.u32 %v2763, 4294901760
    %v2765 = vsub.f32 %v2763, %v2764
    %v2766 = vand.u32 %v2765, 4294901760
    %2767 = vmatmul.mubr.f32.gmra.mxu0 %v2766
    %v2768 = vpop.f32.mrf.mxu0
    %v2769 = vadd.f32 %v2307, %v2768
    %v2770 = vpop.f32.mrf.mxu0
    %2771 = vmatprep.mubr.f32.mxu0 0.0
    %v2772 = vand.u32 %v2426, 4294901760
    %v2773 = vsub.f32 %v2426, %v2772
    %v2774 = vand.u32 %v2773, 4294901760
    %v2775 = vsub.f32 %v2773, %v2774
    %v2776 = vand.u32 %v2775, 4294901760
    %2777 = vmatmul.mubr.f32.gmra.mxu0 %v2776
    %v2778 = vpop.f32.mrf.mxu0
    %v2779 = vadd.f32 %v2313, %v2778
    %v2780 = vpop.f32.mrf.mxu0
    %2781 = vmatprep.mubr.f32.mxu0 0.0
    %v2782 = vand.u32 %v2429, 4294901760
    %v2783 = vsub.f32 %v2429, %v2782
    %v2784 = vand.u32 %v2783, 4294901760
    %v2785 = vsub.f32 %v2783, %v2784
    %v2786 = vand.u32 %v2785, 4294901760
    %2787 = vmatmul.mubr.f32.gmra.mxu0 %v2786
    %v2788 = vpop.f32.mrf.mxu0
    %v2789 = vadd.f32 %v2319, %v2788
    %v2790 = vpop.f32.mrf.mxu0
    %2791 = vmatprep.mubr.f32.mxu0 0.0
    %v2792 = vand.u32 %v2432, 4294901760
    %v2793 = vsub.f32 %v2432, %v2792
    %v2794 = vand.u32 %v2793, 4294901760
    %v2795 = vsub.f32 %v2793, %v2794
    %v2796 = vand.u32 %v2795, 4294901760
    %2797 = vmatmul.mubr.f32.gmra.mxu0 %v2796
    %v2798 = vpop.f32.mrf.mxu0
    %v2799 = vadd.f32 %v2325, %v2798
    %v2800 = vpop.f32.mrf.mxu0
    %2801 = vmatprep.mubr.f32.mxu0 0.0
    %v2802 = vand.u32 %v2435, 4294901760
    %v2803 = vsub.f32 %v2435, %v2802
    %v2804 = vand.u32 %v2803, 4294901760
    %v2805 = vsub.f32 %v2803, %v2804
    %v2806 = vand.u32 %v2805, 4294901760
    %2807 = vmatmul.mubr.f32.gmra.mxu0 %v2806
    %v2808 = vpop.f32.mrf.mxu0
    %v2809 = vadd.f32 %v2331, %v2808
    %v2810 = vpop.f32.mrf.mxu0
    %2811 = vmatprep.mubr.f32.mxu0 0.0
    %v2812 = vand.u32 %v2438, 4294901760
    %v2813 = vsub.f32 %v2438, %v2812
    %v2814 = vand.u32 %v2813, 4294901760
    %v2815 = vsub.f32 %v2813, %v2814
    %v2816 = vand.u32 %v2815, 4294901760
    %2817 = vmatmul.mubr.f32.gmra.mxu0 %v2816
    %v2818 = vpop.f32.mrf.mxu0
    %v2819 = vadd.f32 %v2337, %v2818
    %v2820 = vpop.f32.mrf.mxu0
    %2821 = vmatprep.mubr.f32.mxu0 0.0
    %v2822 = vand.u32 %v2441, 4294901760
    %v2823 = vsub.f32 %v2441, %v2822
    %v2824 = vand.u32 %v2823, 4294901760
    %v2825 = vsub.f32 %v2823, %v2824
    %v2826 = vand.u32 %v2825, 4294901760
    %2827 = vmatmul.mubr.f32.gmra.mxu0 %v2826
    %v2828 = vpop.f32.mrf.mxu0
    %v2829 = vadd.f32 %v2343, %v2828
    %v2830 = vpop.f32.mrf.mxu0
    %2831 = vdwg.mxu0
    %2832 = vmatprep.subr.mxu0 0.0
    %2833 = vmatpush1.msra.mxu0 0.0
    %2834 = vmatprep.subr.mxu0 0.0
    %2835 = vmatpush1.msra.mxu0 0.0
    %2836 = vmatprep.subr.mxu0 0.0
    %2837 = vmatpush1.msra.mxu0 0.0
    %2838 = vmatprep.subr.mxu0 0.0
    %2839 = vmatpush1.msra.mxu0 0.0
    %2840 = vmatprep.subr.mxu0 0.0
    %2841 = vmatpush1.msra.mxu0 0.0
    %2842 = vmatprep.subr.mxu0 0.0
    %2843 = vmatpush1.msra.mxu0 0.0
    %2844 = vmatprep.subr.mxu0 0.0
    %2845 = vmatpush1.msra.mxu0 0.0
    %2846 = vmatprep.subr.mxu0 0.0
    %2847 = vmatpush1.msra.mxu0 0.0
    %2848 = vmatprep.subr.mxu0 0.0
    %2849 = vmatpush1.msra.mxu0 0.0
    %2850 = vmatprep.subr.mxu0 0.0
    %2851 = vmatpush1.msra.mxu0 0.0
    %2852 = vmatprep.subr.mxu0 0.0
    %2853 = vmatpush1.msra.mxu0 0.0
    %2854 = vmatprep.subr.mxu0 0.0
    %2855 = vmatpush1.msra.mxu0 0.0
    %2856 = vmatprep.subr.mxu0 0.0
    %v2857 = vand.u32 %v468, 4294901760
    %v2858 = vsub.f32 %v468, %v2857
    %v2859 = vand.u32 %v2858, 4294901760
    %v2860 = vsub.f32 %v2858, %v2859
    %v2861 = vand.u32 %v2860, 4294901760
    %2862 = vmatpush1.msra.mxu0 %v2861
    %2863 = vmatprep.subr.mxu0 0.0
    %v2864 = vand.u32 %v467, 4294901760
    %v2865 = vsub.f32 %v467, %v2864
    %v2866 = vand.u32 %v2865, 4294901760
    %v2867 = vsub.f32 %v2865, %v2866
    %v2868 = vand.u32 %v2867, 4294901760
    %2869 = vmatpush1.msra.mxu0 %v2868
    %2870 = vmatprep.subr.mxu0 0.0
    %v2871 = vand.u32 %v466, 4294901760
    %v2872 = vsub.f32 %v466, %v2871
    %v2873 = vand.u32 %v2872, 4294901760
    %v2874 = vsub.f32 %v2872, %v2873
    %v2875 = vand.u32 %v2874, 4294901760
    %2876 = vmatpush1.msra.mxu0 %v2875
    %2877 = vmatprep.subr.mxu0 0.0
    %v2878 = vand.u32 %v465, 4294901760
    %v2879 = vsub.f32 %v465, %v2878
    %v2880 = vand.u32 %v2879, 4294901760
    %v2881 = vsub.f32 %v2879, %v2880
    %v2882 = vand.u32 %v2881, 4294901760
    %2883 = vmatpush1.msra.mxu0 %v2882
    %2884 = vmatprep.subr.mxu0 0.0
    %2885 = vmatpush2.msra.mxu0 0.0
    %2886 = vmatprep.subr.mxu0 0.0
    %2887 = vmatpush2.msra.mxu0 0.0
    %2888 = vmatprep.subr.mxu0 0.0
    %2889 = vmatpush2.msra.mxu0 0.0
    %2890 = vmatprep.subr.mxu0 0.0
    %2891 = vmatpush2.msra.mxu0 0.0
    %2892 = vmatprep.subr.mxu0 0.0
    %2893 = vmatpush2.msra.mxu0 0.0
    %2894 = vmatprep.subr.mxu0 0.0
    %2895 = vmatpush2.msra.mxu0 0.0
    %2896 = vmatprep.subr.mxu0 0.0
    %2897 = vmatpush2.msra.mxu0 0.0
    %2898 = vmatprep.subr.mxu0 0.0
    %2899 = vmatpush2.msra.mxu0 0.0
    %2900 = vmatprep.subr.mxu0 0.0
    %2901 = vmatpush2.msra.mxu0 0.0
    %2902 = vmatprep.subr.mxu0 0.0
    %2903 = vmatpush2.msra.mxu0 0.0
    %2904 = vmatprep.subr.mxu0 0.0
    %2905 = vmatpush2.msra.mxu0 0.0
    %2906 = vmatprep.subr.mxu0 0.0
    %2907 = vmatpush2.msra.mxu0 0.0
    %2908 = vmatprep.subr.mxu0 0.0
    %2909 = vmatpush2.msra.mxu0 0.0
    %2910 = vmatprep.subr.mxu0 0.0
    %2911 = vmatpush2.msra.mxu0 0.0
    %2912 = vmatprep.subr.mxu0 0.0
    %2913 = vmatpush2.msra.mxu0 0.0
    %2914 = vmatprep.subr.mxu0 0.0
    %2915 = vmatpush2.msra.mxu0 0.0
    %2916 = vmatprep.mubr.f32.mxu0 0.0
    %v2917 = vand.u32 %v2348, 4294901760
    %2918 = vmatmul.mubr.f32.gmra.mxu0 %v2917
    %v2919 = vpop.f32.mrf.mxu0
    %v2920 = vadd.f32 %v2519, %v2919
    %v2921 = vpop.f32.mrf.mxu0
    %2922 = vmatprep.mubr.f32.mxu0 0.0
    %v2923 = vand.u32 %v2351, 4294901760
    %2924 = vmatmul.mubr.f32.gmra.mxu0 %v2923
    %v2925 = vpop.f32.mrf.mxu0
    %v2926 = vadd.f32 %v2529, %v2925
    %v2927 = vpop.f32.mrf.mxu0
    %2928 = vmatprep.mubr.f32.mxu0 0.0
    %v2929 = vand.u32 %v2354, 4294901760
    %2930 = vmatmul.mubr.f32.gmra.mxu0 %v2929
    %v2931 = vpop.f32.mrf.mxu0
    %v2932 = vadd.f32 %v2539, %v2931
    %v2933 = vpop.f32.mrf.mxu0
    %2934 = vmatprep.mubr.f32.mxu0 0.0
    %v2935 = vand.u32 %v2357, 4294901760
    %2936 = vmatmul.mubr.f32.gmra.mxu0 %v2935
    %v2937 = vpop.f32.mrf.mxu0
    %v2938 = vadd.f32 %v2549, %v2937
    %v2939 = vpop.f32.mrf.mxu0
    %2940 = vmatprep.mubr.f32.mxu0 0.0
    %v2941 = vand.u32 %v2360, 4294901760
    %2942 = vmatmul.mubr.f32.gmra.mxu0 %v2941
    %v2943 = vpop.f32.mrf.mxu0
    %v2944 = vadd.f32 %v2559, %v2943
    %v2945 = vpop.f32.mrf.mxu0
    %2946 = vmatprep.mubr.f32.mxu0 0.0
    %v2947 = vand.u32 %v2363, 4294901760
    %2948 = vmatmul.mubr.f32.gmra.mxu0 %v2947
    %v2949 = vpop.f32.mrf.mxu0
    %v2950 = vadd.f32 %v2569, %v2949
    %v2951 = vpop.f32.mrf.mxu0
    %2952 = vmatprep.mubr.f32.mxu0 0.0
    %v2953 = vand.u32 %v2366, 4294901760
    %2954 = vmatmul.mubr.f32.gmra.mxu0 %v2953
    %v2955 = vpop.f32.mrf.mxu0
    %v2956 = vadd.f32 %v2579, %v2955
    %v2957 = vpop.f32.mrf.mxu0
    %2958 = vmatprep.mubr.f32.mxu0 0.0
    %v2959 = vand.u32 %v2369, 4294901760
    %2960 = vmatmul.mubr.f32.gmra.mxu0 %v2959
    %v2961 = vpop.f32.mrf.mxu0
    %v2962 = vadd.f32 %v2589, %v2961
    %v2963 = vpop.f32.mrf.mxu0
    %2964 = vmatprep.mubr.f32.mxu0 0.0
    %v2965 = vand.u32 %v2372, 4294901760
    %2966 = vmatmul.mubr.f32.gmra.mxu0 %v2965
    %v2967 = vpop.f32.mrf.mxu0
    %v2968 = vadd.f32 %v2599, %v2967
    %v2969 = vpop.f32.mrf.mxu0
    %2970 = vmatprep.mubr.f32.mxu0 0.0
    %v2971 = vand.u32 %v2375, 4294901760
    %2972 = vmatmul.mubr.f32.gmra.mxu0 %v2971
    %v2973 = vpop.f32.mrf.mxu0
    %v2974 = vadd.f32 %v2609, %v2973
    %v2975 = vpop.f32.mrf.mxu0
    %2976 = vmatprep.mubr.f32.mxu0 0.0
    %v2977 = vand.u32 %v2378, 4294901760
    %2978 = vmatmul.mubr.f32.gmra.mxu0 %v2977
    %v2979 = vpop.f32.mrf.mxu0
    %v2980 = vadd.f32 %v2619, %v2979
    %v2981 = vpop.f32.mrf.mxu0
    %2982 = vmatprep.mubr.f32.mxu0 0.0
    %v2983 = vand.u32 %v2381, 4294901760
    %2984 = vmatmul.mubr.f32.gmra.mxu0 %v2983
    %v2985 = vpop.f32.mrf.mxu0
    %v2986 = vadd.f32 %v2629, %v2985
    %v2987 = vpop.f32.mrf.mxu0
    %2988 = vmatprep.mubr.f32.mxu0 0.0
    %v2989 = vand.u32 %v2384, 4294901760
    %2990 = vmatmul.mubr.f32.gmra.mxu0 %v2989
    %v2991 = vpop.f32.mrf.mxu0
    %v2992 = vadd.f32 %v2639, %v2991
    %v2993 = vpop.f32.mrf.mxu0
    %2994 = vmatprep.mubr.f32.mxu0 0.0
    %v2995 = vand.u32 %v2387, 4294901760
    %2996 = vmatmul.mubr.f32.gmra.mxu0 %v2995
    %v2997 = vpop.f32.mrf.mxu0
    %v2998 = vadd.f32 %v2649, %v2997
    %v2999 = vpop.f32.mrf.mxu0
    %3000 = vmatprep.mubr.f32.mxu0 0.0
    %v3001 = vand.u32 %v2390, 4294901760
    %3002 = vmatmul.mubr.f32.gmra.mxu0 %v3001
    %v3003 = vpop.f32.mrf.mxu0
    %v3004 = vadd.f32 %v2659, %v3003
    %v3005 = vpop.f32.mrf.mxu0
    %3006 = vmatprep.mubr.f32.mxu0 0.0
    %v3007 = vand.u32 %v2393, 4294901760
    %3008 = vmatmul.mubr.f32.gmra.mxu0 %v3007
    %v3009 = vpop.f32.mrf.mxu0
    %v3010 = vadd.f32 %v2669, %v3009
    %v3011 = vpop.f32.mrf.mxu0
    %3012 = vmatprep.mubr.f32.mxu0 0.0
    %v3013 = vand.u32 %v2396, 4294901760
    %3014 = vmatmul.mubr.f32.gmra.mxu0 %v3013
    %v3015 = vpop.f32.mrf.mxu0
    %v3016 = vadd.f32 %v2679, %v3015
    %v3017 = vpop.f32.mrf.mxu0
    %3018 = vmatprep.mubr.f32.mxu0 0.0
    %v3019 = vand.u32 %v2399, 4294901760
    %3020 = vmatmul.mubr.f32.gmra.mxu0 %v3019
    %v3021 = vpop.f32.mrf.mxu0
    %v3022 = vadd.f32 %v2689, %v3021
    %v3023 = vpop.f32.mrf.mxu0
    %3024 = vmatprep.mubr.f32.mxu0 0.0
    %v3025 = vand.u32 %v2402, 4294901760
    %3026 = vmatmul.mubr.f32.gmra.mxu0 %v3025
    %v3027 = vpop.f32.mrf.mxu0
    %v3028 = vadd.f32 %v2699, %v3027
    %v3029 = vpop.f32.mrf.mxu0
    %3030 = vmatprep.mubr.f32.mxu0 0.0
    %v3031 = vand.u32 %v2405, 4294901760
    %3032 = vmatmul.mubr.f32.gmra.mxu0 %v3031
    %v3033 = vpop.f32.mrf.mxu0
    %v3034 = vadd.f32 %v2709, %v3033
    %v3035 = vpop.f32.mrf.mxu0
    %3036 = vmatprep.mubr.f32.mxu0 0.0
    %v3037 = vand.u32 %v2408, 4294901760
    %3038 = vmatmul.mubr.f32.gmra.mxu0 %v3037
    %v3039 = vpop.f32.mrf.mxu0
    %v3040 = vadd.f32 %v2719, %v3039
    %v3041 = vpop.f32.mrf.mxu0
    %3042 = vmatprep.mubr.f32.mxu0 0.0
    %v3043 = vand.u32 %v2411, 4294901760
    %3044 = vmatmul.mubr.f32.gmra.mxu0 %v3043
    %v3045 = vpop.f32.mrf.mxu0
    %v3046 = vadd.f32 %v2729, %v3045
    %v3047 = vpop.f32.mrf.mxu0
    %3048 = vmatprep.mubr.f32.mxu0 0.0
    %v3049 = vand.u32 %v2414, 4294901760
    %3050 = vmatmul.mubr.f32.gmra.mxu0 %v3049
    %v3051 = vpop.f32.mrf.mxu0
    %v3052 = vadd.f32 %v2739, %v3051
    %v3053 = vpop.f32.mrf.mxu0
    %3054 = vmatprep.mubr.f32.mxu0 0.0
    %v3055 = vand.u32 %v2417, 4294901760
    %3056 = vmatmul.mubr.f32.gmra.mxu0 %v3055
    %v3057 = vpop.f32.mrf.mxu0
    %v3058 = vadd.f32 %v2749, %v3057
    %v3059 = vpop.f32.mrf.mxu0
    %3060 = vmatprep.mubr.f32.mxu0 0.0
    %v3061 = vand.u32 %v2420, 4294901760
    %3062 = vmatmul.mubr.f32.gmra.mxu0 %v3061
    %v3063 = vpop.f32.mrf.mxu0
    %v3064 = vadd.f32 %v2759, %v3063
    %v3065 = vpop.f32.mrf.mxu0
    %3066 = vmatprep.mubr.f32.mxu0 0.0
    %v3067 = vand.u32 %v2423, 4294901760
    %3068 = vmatmul.mubr.f32.gmra.mxu0 %v3067
    %v3069 = vpop.f32.mrf.mxu0
    %v3070 = vadd.f32 %v2769, %v3069
    %v3071 = vpop.f32.mrf.mxu0
    %3072 = vmatprep.mubr.f32.mxu0 0.0
    %v3073 = vand.u32 %v2426, 4294901760
    %3074 = vmatmul.mubr.f32.gmra.mxu0 %v3073
    %v3075 = vpop.f32.mrf.mxu0
    %v3076 = vadd.f32 %v2779, %v3075
    %v3077 = vpop.f32.mrf.mxu0
    %3078 = vmatprep.mubr.f32.mxu0 0.0
    %v3079 = vand.u32 %v2429, 4294901760
    %3080 = vmatmul.mubr.f32.gmra.mxu0 %v3079
    %v3081 = vpop.f32.mrf.mxu0
    %v3082 = vadd.f32 %v2789, %v3081
    %v3083 = vpop.f32.mrf.mxu0
    %3084 = vmatprep.mubr.f32.mxu0 0.0
    %v3085 = vand.u32 %v2432, 4294901760
    %3086 = vmatmul.mubr.f32.gmra.mxu0 %v3085
    %v3087 = vpop.f32.mrf.mxu0
    %v3088 = vadd.f32 %v2799, %v3087
    %v3089 = vpop.f32.mrf.mxu0
    %3090 = vmatprep.mubr.f32.mxu0 0.0
    %v3091 = vand.u32 %v2435, 4294901760
    %3092 = vmatmul.mubr.f32.gmra.mxu0 %v3091
    %v3093 = vpop.f32.mrf.mxu0
    %v3094 = vadd.f32 %v2809, %v3093
    %v3095 = vpop.f32.mrf.mxu0
    %3096 = vmatprep.mubr.f32.mxu0 0.0
    %v3097 = vand.u32 %v2438, 4294901760
    %3098 = vmatmul.mubr.f32.gmra.mxu0 %v3097
    %v3099 = vpop.f32.mrf.mxu0
    %v3100 = vadd.f32 %v2819, %v3099
    %v3101 = vpop.f32.mrf.mxu0
    %3102 = vmatprep.mubr.f32.mxu0 0.0
    %v3103 = vand.u32 %v2441, 4294901760
    %3104 = vmatmul.mubr.f32.gmra.mxu0 %v3103
    %v3105 = vpop.f32.mrf.mxu0
    %v3106 = vadd.f32 %v2829, %v3105
    %v3107 = vpop.f32.mrf.mxu0
    %3108 = vdwg.mxu0
    %3109 = vmatprep.subr.mxu0 0.0
    %3110 = vmatpush1.msra.mxu0 0.0
    %3111 = vmatprep.subr.mxu0 0.0
    %3112 = vmatpush1.msra.mxu0 0.0
    %3113 = vmatprep.subr.mxu0 0.0
    %3114 = vmatpush1.msra.mxu0 0.0
    %3115 = vmatprep.subr.mxu0 0.0
    %3116 = vmatpush1.msra.mxu0 0.0
    %3117 = vmatprep.subr.mxu0 0.0
    %3118 = vmatpush1.msra.mxu0 0.0
    %3119 = vmatprep.subr.mxu0 0.0
    %3120 = vmatpush1.msra.mxu0 0.0
    %3121 = vmatprep.subr.mxu0 0.0
    %3122 = vmatpush1.msra.mxu0 0.0
    %3123 = vmatprep.subr.mxu0 0.0
    %3124 = vmatpush1.msra.mxu0 0.0
    %3125 = vmatprep.subr.mxu0 0.0
    %3126 = vmatpush1.msra.mxu0 0.0
    %3127 = vmatprep.subr.mxu0 0.0
    %3128 = vmatpush1.msra.mxu0 0.0
    %3129 = vmatprep.subr.mxu0 0.0
    %3130 = vmatpush1.msra.mxu0 0.0
    %3131 = vmatprep.subr.mxu0 0.0
    %3132 = vmatpush1.msra.mxu0 0.0
    %3133 = vmatprep.subr.mxu0 0.0
    %v3134 = vand.u32 %v468, 4294901760
    %v3135 = vsub.f32 %v468, %v3134
    %3136 = vmatpush1.msra.mxu0 %v3135
    %3137 = vmatprep.subr.mxu0 0.0
    %v3138 = vand.u32 %v467, 4294901760
    %v3139 = vsub.f32 %v467, %v3138
    %3140 = vmatpush1.msra.mxu0 %v3139
    %3141 = vmatprep.subr.mxu0 0.0
    %v3142 = vand.u32 %v466, 4294901760
    %v3143 = vsub.f32 %v466, %v3142
    %3144 = vmatpush1.msra.mxu0 %v3143
    %3145 = vmatprep.subr.mxu0 0.0
    %v3146 = vand.u32 %v465, 4294901760
    %v3147 = vsub.f32 %v465, %v3146
    %3148 = vmatpush1.msra.mxu0 %v3147
    %3149 = vmatprep.subr.mxu0 0.0
    %3150 = vmatpush2.msra.mxu0 0.0
    %3151 = vmatprep.subr.mxu0 0.0
    %3152 = vmatpush2.msra.mxu0 0.0
    %3153 = vmatprep.subr.mxu0 0.0
    %3154 = vmatpush2.msra.mxu0 0.0
    %3155 = vmatprep.subr.mxu0 0.0
    %3156 = vmatpush2.msra.mxu0 0.0
    %3157 = vmatprep.subr.mxu0 0.0
    %3158 = vmatpush2.msra.mxu0 0.0
    %3159 = vmatprep.subr.mxu0 0.0
    %3160 = vmatpush2.msra.mxu0 0.0
    %3161 = vmatprep.subr.mxu0 0.0
    %3162 = vmatpush2.msra.mxu0 0.0
    %3163 = vmatprep.subr.mxu0 0.0
    %3164 = vmatpush2.msra.mxu0 0.0
    %3165 = vmatprep.subr.mxu0 0.0
    %3166 = vmatpush2.msra.mxu0 0.0
    %3167 = vmatprep.subr.mxu0 0.0
    %3168 = vmatpush2.msra.mxu0 0.0
    %3169 = vmatprep.subr.mxu0 0.0
    %3170 = vmatpush2.msra.mxu0 0.0
    %3171 = vmatprep.subr.mxu0 0.0
    %3172 = vmatpush2.msra.mxu0 0.0
    %3173 = vmatprep.subr.mxu0 0.0
    %3174 = vmatpush2.msra.mxu0 0.0
    %3175 = vmatprep.subr.mxu0 0.0
    %3176 = vmatpush2.msra.mxu0 0.0
    %3177 = vmatprep.subr.mxu0 0.0
    %3178 = vmatpush2.msra.mxu0 0.0
    %3179 = vmatprep.subr.mxu0 0.0
    %3180 = vmatpush2.msra.mxu0 0.0
    %3181 = vmatprep.mubr.f32.mxu0 0.0
    %v3182 = vand.u32 %v2348, 4294901760
    %v3183 = vsub.f32 %v2348, %v3182
    %3184 = vmatmul.mubr.f32.gmra.mxu0 %v3183
    %v3185 = vpop.f32.mrf.mxu0
    %v3186 = vadd.f32 %v2920, %v3185
    %v3187 = vpop.f32.mrf.mxu0
    %3188 = vmatprep.mubr.f32.mxu0 0.0
    %v3189 = vand.u32 %v2351, 4294901760
    %v3190 = vsub.f32 %v2351, %v3189
    %3191 = vmatmul.mubr.f32.gmra.mxu0 %v3190
    %v3192 = vpop.f32.mrf.mxu0
    %v3193 = vadd.f32 %v2926, %v3192
    %v3194 = vpop.f32.mrf.mxu0
    %3195 = vmatprep.mubr.f32.mxu0 0.0
    %v3196 = vand.u32 %v2354, 4294901760
    %v3197 = vsub.f32 %v2354, %v3196
    %3198 = vmatmul.mubr.f32.gmra.mxu0 %v3197
    %v3199 = vpop.f32.mrf.mxu0
    %v3200 = vadd.f32 %v2932, %v3199
    %v3201 = vpop.f32.mrf.mxu0
    %3202 = vmatprep.mubr.f32.mxu0 0.0
    %v3203 = vand.u32 %v2357, 4294901760
    %v3204 = vsub.f32 %v2357, %v3203
    %3205 = vmatmul.mubr.f32.gmra.mxu0 %v3204
    %v3206 = vpop.f32.mrf.mxu0
    %v3207 = vadd.f32 %v2938, %v3206
    %v3208 = vpop.f32.mrf.mxu0
    %3209 = vmatprep.mubr.f32.mxu0 0.0
    %v3210 = vand.u32 %v2360, 4294901760
    %v3211 = vsub.f32 %v2360, %v3210
    %3212 = vmatmul.mubr.f32.gmra.mxu0 %v3211
    %v3213 = vpop.f32.mrf.mxu0
    %v3214 = vadd.f32 %v2944, %v3213
    %v3215 = vpop.f32.mrf.mxu0
    %3216 = vmatprep.mubr.f32.mxu0 0.0
    %v3217 = vand.u32 %v2363, 4294901760
    %v3218 = vsub.f32 %v2363, %v3217
    %3219 = vmatmul.mubr.f32.gmra.mxu0 %v3218
    %v3220 = vpop.f32.mrf.mxu0
    %v3221 = vadd.f32 %v2950, %v3220
    %v3222 = vpop.f32.mrf.mxu0
    %3223 = vmatprep.mubr.f32.mxu0 0.0
    %v3224 = vand.u32 %v2366, 4294901760
    %v3225 = vsub.f32 %v2366, %v3224
    %3226 = vmatmul.mubr.f32.gmra.mxu0 %v3225
    %v3227 = vpop.f32.mrf.mxu0
    %v3228 = vadd.f32 %v2956, %v3227
    %v3229 = vpop.f32.mrf.mxu0
    %3230 = vmatprep.mubr.f32.mxu0 0.0
    %v3231 = vand.u32 %v2369, 4294901760
    %v3232 = vsub.f32 %v2369, %v3231
    %3233 = vmatmul.mubr.f32.gmra.mxu0 %v3232
    %v3234 = vpop.f32.mrf.mxu0
    %v3235 = vadd.f32 %v2962, %v3234
    %v3236 = vpop.f32.mrf.mxu0
    %3237 = vmatprep.mubr.f32.mxu0 0.0
    %v3238 = vand.u32 %v2372, 4294901760
    %v3239 = vsub.f32 %v2372, %v3238
    %3240 = vmatmul.mubr.f32.gmra.mxu0 %v3239
    %v3241 = vpop.f32.mrf.mxu0
    %v3242 = vadd.f32 %v2968, %v3241
    %v3243 = vpop.f32.mrf.mxu0
    %3244 = vmatprep.mubr.f32.mxu0 0.0
    %v3245 = vand.u32 %v2375, 4294901760
    %v3246 = vsub.f32 %v2375, %v3245
    %3247 = vmatmul.mubr.f32.gmra.mxu0 %v3246
    %v3248 = vpop.f32.mrf.mxu0
    %v3249 = vadd.f32 %v2974, %v3248
    %v3250 = vpop.f32.mrf.mxu0
    %3251 = vmatprep.mubr.f32.mxu0 0.0
    %v3252 = vand.u32 %v2378, 4294901760
    %v3253 = vsub.f32 %v2378, %v3252
    %3254 = vmatmul.mubr.f32.gmra.mxu0 %v3253
    %v3255 = vpop.f32.mrf.mxu0
    %v3256 = vadd.f32 %v2980, %v3255
    %v3257 = vpop.f32.mrf.mxu0
    %3258 = vmatprep.mubr.f32.mxu0 0.0
    %v3259 = vand.u32 %v2381, 4294901760
    %v3260 = vsub.f32 %v2381, %v3259
    %3261 = vmatmul.mubr.f32.gmra.mxu0 %v3260
    %v3262 = vpop.f32.mrf.mxu0
    %v3263 = vadd.f32 %v2986, %v3262
    %v3264 = vpop.f32.mrf.mxu0
    %3265 = vmatprep.mubr.f32.mxu0 0.0
    %v3266 = vand.u32 %v2384, 4294901760
    %v3267 = vsub.f32 %v2384, %v3266
    %3268 = vmatmul.mubr.f32.gmra.mxu0 %v3267
    %v3269 = vpop.f32.mrf.mxu0
    %v3270 = vadd.f32 %v2992, %v3269
    %v3271 = vpop.f32.mrf.mxu0
    %3272 = vmatprep.mubr.f32.mxu0 0.0
    %v3273 = vand.u32 %v2387, 4294901760
    %v3274 = vsub.f32 %v2387, %v3273
    %3275 = vmatmul.mubr.f32.gmra.mxu0 %v3274
    %v3276 = vpop.f32.mrf.mxu0
    %v3277 = vadd.f32 %v2998, %v3276
    %v3278 = vpop.f32.mrf.mxu0
    %3279 = vmatprep.mubr.f32.mxu0 0.0
    %v3280 = vand.u32 %v2390, 4294901760
    %v3281 = vsub.f32 %v2390, %v3280
    %3282 = vmatmul.mubr.f32.gmra.mxu0 %v3281
    %v3283 = vpop.f32.mrf.mxu0
    %v3284 = vadd.f32 %v3004, %v3283
    %v3285 = vpop.f32.mrf.mxu0
    %3286 = vmatprep.mubr.f32.mxu0 0.0
    %v3287 = vand.u32 %v2393, 4294901760
    %v3288 = vsub.f32 %v2393, %v3287
    %3289 = vmatmul.mubr.f32.gmra.mxu0 %v3288
    %v3290 = vpop.f32.mrf.mxu0
    %v3291 = vadd.f32 %v3010, %v3290
    %v3292 = vpop.f32.mrf.mxu0
    %3293 = vmatprep.mubr.f32.mxu0 0.0
    %v3294 = vand.u32 %v2396, 4294901760
    %v3295 = vsub.f32 %v2396, %v3294
    %3296 = vmatmul.mubr.f32.gmra.mxu0 %v3295
    %v3297 = vpop.f32.mrf.mxu0
    %v3298 = vadd.f32 %v3016, %v3297
    %v3299 = vpop.f32.mrf.mxu0
    %3300 = vmatprep.mubr.f32.mxu0 0.0
    %v3301 = vand.u32 %v2399, 4294901760
    %v3302 = vsub.f32 %v2399, %v3301
    %3303 = vmatmul.mubr.f32.gmra.mxu0 %v3302
    %v3304 = vpop.f32.mrf.mxu0
    %v3305 = vadd.f32 %v3022, %v3304
    %v3306 = vpop.f32.mrf.mxu0
    %3307 = vmatprep.mubr.f32.mxu0 0.0
    %v3308 = vand.u32 %v2402, 4294901760
    %v3309 = vsub.f32 %v2402, %v3308
    %3310 = vmatmul.mubr.f32.gmra.mxu0 %v3309
    %v3311 = vpop.f32.mrf.mxu0
    %v3312 = vadd.f32 %v3028, %v3311
    %v3313 = vpop.f32.mrf.mxu0
    %3314 = vmatprep.mubr.f32.mxu0 0.0
    %v3315 = vand.u32 %v2405, 4294901760
    %v3316 = vsub.f32 %v2405, %v3315
    %3317 = vmatmul.mubr.f32.gmra.mxu0 %v3316
    %v3318 = vpop.f32.mrf.mxu0
    %v3319 = vadd.f32 %v3034, %v3318
    %v3320 = vpop.f32.mrf.mxu0
    %3321 = vmatprep.mubr.f32.mxu0 0.0
    %v3322 = vand.u32 %v2408, 4294901760
    %v3323 = vsub.f32 %v2408, %v3322
    %3324 = vmatmul.mubr.f32.gmra.mxu0 %v3323
    %v3325 = vpop.f32.mrf.mxu0
    %v3326 = vadd.f32 %v3040, %v3325
    %v3327 = vpop.f32.mrf.mxu0
    %3328 = vmatprep.mubr.f32.mxu0 0.0
    %v3329 = vand.u32 %v2411, 4294901760
    %v3330 = vsub.f32 %v2411, %v3329
    %3331 = vmatmul.mubr.f32.gmra.mxu0 %v3330
    %v3332 = vpop.f32.mrf.mxu0
    %v3333 = vadd.f32 %v3046, %v3332
    %v3334 = vpop.f32.mrf.mxu0
    %3335 = vmatprep.mubr.f32.mxu0 0.0
    %v3336 = vand.u32 %v2414, 4294901760
    %v3337 = vsub.f32 %v2414, %v3336
    %3338 = vmatmul.mubr.f32.gmra.mxu0 %v3337
    %v3339 = vpop.f32.mrf.mxu0
    %v3340 = vadd.f32 %v3052, %v3339
    %v3341 = vpop.f32.mrf.mxu0
    %3342 = vmatprep.mubr.f32.mxu0 0.0
    %v3343 = vand.u32 %v2417, 4294901760
    %v3344 = vsub.f32 %v2417, %v3343
    %3345 = vmatmul.mubr.f32.gmra.mxu0 %v3344
    %v3346 = vpop.f32.mrf.mxu0
    %v3347 = vadd.f32 %v3058, %v3346
    %v3348 = vpop.f32.mrf.mxu0
    %3349 = vmatprep.mubr.f32.mxu0 0.0
    %v3350 = vand.u32 %v2420, 4294901760
    %v3351 = vsub.f32 %v2420, %v3350
    %3352 = vmatmul.mubr.f32.gmra.mxu0 %v3351
    %v3353 = vpop.f32.mrf.mxu0
    %v3354 = vadd.f32 %v3064, %v3353
    %v3355 = vpop.f32.mrf.mxu0
    %3356 = vmatprep.mubr.f32.mxu0 0.0
    %v3357 = vand.u32 %v2423, 4294901760
    %v3358 = vsub.f32 %v2423, %v3357
    %3359 = vmatmul.mubr.f32.gmra.mxu0 %v3358
    %v3360 = vpop.f32.mrf.mxu0
    %v3361 = vadd.f32 %v3070, %v3360
    %v3362 = vpop.f32.mrf.mxu0
    %3363 = vmatprep.mubr.f32.mxu0 0.0
    %v3364 = vand.u32 %v2426, 4294901760
    %v3365 = vsub.f32 %v2426, %v3364
    %3366 = vmatmul.mubr.f32.gmra.mxu0 %v3365
    %v3367 = vpop.f32.mrf.mxu0
    %v3368 = vadd.f32 %v3076, %v3367
    %v3369 = vpop.f32.mrf.mxu0
    %3370 = vmatprep.mubr.f32.mxu0 0.0
    %v3371 = vand.u32 %v2429, 4294901760
    %v3372 = vsub.f32 %v2429, %v3371
    %3373 = vmatmul.mubr.f32.gmra.mxu0 %v3372
    %v3374 = vpop.f32.mrf.mxu0
    %v3375 = vadd.f32 %v3082, %v3374
    %v3376 = vpop.f32.mrf.mxu0
    %3377 = vmatprep.mubr.f32.mxu0 0.0
    %v3378 = vand.u32 %v2432, 4294901760
    %v3379 = vsub.f32 %v2432, %v3378
    %3380 = vmatmul.mubr.f32.gmra.mxu0 %v3379
    %v3381 = vpop.f32.mrf.mxu0
    %v3382 = vadd.f32 %v3088, %v3381
    %v3383 = vpop.f32.mrf.mxu0
    %3384 = vmatprep.mubr.f32.mxu0 0.0
    %v3385 = vand.u32 %v2435, 4294901760
    %v3386 = vsub.f32 %v2435, %v3385
    %3387 = vmatmul.mubr.f32.gmra.mxu0 %v3386
    %v3388 = vpop.f32.mrf.mxu0
    %v3389 = vadd.f32 %v3094, %v3388
    %v3390 = vpop.f32.mrf.mxu0
    %3391 = vmatprep.mubr.f32.mxu0 0.0
    %v3392 = vand.u32 %v2438, 4294901760
    %v3393 = vsub.f32 %v2438, %v3392
    %3394 = vmatmul.mubr.f32.gmra.mxu0 %v3393
    %v3395 = vpop.f32.mrf.mxu0
    %v3396 = vadd.f32 %v3100, %v3395
    %v3397 = vpop.f32.mrf.mxu0
    %3398 = vmatprep.mubr.f32.mxu0 0.0
    %v3399 = vand.u32 %v2441, 4294901760
    %v3400 = vsub.f32 %v2441, %v3399
    %3401 = vmatmul.mubr.f32.gmra.mxu0 %v3400
    %v3402 = vpop.f32.mrf.mxu0
    %v3403 = vadd.f32 %v3106, %v3402
    %v3404 = vpop.f32.mrf.mxu0
    %3405 = vdwg.mxu0
    %3406 = vmatprep.subr.mxu0 0.0
    %3407 = vmatpush1.msra.mxu0 0.0
    %3408 = vmatprep.subr.mxu0 0.0
    %3409 = vmatpush1.msra.mxu0 0.0
    %3410 = vmatprep.subr.mxu0 0.0
    %3411 = vmatpush1.msra.mxu0 0.0
    %3412 = vmatprep.subr.mxu0 0.0
    %3413 = vmatpush1.msra.mxu0 0.0
    %3414 = vmatprep.subr.mxu0 0.0
    %3415 = vmatpush1.msra.mxu0 0.0
    %3416 = vmatprep.subr.mxu0 0.0
    %3417 = vmatpush1.msra.mxu0 0.0
    %3418 = vmatprep.subr.mxu0 0.0
    %3419 = vmatpush1.msra.mxu0 0.0
    %3420 = vmatprep.subr.mxu0 0.0
    %3421 = vmatpush1.msra.mxu0 0.0
    %3422 = vmatprep.subr.mxu0 0.0
    %3423 = vmatpush1.msra.mxu0 0.0
    %3424 = vmatprep.subr.mxu0 0.0
    %3425 = vmatpush1.msra.mxu0 0.0
    %3426 = vmatprep.subr.mxu0 0.0
    %3427 = vmatpush1.msra.mxu0 0.0
    %3428 = vmatprep.subr.mxu0 0.0
    %3429 = vmatpush1.msra.mxu0 0.0
    %3430 = vmatprep.subr.mxu0 0.0
    %v3431 = vand.u32 %v468, 4294901760
    %3432 = vmatpush1.msra.mxu0 %v3431
    %3433 = vmatprep.subr.mxu0 0.0
    %v3434 = vand.u32 %v467, 4294901760
    %3435 = vmatpush1.msra.mxu0 %v3434
    %3436 = vmatprep.subr.mxu0 0.0
    %v3437 = vand.u32 %v466, 4294901760
    %3438 = vmatpush1.msra.mxu0 %v3437
    %3439 = vmatprep.subr.mxu0 0.0
    %v3440 = vand.u32 %v465, 4294901760
    %3441 = vmatpush1.msra.mxu0 %v3440
    %3442 = vmatprep.subr.mxu0 0.0
    %3443 = vmatpush2.msra.mxu0 0.0
    %3444 = vmatprep.subr.mxu0 0.0
    %3445 = vmatpush2.msra.mxu0 0.0
    %3446 = vmatprep.subr.mxu0 0.0
    %3447 = vmatpush2.msra.mxu0 0.0
    %3448 = vmatprep.subr.mxu0 0.0
    %3449 = vmatpush2.msra.mxu0 0.0
    %3450 = vmatprep.subr.mxu0 0.0
    %3451 = vmatpush2.msra.mxu0 0.0
    %3452 = vmatprep.subr.mxu0 0.0
    %3453 = vmatpush2.msra.mxu0 0.0
    %3454 = vmatprep.subr.mxu0 0.0
    %3455 = vmatpush2.msra.mxu0 0.0
    %3456 = vmatprep.subr.mxu0 0.0
    %3457 = vmatpush2.msra.mxu0 0.0
    %3458 = vmatprep.subr.mxu0 0.0
    %3459 = vmatpush2.msra.mxu0 0.0
    %3460 = vmatprep.subr.mxu0 0.0
    %3461 = vmatpush2.msra.mxu0 0.0
    %3462 = vmatprep.subr.mxu0 0.0
    %3463 = vmatpush2.msra.mxu0 0.0
    %3464 = vmatprep.subr.mxu0 0.0
    %3465 = vmatpush2.msra.mxu0 0.0
    %3466 = vmatprep.subr.mxu0 0.0
    %3467 = vmatpush2.msra.mxu0 0.0
    %3468 = vmatprep.subr.mxu0 0.0
    %3469 = vmatpush2.msra.mxu0 0.0
    %3470 = vmatprep.subr.mxu0 0.0
    %3471 = vmatpush2.msra.mxu0 0.0
    %3472 = vmatprep.subr.mxu0 0.0
    %3473 = vmatpush2.msra.mxu0 0.0
    %3474 = vmatprep.mubr.f32.mxu0 0.0
    %v3475 = vand.u32 %v2348, 4294901760
    %v3476 = vsub.f32 %v2348, %v3475
    %v3477 = vand.u32 %v3476, 4294901760
    %3478 = vmatmul.mubr.f32.gmra.mxu0 %v3477
    %v3479 = vpop.f32.mrf.mxu0
    %v3480 = vadd.f32 %v3186, %v3479
    %v3481 = vpop.f32.mrf.mxu0
    %3482 = vmatprep.mubr.f32.mxu0 0.0
    %v3483 = vand.u32 %v2351, 4294901760
    %v3484 = vsub.f32 %v2351, %v3483
    %v3485 = vand.u32 %v3484, 4294901760
    %3486 = vmatmul.mubr.f32.gmra.mxu0 %v3485
    %v3487 = vpop.f32.mrf.mxu0
    %v3488 = vadd.f32 %v3193, %v3487
    %v3489 = vpop.f32.mrf.mxu0
    %3490 = vmatprep.mubr.f32.mxu0 0.0
    %v3491 = vand.u32 %v2354, 4294901760
    %v3492 = vsub.f32 %v2354, %v3491
    %v3493 = vand.u32 %v3492, 4294901760
    %3494 = vmatmul.mubr.f32.gmra.mxu0 %v3493
    %v3495 = vpop.f32.mrf.mxu0
    %v3496 = vadd.f32 %v3200, %v3495
    %v3497 = vpop.f32.mrf.mxu0
    %3498 = vmatprep.mubr.f32.mxu0 0.0
    %v3499 = vand.u32 %v2357, 4294901760
    %v3500 = vsub.f32 %v2357, %v3499
    %v3501 = vand.u32 %v3500, 4294901760
    %3502 = vmatmul.mubr.f32.gmra.mxu0 %v3501
    %v3503 = vpop.f32.mrf.mxu0
    %v3504 = vadd.f32 %v3207, %v3503
    %v3505 = vpop.f32.mrf.mxu0
    %3506 = vmatprep.mubr.f32.mxu0 0.0
    %v3507 = vand.u32 %v2360, 4294901760
    %v3508 = vsub.f32 %v2360, %v3507
    %v3509 = vand.u32 %v3508, 4294901760
    %3510 = vmatmul.mubr.f32.gmra.mxu0 %v3509
    %v3511 = vpop.f32.mrf.mxu0
    %v3512 = vadd.f32 %v3214, %v3511
    %v3513 = vpop.f32.mrf.mxu0
    %3514 = vmatprep.mubr.f32.mxu0 0.0
    %v3515 = vand.u32 %v2363, 4294901760
    %v3516 = vsub.f32 %v2363, %v3515
    %v3517 = vand.u32 %v3516, 4294901760
    %3518 = vmatmul.mubr.f32.gmra.mxu0 %v3517
    %v3519 = vpop.f32.mrf.mxu0
    %v3520 = vadd.f32 %v3221, %v3519
    %v3521 = vpop.f32.mrf.mxu0
    %3522 = vmatprep.mubr.f32.mxu0 0.0
    %v3523 = vand.u32 %v2366, 4294901760
    %v3524 = vsub.f32 %v2366, %v3523
    %v3525 = vand.u32 %v3524, 4294901760
    %3526 = vmatmul.mubr.f32.gmra.mxu0 %v3525
    %v3527 = vpop.f32.mrf.mxu0
    %v3528 = vadd.f32 %v3228, %v3527
    %v3529 = vpop.f32.mrf.mxu0
    %3530 = vmatprep.mubr.f32.mxu0 0.0
    %v3531 = vand.u32 %v2369, 4294901760
    %v3532 = vsub.f32 %v2369, %v3531
    %v3533 = vand.u32 %v3532, 4294901760
    %3534 = vmatmul.mubr.f32.gmra.mxu0 %v3533
    %v3535 = vpop.f32.mrf.mxu0
    %v3536 = vadd.f32 %v3235, %v3535
    %v3537 = vpop.f32.mrf.mxu0
    %3538 = vmatprep.mubr.f32.mxu0 0.0
    %v3539 = vand.u32 %v2372, 4294901760
    %v3540 = vsub.f32 %v2372, %v3539
    %v3541 = vand.u32 %v3540, 4294901760
    %3542 = vmatmul.mubr.f32.gmra.mxu0 %v3541
    %v3543 = vpop.f32.mrf.mxu0
    %v3544 = vadd.f32 %v3242, %v3543
    %v3545 = vpop.f32.mrf.mxu0
    %3546 = vmatprep.mubr.f32.mxu0 0.0
    %v3547 = vand.u32 %v2375, 4294901760
    %v3548 = vsub.f32 %v2375, %v3547
    %v3549 = vand.u32 %v3548, 4294901760
    %3550 = vmatmul.mubr.f32.gmra.mxu0 %v3549
    %v3551 = vpop.f32.mrf.mxu0
    %v3552 = vadd.f32 %v3249, %v3551
    %v3553 = vpop.f32.mrf.mxu0
    %3554 = vmatprep.mubr.f32.mxu0 0.0
    %v3555 = vand.u32 %v2378, 4294901760
    %v3556 = vsub.f32 %v2378, %v3555
    %v3557 = vand.u32 %v3556, 4294901760
    %3558 = vmatmul.mubr.f32.gmra.mxu0 %v3557
    %v3559 = vpop.f32.mrf.mxu0
    %v3560 = vadd.f32 %v3256, %v3559
    %v3561 = vpop.f32.mrf.mxu0
    %3562 = vmatprep.mubr.f32.mxu0 0.0
    %v3563 = vand.u32 %v2381, 4294901760
    %v3564 = vsub.f32 %v2381, %v3563
    %v3565 = vand.u32 %v3564, 4294901760
    %3566 = vmatmul.mubr.f32.gmra.mxu0 %v3565
    %v3567 = vpop.f32.mrf.mxu0
    %v3568 = vadd.f32 %v3263, %v3567
    %v3569 = vpop.f32.mrf.mxu0
    %3570 = vmatprep.mubr.f32.mxu0 0.0
    %v3571 = vand.u32 %v2384, 4294901760
    %v3572 = vsub.f32 %v2384, %v3571
    %v3573 = vand.u32 %v3572, 4294901760
    %3574 = vmatmul.mubr.f32.gmra.mxu0 %v3573
    %v3575 = vpop.f32.mrf.mxu0
    %v3576 = vadd.f32 %v3270, %v3575
    %v3577 = vpop.f32.mrf.mxu0
    %3578 = vmatprep.mubr.f32.mxu0 0.0
    %v3579 = vand.u32 %v2387, 4294901760
    %v3580 = vsub.f32 %v2387, %v3579
    %v3581 = vand.u32 %v3580, 4294901760
    %3582 = vmatmul.mubr.f32.gmra.mxu0 %v3581
    %v3583 = vpop.f32.mrf.mxu0
    %v3584 = vadd.f32 %v3277, %v3583
    %v3585 = vpop.f32.mrf.mxu0
    %3586 = vmatprep.mubr.f32.mxu0 0.0
    %v3587 = vand.u32 %v2390, 4294901760
    %v3588 = vsub.f32 %v2390, %v3587
    %v3589 = vand.u32 %v3588, 4294901760
    %3590 = vmatmul.mubr.f32.gmra.mxu0 %v3589
    %v3591 = vpop.f32.mrf.mxu0
    %v3592 = vadd.f32 %v3284, %v3591
    %v3593 = vpop.f32.mrf.mxu0
    %3594 = vmatprep.mubr.f32.mxu0 0.0
    %v3595 = vand.u32 %v2393, 4294901760
    %v3596 = vsub.f32 %v2393, %v3595
    %v3597 = vand.u32 %v3596, 4294901760
    %3598 = vmatmul.mubr.f32.gmra.mxu0 %v3597
    %v3599 = vpop.f32.mrf.mxu0
    %v3600 = vadd.f32 %v3291, %v3599
    %v3601 = vpop.f32.mrf.mxu0
    %3602 = vmatprep.mubr.f32.mxu0 0.0
    %v3603 = vand.u32 %v2396, 4294901760
    %v3604 = vsub.f32 %v2396, %v3603
    %v3605 = vand.u32 %v3604, 4294901760
    %3606 = vmatmul.mubr.f32.gmra.mxu0 %v3605
    %v3607 = vpop.f32.mrf.mxu0
    %v3608 = vadd.f32 %v3298, %v3607
    %v3609 = vpop.f32.mrf.mxu0
    %3610 = vmatprep.mubr.f32.mxu0 0.0
    %v3611 = vand.u32 %v2399, 4294901760
    %v3612 = vsub.f32 %v2399, %v3611
    %v3613 = vand.u32 %v3612, 4294901760
    %3614 = vmatmul.mubr.f32.gmra.mxu0 %v3613
    %v3615 = vpop.f32.mrf.mxu0
    %v3616 = vadd.f32 %v3305, %v3615
    %v3617 = vpop.f32.mrf.mxu0
    %3618 = vmatprep.mubr.f32.mxu0 0.0
    %v3619 = vand.u32 %v2402, 4294901760
    %v3620 = vsub.f32 %v2402, %v3619
    %v3621 = vand.u32 %v3620, 4294901760
    %3622 = vmatmul.mubr.f32.gmra.mxu0 %v3621
    %v3623 = vpop.f32.mrf.mxu0
    %v3624 = vadd.f32 %v3312, %v3623
    %v3625 = vpop.f32.mrf.mxu0
    %3626 = vmatprep.mubr.f32.mxu0 0.0
    %v3627 = vand.u32 %v2405, 4294901760
    %v3628 = vsub.f32 %v2405, %v3627
    %v3629 = vand.u32 %v3628, 4294901760
    %3630 = vmatmul.mubr.f32.gmra.mxu0 %v3629
    %v3631 = vpop.f32.mrf.mxu0
    %v3632 = vadd.f32 %v3319, %v3631
    %v3633 = vpop.f32.mrf.mxu0
    %3634 = vmatprep.mubr.f32.mxu0 0.0
    %v3635 = vand.u32 %v2408, 4294901760
    %v3636 = vsub.f32 %v2408, %v3635
    %v3637 = vand.u32 %v3636, 4294901760
    %3638 = vmatmul.mubr.f32.gmra.mxu0 %v3637
    %v3639 = vpop.f32.mrf.mxu0
    %v3640 = vadd.f32 %v3326, %v3639
    %v3641 = vpop.f32.mrf.mxu0
    %3642 = vmatprep.mubr.f32.mxu0 0.0
    %v3643 = vand.u32 %v2411, 4294901760
    %v3644 = vsub.f32 %v2411, %v3643
    %v3645 = vand.u32 %v3644, 4294901760
    %3646 = vmatmul.mubr.f32.gmra.mxu0 %v3645
    %v3647 = vpop.f32.mrf.mxu0
    %v3648 = vadd.f32 %v3333, %v3647
    %v3649 = vpop.f32.mrf.mxu0
    %3650 = vmatprep.mubr.f32.mxu0 0.0
    %v3651 = vand.u32 %v2414, 4294901760
    %v3652 = vsub.f32 %v2414, %v3651
    %v3653 = vand.u32 %v3652, 4294901760
    %3654 = vmatmul.mubr.f32.gmra.mxu0 %v3653
    %v3655 = vpop.f32.mrf.mxu0
    %v3656 = vadd.f32 %v3340, %v3655
    %v3657 = vpop.f32.mrf.mxu0
    %3658 = vmatprep.mubr.f32.mxu0 0.0
    %v3659 = vand.u32 %v2417, 4294901760
    %v3660 = vsub.f32 %v2417, %v3659
    %v3661 = vand.u32 %v3660, 4294901760
    %3662 = vmatmul.mubr.f32.gmra.mxu0 %v3661
    %v3663 = vpop.f32.mrf.mxu0
    %v3664 = vadd.f32 %v3347, %v3663
    %v3665 = vpop.f32.mrf.mxu0
    %3666 = vmatprep.mubr.f32.mxu0 0.0
    %v3667 = vand.u32 %v2420, 4294901760
    %v3668 = vsub.f32 %v2420, %v3667
    %v3669 = vand.u32 %v3668, 4294901760
    %3670 = vmatmul.mubr.f32.gmra.mxu0 %v3669
    %v3671 = vpop.f32.mrf.mxu0
    %v3672 = vadd.f32 %v3354, %v3671
    %v3673 = vpop.f32.mrf.mxu0
    %3674 = vmatprep.mubr.f32.mxu0 0.0
    %v3675 = vand.u32 %v2423, 4294901760
    %v3676 = vsub.f32 %v2423, %v3675
    %v3677 = vand.u32 %v3676, 4294901760
    %3678 = vmatmul.mubr.f32.gmra.mxu0 %v3677
    %v3679 = vpop.f32.mrf.mxu0
    %v3680 = vadd.f32 %v3361, %v3679
    %v3681 = vpop.f32.mrf.mxu0
    %3682 = vmatprep.mubr.f32.mxu0 0.0
    %v3683 = vand.u32 %v2426, 4294901760
    %v3684 = vsub.f32 %v2426, %v3683
    %v3685 = vand.u32 %v3684, 4294901760
    %3686 = vmatmul.mubr.f32.gmra.mxu0 %v3685
    %v3687 = vpop.f32.mrf.mxu0
    %v3688 = vadd.f32 %v3368, %v3687
    %v3689 = vpop.f32.mrf.mxu0
    %3690 = vmatprep.mubr.f32.mxu0 0.0
    %v3691 = vand.u32 %v2429, 4294901760
    %v3692 = vsub.f32 %v2429, %v3691
    %v3693 = vand.u32 %v3692, 4294901760
    %3694 = vmatmul.mubr.f32.gmra.mxu0 %v3693
    %v3695 = vpop.f32.mrf.mxu0
    %v3696 = vadd.f32 %v3375, %v3695
    %v3697 = vpop.f32.mrf.mxu0
    %3698 = vmatprep.mubr.f32.mxu0 0.0
    %v3699 = vand.u32 %v2432, 4294901760
    %v3700 = vsub.f32 %v2432, %v3699
    %v3701 = vand.u32 %v3700, 4294901760
    %3702 = vmatmul.mubr.f32.gmra.mxu0 %v3701
    %v3703 = vpop.f32.mrf.mxu0
    %v3704 = vadd.f32 %v3382, %v3703
    %v3705 = vpop.f32.mrf.mxu0
    %3706 = vmatprep.mubr.f32.mxu0 0.0
    %v3707 = vand.u32 %v2435, 4294901760
    %v3708 = vsub.f32 %v2435, %v3707
    %v3709 = vand.u32 %v3708, 4294901760
    %3710 = vmatmul.mubr.f32.gmra.mxu0 %v3709
    %v3711 = vpop.f32.mrf.mxu0
    %v3712 = vadd.f32 %v3389, %v3711
    %v3713 = vpop.f32.mrf.mxu0
    %3714 = vmatprep.mubr.f32.mxu0 0.0
    %v3715 = vand.u32 %v2438, 4294901760
    %v3716 = vsub.f32 %v2438, %v3715
    %v3717 = vand.u32 %v3716, 4294901760
    %3718 = vmatmul.mubr.f32.gmra.mxu0 %v3717
    %v3719 = vpop.f32.mrf.mxu0
    %v3720 = vadd.f32 %v3396, %v3719
    %v3721 = vpop.f32.mrf.mxu0
    %3722 = vmatprep.mubr.f32.mxu0 0.0
    %v3723 = vand.u32 %v2441, 4294901760
    %v3724 = vsub.f32 %v2441, %v3723
    %v3725 = vand.u32 %v3724, 4294901760
    %3726 = vmatmul.mubr.f32.gmra.mxu0 %v3725
    %v3727 = vpop.f32.mrf.mxu0
    %v3728 = vadd.f32 %v3403, %v3727
    %v3729 = vpop.f32.mrf.mxu0
    %3730 = vdwg.mxu0
    %3731 = vmatprep.subr.mxu0 0.0
    %3732 = vmatpush1.msra.mxu0 0.0
    %3733 = vmatprep.subr.mxu0 0.0
    %3734 = vmatpush1.msra.mxu0 0.0
    %3735 = vmatprep.subr.mxu0 0.0
    %3736 = vmatpush1.msra.mxu0 0.0
    %3737 = vmatprep.subr.mxu0 0.0
    %3738 = vmatpush1.msra.mxu0 0.0
    %3739 = vmatprep.subr.mxu0 0.0
    %3740 = vmatpush1.msra.mxu0 0.0
    %3741 = vmatprep.subr.mxu0 0.0
    %3742 = vmatpush1.msra.mxu0 0.0
    %3743 = vmatprep.subr.mxu0 0.0
    %3744 = vmatpush1.msra.mxu0 0.0
    %3745 = vmatprep.subr.mxu0 0.0
    %3746 = vmatpush1.msra.mxu0 0.0
    %3747 = vmatprep.subr.mxu0 0.0
    %3748 = vmatpush1.msra.mxu0 0.0
    %3749 = vmatprep.subr.mxu0 0.0
    %3750 = vmatpush1.msra.mxu0 0.0
    %3751 = vmatprep.subr.mxu0 0.0
    %3752 = vmatpush1.msra.mxu0 0.0
    %3753 = vmatprep.subr.mxu0 0.0
    %3754 = vmatpush1.msra.mxu0 0.0
    %3755 = vmatprep.subr.mxu0 0.0
    %v3756 = vand.u32 %v468, 4294901760
    %v3757 = vsub.f32 %v468, %v3756
    %v3758 = vand.u32 %v3757, 4294901760
    %3759 = vmatpush1.msra.mxu0 %v3758
    %3760 = vmatprep.subr.mxu0 0.0
    %v3761 = vand.u32 %v467, 4294901760
    %v3762 = vsub.f32 %v467, %v3761
    %v3763 = vand.u32 %v3762, 4294901760
    %3764 = vmatpush1.msra.mxu0 %v3763
    %3765 = vmatprep.subr.mxu0 0.0
    %v3766 = vand.u32 %v466, 4294901760
    %v3767 = vsub.f32 %v466, %v3766
    %v3768 = vand.u32 %v3767, 4294901760
    %3769 = vmatpush1.msra.mxu0 %v3768
    %3770 = vmatprep.subr.mxu0 0.0
    %v3771 = vand.u32 %v465, 4294901760
    %v3772 = vsub.f32 %v465, %v3771
    %v3773 = vand.u32 %v3772, 4294901760
    %3774 = vmatpush1.msra.mxu0 %v3773
    %3775 = vmatprep.subr.mxu0 0.0
    %3776 = vmatpush2.msra.mxu0 0.0
    %3777 = vmatprep.subr.mxu0 0.0
    %3778 = vmatpush2.msra.mxu0 0.0
    %3779 = vmatprep.subr.mxu0 0.0
    %3780 = vmatpush2.msra.mxu0 0.0
    %3781 = vmatprep.subr.mxu0 0.0
    %3782 = vmatpush2.msra.mxu0 0.0
    %3783 = vmatprep.subr.mxu0 0.0
    %3784 = vmatpush2.msra.mxu0 0.0
    %3785 = vmatprep.subr.mxu0 0.0
    %3786 = vmatpush2.msra.mxu0 0.0
    %3787 = vmatprep.subr.mxu0 0.0
    %3788 = vmatpush2.msra.mxu0 0.0
    %3789 = vmatprep.subr.mxu0 0.0
    %3790 = vmatpush2.msra.mxu0 0.0
    %3791 = vmatprep.subr.mxu0 0.0
    %3792 = vmatpush2.msra.mxu0 0.0
    %3793 = vmatprep.subr.mxu0 0.0
    %3794 = vmatpush2.msra.mxu0 0.0
    %3795 = vmatprep.subr.mxu0 0.0
    %3796 = vmatpush2.msra.mxu0 0.0
    %3797 = vmatprep.subr.mxu0 0.0
    %3798 = vmatpush2.msra.mxu0 0.0
    %3799 = vmatprep.subr.mxu0 0.0
    %3800 = vmatpush2.msra.mxu0 0.0
    %3801 = vmatprep.subr.mxu0 0.0
    %3802 = vmatpush2.msra.mxu0 0.0
    %3803 = vmatprep.subr.mxu0 0.0
    %3804 = vmatpush2.msra.mxu0 0.0
    %3805 = vmatprep.subr.mxu0 0.0
    %3806 = vmatpush2.msra.mxu0 0.0
    %3807 = vmatprep.mubr.f32.mxu0 0.0
    %v3808 = vand.u32 %v2348, 4294901760
    %3809 = vmatmul.mubr.f32.gmra.mxu0 %v3808
    %v3810 = vpop.f32.mrf.mxu0
    %v3811 = vadd.f32 %v3480, %v3810
    %v3812 = vpop.f32.mrf.mxu0
    %3813 = vmatprep.mubr.f32.mxu0 0.0
    %v3814 = vand.u32 %v2351, 4294901760
    %3815 = vmatmul.mubr.f32.gmra.mxu0 %v3814
    %v3816 = vpop.f32.mrf.mxu0
    %v3817 = vadd.f32 %v3488, %v3816
    %v3818 = vpop.f32.mrf.mxu0
    %3819 = vmatprep.mubr.f32.mxu0 0.0
    %v3820 = vand.u32 %v2354, 4294901760
    %3821 = vmatmul.mubr.f32.gmra.mxu0 %v3820
    %v3822 = vpop.f32.mrf.mxu0
    %v3823 = vadd.f32 %v3496, %v3822
    %v3824 = vpop.f32.mrf.mxu0
    %3825 = vmatprep.mubr.f32.mxu0 0.0
    %v3826 = vand.u32 %v2357, 4294901760
    %3827 = vmatmul.mubr.f32.gmra.mxu0 %v3826
    %v3828 = vpop.f32.mrf.mxu0
    %v3829 = vadd.f32 %v3504, %v3828
    %v3830 = vpop.f32.mrf.mxu0
    %3831 = vmatprep.mubr.f32.mxu0 0.0
    %v3832 = vand.u32 %v2360, 4294901760
    %3833 = vmatmul.mubr.f32.gmra.mxu0 %v3832
    %v3834 = vpop.f32.mrf.mxu0
    %v3835 = vadd.f32 %v3512, %v3834
    %v3836 = vpop.f32.mrf.mxu0
    %3837 = vmatprep.mubr.f32.mxu0 0.0
    %v3838 = vand.u32 %v2363, 4294901760
    %3839 = vmatmul.mubr.f32.gmra.mxu0 %v3838
    %v3840 = vpop.f32.mrf.mxu0
    %v3841 = vadd.f32 %v3520, %v3840
    %v3842 = vpop.f32.mrf.mxu0
    %3843 = vmatprep.mubr.f32.mxu0 0.0
    %v3844 = vand.u32 %v2366, 4294901760
    %3845 = vmatmul.mubr.f32.gmra.mxu0 %v3844
    %v3846 = vpop.f32.mrf.mxu0
    %v3847 = vadd.f32 %v3528, %v3846
    %v3848 = vpop.f32.mrf.mxu0
    %3849 = vmatprep.mubr.f32.mxu0 0.0
    %v3850 = vand.u32 %v2369, 4294901760
    %3851 = vmatmul.mubr.f32.gmra.mxu0 %v3850
    %v3852 = vpop.f32.mrf.mxu0
    %v3853 = vadd.f32 %v3536, %v3852
    %v3854 = vpop.f32.mrf.mxu0
    %3855 = vmatprep.mubr.f32.mxu0 0.0
    %v3856 = vand.u32 %v2372, 4294901760
    %3857 = vmatmul.mubr.f32.gmra.mxu0 %v3856
    %v3858 = vpop.f32.mrf.mxu0
    %v3859 = vadd.f32 %v3544, %v3858
    %v3860 = vpop.f32.mrf.mxu0
    %3861 = vmatprep.mubr.f32.mxu0 0.0
    %v3862 = vand.u32 %v2375, 4294901760
    %3863 = vmatmul.mubr.f32.gmra.mxu0 %v3862
    %v3864 = vpop.f32.mrf.mxu0
    %v3865 = vadd.f32 %v3552, %v3864
    %v3866 = vpop.f32.mrf.mxu0
    %3867 = vmatprep.mubr.f32.mxu0 0.0
    %v3868 = vand.u32 %v2378, 4294901760
    %3869 = vmatmul.mubr.f32.gmra.mxu0 %v3868
    %v3870 = vpop.f32.mrf.mxu0
    %v3871 = vadd.f32 %v3560, %v3870
    %v3872 = vpop.f32.mrf.mxu0
    %3873 = vmatprep.mubr.f32.mxu0 0.0
    %v3874 = vand.u32 %v2381, 4294901760
    %3875 = vmatmul.mubr.f32.gmra.mxu0 %v3874
    %v3876 = vpop.f32.mrf.mxu0
    %v3877 = vadd.f32 %v3568, %v3876
    %v3878 = vpop.f32.mrf.mxu0
    %3879 = vmatprep.mubr.f32.mxu0 0.0
    %v3880 = vand.u32 %v2384, 4294901760
    %3881 = vmatmul.mubr.f32.gmra.mxu0 %v3880
    %v3882 = vpop.f32.mrf.mxu0
    %v3883 = vadd.f32 %v3576, %v3882
    %v3884 = vpop.f32.mrf.mxu0
    %3885 = vmatprep.mubr.f32.mxu0 0.0
    %v3886 = vand.u32 %v2387, 4294901760
    %3887 = vmatmul.mubr.f32.gmra.mxu0 %v3886
    %v3888 = vpop.f32.mrf.mxu0
    %v3889 = vadd.f32 %v3584, %v3888
    %v3890 = vpop.f32.mrf.mxu0
    %3891 = vmatprep.mubr.f32.mxu0 0.0
    %v3892 = vand.u32 %v2390, 4294901760
    %3893 = vmatmul.mubr.f32.gmra.mxu0 %v3892
    %v3894 = vpop.f32.mrf.mxu0
    %v3895 = vadd.f32 %v3592, %v3894
    %v3896 = vpop.f32.mrf.mxu0
    %3897 = vmatprep.mubr.f32.mxu0 0.0
    %v3898 = vand.u32 %v2393, 4294901760
    %3899 = vmatmul.mubr.f32.gmra.mxu0 %v3898
    %v3900 = vpop.f32.mrf.mxu0
    %v3901 = vadd.f32 %v3600, %v3900
    %v3902 = vpop.f32.mrf.mxu0
    %3903 = vmatprep.mubr.f32.mxu0 0.0
    %v3904 = vand.u32 %v2396, 4294901760
    %3905 = vmatmul.mubr.f32.gmra.mxu0 %v3904
    %v3906 = vpop.f32.mrf.mxu0
    %v3907 = vadd.f32 %v3608, %v3906
    %v3908 = vpop.f32.mrf.mxu0
    %3909 = vmatprep.mubr.f32.mxu0 0.0
    %v3910 = vand.u32 %v2399, 4294901760
    %3911 = vmatmul.mubr.f32.gmra.mxu0 %v3910
    %v3912 = vpop.f32.mrf.mxu0
    %v3913 = vadd.f32 %v3616, %v3912
    %v3914 = vpop.f32.mrf.mxu0
    %3915 = vmatprep.mubr.f32.mxu0 0.0
    %v3916 = vand.u32 %v2402, 4294901760
    %3917 = vmatmul.mubr.f32.gmra.mxu0 %v3916
    %v3918 = vpop.f32.mrf.mxu0
    %v3919 = vadd.f32 %v3624, %v3918
    %v3920 = vpop.f32.mrf.mxu0
    %3921 = vmatprep.mubr.f32.mxu0 0.0
    %v3922 = vand.u32 %v2405, 4294901760
    %3923 = vmatmul.mubr.f32.gmra.mxu0 %v3922
    %v3924 = vpop.f32.mrf.mxu0
    %v3925 = vadd.f32 %v3632, %v3924
    %v3926 = vpop.f32.mrf.mxu0
    %3927 = vmatprep.mubr.f32.mxu0 0.0
    %v3928 = vand.u32 %v2408, 4294901760
    %3929 = vmatmul.mubr.f32.gmra.mxu0 %v3928
    %v3930 = vpop.f32.mrf.mxu0
    %v3931 = vadd.f32 %v3640, %v3930
    %v3932 = vpop.f32.mrf.mxu0
    %3933 = vmatprep.mubr.f32.mxu0 0.0
    %v3934 = vand.u32 %v2411, 4294901760
    %3935 = vmatmul.mubr.f32.gmra.mxu0 %v3934
    %v3936 = vpop.f32.mrf.mxu0
    %v3937 = vadd.f32 %v3648, %v3936
    %v3938 = vpop.f32.mrf.mxu0
    %3939 = vmatprep.mubr.f32.mxu0 0.0
    %v3940 = vand.u32 %v2414, 4294901760
    %3941 = vmatmul.mubr.f32.gmra.mxu0 %v3940
    %v3942 = vpop.f32.mrf.mxu0
    %v3943 = vadd.f32 %v3656, %v3942
    %v3944 = vpop.f32.mrf.mxu0
    %3945 = vmatprep.mubr.f32.mxu0 0.0
    %v3946 = vand.u32 %v2417, 4294901760
    %3947 = vmatmul.mubr.f32.gmra.mxu0 %v3946
    %v3948 = vpop.f32.mrf.mxu0
    %v3949 = vadd.f32 %v3664, %v3948
    %v3950 = vpop.f32.mrf.mxu0
    %3951 = vmatprep.mubr.f32.mxu0 0.0
    %v3952 = vand.u32 %v2420, 4294901760
    %3953 = vmatmul.mubr.f32.gmra.mxu0 %v3952
    %v3954 = vpop.f32.mrf.mxu0
    %v3955 = vadd.f32 %v3672, %v3954
    %v3956 = vpop.f32.mrf.mxu0
    %3957 = vmatprep.mubr.f32.mxu0 0.0
    %v3958 = vand.u32 %v2423, 4294901760
    %3959 = vmatmul.mubr.f32.gmra.mxu0 %v3958
    %v3960 = vpop.f32.mrf.mxu0
    %v3961 = vadd.f32 %v3680, %v3960
    %v3962 = vpop.f32.mrf.mxu0
    %3963 = vmatprep.mubr.f32.mxu0 0.0
    %v3964 = vand.u32 %v2426, 4294901760
    %3965 = vmatmul.mubr.f32.gmra.mxu0 %v3964
    %v3966 = vpop.f32.mrf.mxu0
    %v3967 = vadd.f32 %v3688, %v3966
    %v3968 = vpop.f32.mrf.mxu0
    %3969 = vmatprep.mubr.f32.mxu0 0.0
    %v3970 = vand.u32 %v2429, 4294901760
    %3971 = vmatmul.mubr.f32.gmra.mxu0 %v3970
    %v3972 = vpop.f32.mrf.mxu0
    %v3973 = vadd.f32 %v3696, %v3972
    %v3974 = vpop.f32.mrf.mxu0
    %3975 = vmatprep.mubr.f32.mxu0 0.0
    %v3976 = vand.u32 %v2432, 4294901760
    %3977 = vmatmul.mubr.f32.gmra.mxu0 %v3976
    %v3978 = vpop.f32.mrf.mxu0
    %v3979 = vadd.f32 %v3704, %v3978
    %v3980 = vpop.f32.mrf.mxu0
    %3981 = vmatprep.mubr.f32.mxu0 0.0
    %v3982 = vand.u32 %v2435, 4294901760
    %3983 = vmatmul.mubr.f32.gmra.mxu0 %v3982
    %v3984 = vpop.f32.mrf.mxu0
    %v3985 = vadd.f32 %v3712, %v3984
    %v3986 = vpop.f32.mrf.mxu0
    %3987 = vmatprep.mubr.f32.mxu0 0.0
    %v3988 = vand.u32 %v2438, 4294901760
    %3989 = vmatmul.mubr.f32.gmra.mxu0 %v3988
    %v3990 = vpop.f32.mrf.mxu0
    %v3991 = vadd.f32 %v3720, %v3990
    %v3992 = vpop.f32.mrf.mxu0
    %3993 = vmatprep.mubr.f32.mxu0 0.0
    %v3994 = vand.u32 %v2441, 4294901760
    %3995 = vmatmul.mubr.f32.gmra.mxu0 %v3994
    %v3996 = vpop.f32.mrf.mxu0
    %v3997 = vadd.f32 %v3728, %v3996
    %v3998 = vpop.f32.mrf.mxu0
    %3999 = vdwg.mxu0
    %4000 = vmatprep.subr.mxu0 0.0
    %4001 = vmatpush1.msra.mxu0 0.0
    %4002 = vmatprep.subr.mxu0 0.0
    %4003 = vmatpush1.msra.mxu0 0.0
    %4004 = vmatprep.subr.mxu0 0.0
    %4005 = vmatpush1.msra.mxu0 0.0
    %4006 = vmatprep.subr.mxu0 0.0
    %4007 = vmatpush1.msra.mxu0 0.0
    %4008 = vmatprep.subr.mxu0 0.0
    %4009 = vmatpush1.msra.mxu0 0.0
    %4010 = vmatprep.subr.mxu0 0.0
    %4011 = vmatpush1.msra.mxu0 0.0
    %4012 = vmatprep.subr.mxu0 0.0
    %4013 = vmatpush1.msra.mxu0 0.0
    %4014 = vmatprep.subr.mxu0 0.0
    %4015 = vmatpush1.msra.mxu0 0.0
    %4016 = vmatprep.subr.mxu0 0.0
    %4017 = vmatpush1.msra.mxu0 0.0
    %4018 = vmatprep.subr.mxu0 0.0
    %4019 = vmatpush1.msra.mxu0 0.0
    %4020 = vmatprep.subr.mxu0 0.0
    %4021 = vmatpush1.msra.mxu0 0.0
    %4022 = vmatprep.subr.mxu0 0.0
    %4023 = vmatpush1.msra.mxu0 0.0
    %4024 = vmatprep.subr.mxu0 0.0
    %v4025 = vand.u32 %v468, 4294901760
    %4026 = vmatpush1.msra.mxu0 %v4025
    %4027 = vmatprep.subr.mxu0 0.0
    %v4028 = vand.u32 %v467, 4294901760
    %4029 = vmatpush1.msra.mxu0 %v4028
    %4030 = vmatprep.subr.mxu0 0.0
    %v4031 = vand.u32 %v466, 4294901760
    %4032 = vmatpush1.msra.mxu0 %v4031
    %4033 = vmatprep.subr.mxu0 0.0
    %v4034 = vand.u32 %v465, 4294901760
    %4035 = vmatpush1.msra.mxu0 %v4034
    %4036 = vmatprep.subr.mxu0 0.0
    %4037 = vmatpush2.msra.mxu0 0.0
    %4038 = vmatprep.subr.mxu0 0.0
    %4039 = vmatpush2.msra.mxu0 0.0
    %4040 = vmatprep.subr.mxu0 0.0
    %4041 = vmatpush2.msra.mxu0 0.0
    %4042 = vmatprep.subr.mxu0 0.0
    %4043 = vmatpush2.msra.mxu0 0.0
    %4044 = vmatprep.subr.mxu0 0.0
    %4045 = vmatpush2.msra.mxu0 0.0
    %4046 = vmatprep.subr.mxu0 0.0
    %4047 = vmatpush2.msra.mxu0 0.0
    %4048 = vmatprep.subr.mxu0 0.0
    %4049 = vmatpush2.msra.mxu0 0.0
    %4050 = vmatprep.subr.mxu0 0.0
    %4051 = vmatpush2.msra.mxu0 0.0
    %4052 = vmatprep.subr.mxu0 0.0
    %4053 = vmatpush2.msra.mxu0 0.0
    %4054 = vmatprep.subr.mxu0 0.0
    %4055 = vmatpush2.msra.mxu0 0.0
    %4056 = vmatprep.subr.mxu0 0.0
    %4057 = vmatpush2.msra.mxu0 0.0
    %4058 = vmatprep.subr.mxu0 0.0
    %4059 = vmatpush2.msra.mxu0 0.0
    %4060 = vmatprep.subr.mxu0 0.0
    %4061 = vmatpush2.msra.mxu0 0.0
    %4062 = vmatprep.subr.mxu0 0.0
    %4063 = vmatpush2.msra.mxu0 0.0
    %4064 = vmatprep.subr.mxu0 0.0
    %4065 = vmatpush2.msra.mxu0 0.0
    %4066 = vmatprep.subr.mxu0 0.0
    %4067 = vmatpush2.msra.mxu0 0.0
    %4068 = vmatprep.mubr.f32.mxu0 0.0
    %v4069 = vand.u32 %v2348, 4294901760
    %4070 = vmatmul.mubr.f32.gmra.mxu0 %v4069
    %v4071 = vpop.f32.mrf.mxu0
    %v4072 = vadd.f32 %v3811, %v4071
    %v4073 = vpop.f32.mrf.mxu0
    %4074 = vmatprep.mubr.f32.mxu0 0.0
    %v4075 = vand.u32 %v2351, 4294901760
    %4076 = vmatmul.mubr.f32.gmra.mxu0 %v4075
    %v4077 = vpop.f32.mrf.mxu0
    %v4078 = vadd.f32 %v3817, %v4077
    %v4079 = vpop.f32.mrf.mxu0
    %4080 = vmatprep.mubr.f32.mxu0 0.0
    %v4081 = vand.u32 %v2354, 4294901760
    %4082 = vmatmul.mubr.f32.gmra.mxu0 %v4081
    %v4083 = vpop.f32.mrf.mxu0
    %v4084 = vadd.f32 %v3823, %v4083
    %v4085 = vpop.f32.mrf.mxu0
    %4086 = vmatprep.mubr.f32.mxu0 0.0
    %v4087 = vand.u32 %v2357, 4294901760
    %4088 = vmatmul.mubr.f32.gmra.mxu0 %v4087
    %v4089 = vpop.f32.mrf.mxu0
    %v4090 = vadd.f32 %v3829, %v4089
    %v4091 = vpop.f32.mrf.mxu0
    %4092 = vmatprep.mubr.f32.mxu0 0.0
    %v4093 = vand.u32 %v2360, 4294901760
    %4094 = vmatmul.mubr.f32.gmra.mxu0 %v4093
    %v4095 = vpop.f32.mrf.mxu0
    %v4096 = vadd.f32 %v3835, %v4095
    %v4097 = vpop.f32.mrf.mxu0
    %4098 = vmatprep.mubr.f32.mxu0 0.0
    %v4099 = vand.u32 %v2363, 4294901760
    %4100 = vmatmul.mubr.f32.gmra.mxu0 %v4099
    %v4101 = vpop.f32.mrf.mxu0
    %v4102 = vadd.f32 %v3841, %v4101
    %v4103 = vpop.f32.mrf.mxu0
    %4104 = vmatprep.mubr.f32.mxu0 0.0
    %v4105 = vand.u32 %v2366, 4294901760
    %4106 = vmatmul.mubr.f32.gmra.mxu0 %v4105
    %v4107 = vpop.f32.mrf.mxu0
    %v4108 = vadd.f32 %v3847, %v4107
    %v4109 = vpop.f32.mrf.mxu0
    %4110 = vmatprep.mubr.f32.mxu0 0.0
    %v4111 = vand.u32 %v2369, 4294901760
    %4112 = vmatmul.mubr.f32.gmra.mxu0 %v4111
    %v4113 = vpop.f32.mrf.mxu0
    %v4114 = vadd.f32 %v3853, %v4113
    %v4115 = vpop.f32.mrf.mxu0
    %4116 = vmatprep.mubr.f32.mxu0 0.0
    %v4117 = vand.u32 %v2372, 4294901760
    %4118 = vmatmul.mubr.f32.gmra.mxu0 %v4117
    %v4119 = vpop.f32.mrf.mxu0
    %v4120 = vadd.f32 %v3859, %v4119
    %v4121 = vpop.f32.mrf.mxu0
    %4122 = vmatprep.mubr.f32.mxu0 0.0
    %v4123 = vand.u32 %v2375, 4294901760
    %4124 = vmatmul.mubr.f32.gmra.mxu0 %v4123
    %v4125 = vpop.f32.mrf.mxu0
    %v4126 = vadd.f32 %v3865, %v4125
    %v4127 = vpop.f32.mrf.mxu0
    %4128 = vmatprep.mubr.f32.mxu0 0.0
    %v4129 = vand.u32 %v2378, 4294901760
    %4130 = vmatmul.mubr.f32.gmra.mxu0 %v4129
    %v4131 = vpop.f32.mrf.mxu0
    %v4132 = vadd.f32 %v3871, %v4131
    %v4133 = vpop.f32.mrf.mxu0
    %4134 = vmatprep.mubr.f32.mxu0 0.0
    %v4135 = vand.u32 %v2381, 4294901760
    %4136 = vmatmul.mubr.f32.gmra.mxu0 %v4135
    %v4137 = vpop.f32.mrf.mxu0
    %v4138 = vadd.f32 %v3877, %v4137
    %v4139 = vpop.f32.mrf.mxu0
    %4140 = vmatprep.mubr.f32.mxu0 0.0
    %v4141 = vand.u32 %v2384, 4294901760
    %4142 = vmatmul.mubr.f32.gmra.mxu0 %v4141
    %v4143 = vpop.f32.mrf.mxu0
    %v4144 = vadd.f32 %v3883, %v4143
    %v4145 = vpop.f32.mrf.mxu0
    %4146 = vmatprep.mubr.f32.mxu0 0.0
    %v4147 = vand.u32 %v2387, 4294901760
    %4148 = vmatmul.mubr.f32.gmra.mxu0 %v4147
    %v4149 = vpop.f32.mrf.mxu0
    %v4150 = vadd.f32 %v3889, %v4149
    %v4151 = vpop.f32.mrf.mxu0
    %4152 = vmatprep.mubr.f32.mxu0 0.0
    %v4153 = vand.u32 %v2390, 4294901760
    %4154 = vmatmul.mubr.f32.gmra.mxu0 %v4153
    %v4155 = vpop.f32.mrf.mxu0
    %v4156 = vadd.f32 %v3895, %v4155
    %v4157 = vpop.f32.mrf.mxu0
    %4158 = vmatprep.mubr.f32.mxu0 0.0
    %v4159 = vand.u32 %v2393, 4294901760
    %4160 = vmatmul.mubr.f32.gmra.mxu0 %v4159
    %v4161 = vpop.f32.mrf.mxu0
    %v4162 = vadd.f32 %v3901, %v4161
    %v4163 = vpop.f32.mrf.mxu0
    %4164 = vmatprep.mubr.f32.mxu0 0.0
    %v4165 = vand.u32 %v2396, 4294901760
    %4166 = vmatmul.mubr.f32.gmra.mxu0 %v4165
    %v4167 = vpop.f32.mrf.mxu0
    %v4168 = vadd.f32 %v3907, %v4167
    %v4169 = vpop.f32.mrf.mxu0
    %4170 = vmatprep.mubr.f32.mxu0 0.0
    %v4171 = vand.u32 %v2399, 4294901760
    %4172 = vmatmul.mubr.f32.gmra.mxu0 %v4171
    %v4173 = vpop.f32.mrf.mxu0
    %v4174 = vadd.f32 %v3913, %v4173
    %v4175 = vpop.f32.mrf.mxu0
    %4176 = vmatprep.mubr.f32.mxu0 0.0
    %v4177 = vand.u32 %v2402, 4294901760
    %4178 = vmatmul.mubr.f32.gmra.mxu0 %v4177
    %v4179 = vpop.f32.mrf.mxu0
    %v4180 = vadd.f32 %v3919, %v4179
    %v4181 = vpop.f32.mrf.mxu0
    %4182 = vmatprep.mubr.f32.mxu0 0.0
    %v4183 = vand.u32 %v2405, 4294901760
    %4184 = vmatmul.mubr.f32.gmra.mxu0 %v4183
    %v4185 = vpop.f32.mrf.mxu0
    %v4186 = vadd.f32 %v3925, %v4185
    %v4187 = vpop.f32.mrf.mxu0
    %4188 = vmatprep.mubr.f32.mxu0 0.0
    %v4189 = vand.u32 %v2408, 4294901760
    %4190 = vmatmul.mubr.f32.gmra.mxu0 %v4189
    %v4191 = vpop.f32.mrf.mxu0
    %v4192 = vadd.f32 %v3931, %v4191
    %v4193 = vpop.f32.mrf.mxu0
    %4194 = vmatprep.mubr.f32.mxu0 0.0
    %v4195 = vand.u32 %v2411, 4294901760
    %4196 = vmatmul.mubr.f32.gmra.mxu0 %v4195
    %v4197 = vpop.f32.mrf.mxu0
    %v4198 = vadd.f32 %v3937, %v4197
    %v4199 = vpop.f32.mrf.mxu0
    %4200 = vmatprep.mubr.f32.mxu0 0.0
    %v4201 = vand.u32 %v2414, 4294901760
    %4202 = vmatmul.mubr.f32.gmra.mxu0 %v4201
    %v4203 = vpop.f32.mrf.mxu0
    %v4204 = vadd.f32 %v3943, %v4203
    %v4205 = vpop.f32.mrf.mxu0
    %4206 = vmatprep.mubr.f32.mxu0 0.0
    %v4207 = vand.u32 %v2417, 4294901760
    %4208 = vmatmul.mubr.f32.gmra.mxu0 %v4207
    %v4209 = vpop.f32.mrf.mxu0
    %v4210 = vadd.f32 %v3949, %v4209
    %v4211 = vpop.f32.mrf.mxu0
    %4212 = vmatprep.mubr.f32.mxu0 0.0
    %v4213 = vand.u32 %v2420, 4294901760
    %4214 = vmatmul.mubr.f32.gmra.mxu0 %v4213
    %v4215 = vpop.f32.mrf.mxu0
    %v4216 = vadd.f32 %v3955, %v4215
    %v4217 = vpop.f32.mrf.mxu0
    %4218 = vmatprep.mubr.f32.mxu0 0.0
    %v4219 = vand.u32 %v2423, 4294901760
    %4220 = vmatmul.mubr.f32.gmra.mxu0 %v4219
    %v4221 = vpop.f32.mrf.mxu0
    %v4222 = vadd.f32 %v3961, %v4221
    %v4223 = vpop.f32.mrf.mxu0
    %4224 = vmatprep.mubr.f32.mxu0 0.0
    %v4225 = vand.u32 %v2426, 4294901760
    %4226 = vmatmul.mubr.f32.gmra.mxu0 %v4225
    %v4227 = vpop.f32.mrf.mxu0
    %v4228 = vadd.f32 %v3967, %v4227
    %v4229 = vpop.f32.mrf.mxu0
    %4230 = vmatprep.mubr.f32.mxu0 0.0
    %v4231 = vand.u32 %v2429, 4294901760
    %4232 = vmatmul.mubr.f32.gmra.mxu0 %v4231
    %v4233 = vpop.f32.mrf.mxu0
    %v4234 = vadd.f32 %v3973, %v4233
    %v4235 = vpop.f32.mrf.mxu0
    %4236 = vmatprep.mubr.f32.mxu0 0.0
    %v4237 = vand.u32 %v2432, 4294901760
    %4238 = vmatmul.mubr.f32.gmra.mxu0 %v4237
    %v4239 = vpop.f32.mrf.mxu0
    %v4240 = vadd.f32 %v3979, %v4239
    %v4241 = vpop.f32.mrf.mxu0
    %4242 = vmatprep.mubr.f32.mxu0 0.0
    %v4243 = vand.u32 %v2435, 4294901760
    %4244 = vmatmul.mubr.f32.gmra.mxu0 %v4243
    %v4245 = vpop.f32.mrf.mxu0
    %v4246 = vadd.f32 %v3985, %v4245
    %v4247 = vpop.f32.mrf.mxu0
    %4248 = vmatprep.mubr.f32.mxu0 0.0
    %v4249 = vand.u32 %v2438, 4294901760
    %4250 = vmatmul.mubr.f32.gmra.mxu0 %v4249
    %v4251 = vpop.f32.mrf.mxu0
    %v4252 = vadd.f32 %v3991, %v4251
    %v4253 = vpop.f32.mrf.mxu0
    %4254 = vmatprep.mubr.f32.mxu0 0.0
    %v4255 = vand.u32 %v2441, 4294901760
    %4256 = vmatmul.mubr.f32.gmra.mxu0 %v4255
    %v4257 = vpop.f32.mrf.mxu0
    %v4258 = vadd.f32 %v3997, %v4257
    %v4259 = vpop.f32.mrf.mxu0
    %4260 = vdwg.mxu0
    %4261 = vst [vmem:[#allocation2] sm:$0xff] %v4072
    %4262 = vst [vmem:[#allocation2 + $0x8] sm:$0xff] %v4078
    %4263 = vst [vmem:[#allocation2 + $0x10] sm:$0xff] %v4084
    %4264 = vst [vmem:[#allocation2 + $0x18] sm:$0xff] %v4090
    %4265 = vst [vmem:[#allocation2 + $0x20] sm:$0xff] %v4096
    %4266 = vst [vmem:[#allocation2 + $0x28] sm:$0xff] %v4102
    %4267 = vst [vmem:[#allocation2 + $0x30] sm:$0xff] %v4108
    %4268 = vst [vmem:[#allocation2 + $0x38] sm:$0xff] %v4114
    %4269 = vst [vmem:[#allocation2 + $0x40] sm:$0xff] %v4120
    %4270 = vst [vmem:[#allocation2 + $0x48] sm:$0xff] %v4126
    %4271 = vst [vmem:[#allocation2 + $0x50] sm:$0xff] %v4132
    %4272 = vst [vmem:[#allocation2 + $0x58] sm:$0xff] %v4138
    %4273 = vst [vmem:[#allocation2 + $0x60] sm:$0xff] %v4144
    %4274 = vst [vmem:[#allocation2 + $0x68] sm:$0xff] %v4150
    %4275 = vst [vmem:[#allocation2 + $0x70] sm:$0xff] %v4156
    %4276 = vst [vmem:[#allocation2 + $0x78] sm:$0xff] %v4162
    %4277 = vst [vmem:[#allocation2 + $0x80] sm:$0xff] %v4168
    %4278 = vst [vmem:[#allocation2 + $0x88] sm:$0xff] %v4174
    %4279 = vst [vmem:[#allocation2 + $0x90] sm:$0xff] %v4180
    %4280 = vst [vmem:[#allocation2 + $0x98] sm:$0xff] %v4186
    %4281 = vst [vmem:[#allocation2 + $0xa0] sm:$0xff] %v4192
    %4282 = vst [vmem:[#allocation2 + $0xa8] sm:$0xff] %v4198
    %4283 = vst [vmem:[#allocation2 + $0xb0] sm:$0xff] %v4204
    %4284 = vst [vmem:[#allocation2 + $0xb8] sm:$0xff] %v4210
    %4285 = vst [vmem:[#allocation2 + $0xc0] sm:$0xff] %v4216
    %4286 = vst [vmem:[#allocation2 + $0xc8] sm:$0xff] %v4222
    %4287 = vst [vmem:[#allocation2 + $0xd0] sm:$0xff] %v4228
    %4288 = vst [vmem:[#allocation2 + $0xd8] sm:$0xff] %v4234
    %4289 = vst [vmem:[#allocation2 + $0xe0] sm:$0xff] %v4240
    %4290 = vst [vmem:[#allocation2 + $0xe8] sm:$0xff] %v4246
    %4291 = vst [vmem:[#allocation2 + $0xf0] sm:$0xff] %v4252
    %4292 = vst [vmem:[#allocation2 + $0xf8] sm:$0xff] %v4258
    // Predicated region
    $region14: #{tpu_custom_call.1} parent=1 // pred_check
      _
    $region15: #{tpu_custom_call.1} parent=1 // pred_check_branch
      %4294 = sbr.rel (0) target = $region17
    $region16: #{tpu_custom_call.1} parent=1 // pred_region
      %s4296 = ssub.s32 4096, 4096
      %4297 = vsyncadd [#allocation3], %s4296
      %s4298 = sshll.u32 [#allocation2], 4
      %s4299 = int_to_ptr.vmem [resolvable:$true] %s4298
      %4304 = dma.vmem_to_hbm [thread:$0]  %s4299, 4096, %s3, [#allocation3], 128, 128, 8
    $region17: #{tpu_custom_call.1} parent=1 // pred_fallthru
      _
    // Predicated region
    $region18: #{tpu_custom_call.1} parent=1 // pred_check
      _
    $region19: #{tpu_custom_call.1} parent=1 // pred_check_branch
      %4306 = sbr.rel (0) target = $region21
    $region20: #{tpu_custom_call.1} parent=1 // pred_region
      %4307 = dma.done [#allocation3], 4096
    $region21: #{tpu_custom_call.1} parent=1 // pred_fallthru
      _
    %4308 = vsyncpa [#allocation3], 1

</llo_original>
